<compile_context>
chip_gen: v7x
topology: tpu7x:2x2x1
jax: 0.10.0
libtpu: 0.0.40
codegen_flags: <defaults>
</compile_context>

<pallas_src>
import functools

import jax
import jax.numpy as jnp
from jax.experimental import pallas as pl
from jax.experimental.pallas import tpu as pltpu


N_BACKBONE_OUT_CHANNELS = 2048 + 1024 + 512 + 256  # 3840, as in the module
STEM_STRIDE = 4          # backbone stand-in spatial reduction
TM_TARGET = 512          # row tile (M), raised per perf review
TK = 768                 # in-kernel reduction chunk of the 3840 channels (3*256)
TN = 128                 # lane-padded head output width


def _round_up(v, m):
    return v + (-v) % m


def _pick_tm(m_rows):
    """Row tile: as large as TM_TARGET, but keep >= 2 grid steps (v7x megacore)."""
    m8 = _round_up(max(m_rows, 1), 8)
    if m8 <= 8:
        return m8
    half = _round_up((m8 + 1) // 2, 8)
    return min(TM_TARGET, half)


# ----------------------------------------------------------------------------
# Fused kernel: one tm-row tile, weights fully VMEM-resident.
# For each static TK-wide chunk of the 3840 backbone channels:
#     feat = relu(x[tm, K] @ w_stem[K, tk])      -> staged bf16 in VMEM scratch
#     o   += feat @ w_head[tk, 128]              -> f32 accumulation in out block
# The (tm, 3840) feature map never touches HBM; weight blocks have constant
# index maps so Pallas does not re-DMA them across grid steps.
# ----------------------------------------------------------------------------
def _fused_stem_head_kernel(x_ref, ws_ref, wh_ref, o_ref, feat_ref):
    tk = feat_ref.shape[2]
    n_chunks = ws_ref.shape[1] // tk

    o_ref[...] = jnp.zeros_like(o_ref)
    for c in range(n_chunks):                 # static unrolled loop, static slices
        k0 = c * tk
        feat = jnp.dot(
            x_ref[...], ws_ref[:, k0:k0 + tk],
            preferred_element_type=jnp.float32,
        )
        # Stage the ReLU'd stem chunk in bf16 scratch; 2 slots so chunk c+1's
        # stem matmul is not serialized behind chunk c's head-matmul reads.
        slot = c % 2
        feat_ref[slot] = jnp.maximum(feat, 0.0).astype(feat_ref.dtype)
        o_ref[...] += jnp.dot(
            feat_ref[slot], wh_ref[k0:k0 + tk, :],
            preferred_element_type=jnp.float32,
        )


def fused_stem_head(patches, w_stem, w_head, *, tm, tk):
    """patches: (Mp, K) bf16; w_stem: (K, 3840) bf16; w_head: (3840, 128) bf16.

    Returns (Mp, 128) float32 head-output rows (lane-dense; caller slices).
    """
    Mp, Kc = patches.shape
    Kc2, F = w_stem.shape
    F2, tn = w_head.shape
    assert Kc == Kc2 and F == F2
    assert Mp % tm == 0 and F % tk == 0 and tn % 128 == 0

    return pl.pallas_call(
        _fused_stem_head_kernel,
        out_shape=jax.ShapeDtypeStruct((Mp, tn), jnp.float32),
        grid=(Mp // tm,),
        in_specs=[
            pl.BlockSpec((tm, Kc), lambda i: (i, 0)),   # activation rows
            pl.BlockSpec((Kc, F), lambda i: (0, 0)),    # resident stem weight
            pl.BlockSpec((F, tn), lambda i: (0, 0)),    # resident head weight
        ],
        out_specs=pl.BlockSpec((tm, tn), lambda i: (i, 0)),
        # 2-slot bf16 staging buffer for the ReLU'd stem chunk.
        scratch_shapes=[pltpu.VMEM((2, tm, tk), jnp.bfloat16)],
        compiler_params=pltpu.CompilerParams(
            dimension_semantics=("parallel",),
            vmem_limit_bytes=48 * 1024 * 1024,
        ),
    )(patches, w_stem, w_head)


# ----------------------------------------------------------------------------
# Model
# ----------------------------------------------------------------------------
def init_params(key, *, n_input_channels, n_instance_classes):
    k1, k2 = jax.random.split(key, 2)
    c_patch = STEM_STRIDE * STEM_STRIDE * n_input_channels
    w_stem = (
        jax.random.normal(k1, (c_patch, N_BACKBONE_OUT_CHANNELS), jnp.float32)
        * (2.0 / c_patch) ** 0.5
    )
    # conv1x1_to_instance_channels weight: (C_out, C_in, 1, 1) in PyTorch ->
    # stored here transposed as (C_in, C_out) for the channels-last matmul.
    w_head = (
        jax.random.normal(
            k2, (N_BACKBONE_OUT_CHANNELS, n_instance_classes), jnp.float32
        )
        * (2.0 / N_BACKBONE_OUT_CHANNELS) ** 0.5
    )

    # Kernel layout: keep the small stem reduction dim unpadded (K=48 is free on
    # the MXU); zero-pad the head output dim to a full 128-lane width; cast MXU
    # operands to bf16 (f32 accumulation happens in-kernel).
    tn = _round_up(n_instance_classes, 128)
    w_stem_k = w_stem.astype(jnp.bfloat16)
    w_head_k = jnp.pad(
        w_head, ((0, 0), (0, tn - n_instance_classes))
    ).astype(jnp.bfloat16)
    return {"w_stem": w_stem_k, "w_head": w_head_k}


@functools.partial(jax.jit, static_argnames=("n_instance_classes",))
def resnet50_instance_forward(x, params, *, n_instance_classes):
    """Matches ResNet50Instance.forward with map_to_semantic=False (default)."""
    # TODO(synk): map_to_semantic=True would compose a second bias-free 1x1 conv;
    # since both are linear it can be pre-folded into w_head outside the kernel.
    n, c, h, w = x.shape
    s = STEM_STRIDE
    hp, wp = h // s, w // s

    # Patchify NCHW -> channels-last rows (M, s*s*c) for the stand-in stem.
    # Cast to bf16 first so the host-side pre-pass moves half the bytes.
    x_nhwc = jnp.transpose(x, (0, 2, 3, 1)).astype(jnp.bfloat16)
    patches = x_nhwc.reshape(n, hp, s, wp, s, c)
    patches = jnp.transpose(patches, (0, 1, 3, 2, 4, 5)).reshape(
        n * hp * wp, s * s * c
    )
    M = patches.shape[0]

    tm = _pick_tm(M)
    mp = _round_up(M, tm)
    patches = jnp.pad(patches, ((0, mp - M), (0, 0)))

    out_rows = fused_stem_head(
        patches, params["w_stem"], params["w_head"], tm=tm, tk=TK
    )
    out_rows = out_rows[:M, :n_instance_classes]

    # rows (N*hp*wp, n_out) -> NCHW (N, n_out, hp, wp); only this tiny tensor
    # is transposed on the host.
    out = out_rows.reshape(n, hp, wp, n_instance_classes)
    return jnp.transpose(out, (0, 3, 1, 2))


if __name__ == "__main__":
    key = jax.random.PRNGKey(0)
    kx, kp = jax.random.split(key)

    batch, n_input_channels, spatial = 2, 3, 16
    n_instance_classes = 8  # map_to_semantic=False (module default)

    x = jax.random.normal(
        kx, (batch, n_input_channels, spatial, spatial), jnp.float32
    )
    params = init_params(
        kp,
        n_input_channels=n_input_channels,
        n_instance_classes=n_instance_classes,
    )

    out = resnet50_instance_forward(
        x, params, n_instance_classes=n_instance_classes
    )
    out = jax.block_until_ready(out)

    expected_shape = (
        batch,
        n_instance_classes,
        spatial // STEM_STRIDE,
        spatial // STEM_STRIDE,
    )
    assert out.shape == expected_shape, (out.shape, expected_shape)
    assert out.dtype == jnp.float32
    assert bool(jnp.all(jnp.isfinite(out)))
    print("KERNEL_OK")
</pallas_src>

<mosaic_0001>
module attributes {stable_mosaic.version = 11 : i64} {
  func.func @_fused_stem_head_kernel(%arg0: i32, %arg1: memref<16x48xbf16, #tpu.memory_space<vmem>>, %arg2: memref<48x3840xbf16, #tpu.memory_space<vmem>>, %arg3: memref<3840x128xbf16, #tpu.memory_space<vmem>>, %arg4: memref<16x128xf32, #tpu.memory_space<vmem>>, %arg5: memref<2x16x768xbf16, #tpu.memory_space<vmem>>) attributes {dimension_semantics = [#tpu.dimension_semantics<parallel>], iteration_bounds = array<i64: 2>, scalar_prefetch = 0 : i64, scratch_operands = 1 : i64, tpu.core_type = #tpu.core_type<tc>, window_params = [{transform_indices = @transform_0, window_bounds = array<i64: 16, 48>}, {pipeline_mode = #tpu.pipeline_mode<synchronous>, transform_indices = @transform_1, window_bounds = array<i64: 48, 3840>}, {pipeline_mode = #tpu.pipeline_mode<synchronous>, transform_indices = @transform_2, window_bounds = array<i64: 3840, 128>}, {transform_indices = @transform_3, window_bounds = array<i64: 16, 128>}]} {
    %cst = arith.constant 0.000000e+00 : f32
    %0 = vector.broadcast %cst : f32 to vector<16x128xf32>
    %c0 = arith.constant 0 : index
    %c0_0 = arith.constant 0 : index
    %1 = vector.load %arg4[%c0, %c0_0] : memref<16x128xf32, #tpu.memory_space<vmem>>, vector<16x128xf32>
    tpu.vector_store %arg4[%c0, %c0_0], %0 {strides = array<i32>} : memref<16x128xf32, #tpu.memory_space<vmem>>, vector<16x128xf32>,
    %c0_1 = arith.constant 0 : index
    %c0_2 = arith.constant 0 : index
    %2 = vector.load %arg1[%c0_1, %c0_2] : memref<16x48xbf16, #tpu.memory_space<vmem>>, vector<16x48xbf16>
    %c0_3 = arith.constant 0 : index
    %c0_4 = arith.constant 0 : index
    %3 = vector.load %arg2[%c0_3, %c0_4] : memref<48x3840xbf16, #tpu.memory_space<vmem>>, vector<48x768xbf16>
    %cst_5 = arith.constant dense<0.000000e+00> : vector<16x768xf32>
    %4 = tpu.matmul %2, %3, %cst_5 {dimension_numbers = #tpu.dot_dimension_numbers<[1], [0], [0], [1], [0, 0, 1, 1], [], []>} : vector<16x48xbf16>, vector<48x768xbf16>, vector<16x768xf32> -> vector<16x768xf32>
    %cst_6 = arith.constant 0.000000e+00 : f32
    %5 = vector.broadcast %cst_6 : f32 to vector<16x768xf32>
    %6 = arith.maximumf %4, %5 : vector<16x768xf32>
    %7 = arith.truncf %6 : vector<16x768xf32> to vector<16x768xbf16>
    %c0_7 = arith.constant 0 : index
    %c0_8 = arith.constant 0 : index
    %c0_9 = arith.constant 0 : index
    %8 = vector.load %arg5[%c0_7, %c0_8, %c0_9] : memref<2x16x768xbf16, #tpu.memory_space<vmem>>, vector<1x16x768xbf16>
    %9 = vector.shape_cast %8 : vector<1x16x768xbf16> to vector<16x768xbf16>
    %10 = vector.shape_cast %7 : vector<16x768xbf16> to vector<1x16x768xbf16>
    tpu.vector_store %arg5[%c0_7, %c0_8, %c0_9], %10 {strides = array<i32>} : memref<2x16x768xbf16, #tpu.memory_space<vmem>>, vector<1x16x768xbf16>,
    %c0_10 = arith.constant 0 : index
    %c0_11 = arith.constant 0 : index
    %11 = vector.load %arg4[%c0_10, %c0_11] : memref<16x128xf32, #tpu.memory_space<vmem>>, vector<16x128xf32>
    %c0_12 = arith.constant 0 : index
    %c0_13 = arith.constant 0 : index
    %c0_14 = arith.constant 0 : index
    %12 = vector.load %arg5[%c0_12, %c0_13, %c0_14] : memref<2x16x768xbf16, #tpu.memory_space<vmem>>, vector<1x16x768xbf16>
    %13 = vector.shape_cast %12 : vector<1x16x768xbf16> to vector<16x768xbf16>
    %c0_15 = arith.constant 0 : index
    %c0_16 = arith.constant 0 : index
    %14 = vector.load %arg3[%c0_15, %c0_16] : memref<3840x128xbf16, #tpu.memory_space<vmem>>, vector<768x128xbf16>
    %cst_17 = arith.constant dense<0.000000e+00> : vector<16x128xf32>
    %15 = tpu.matmul %13, %14, %cst_17 {dimension_numbers = #tpu.dot_dimension_numbers<[1], [0], [0], [1], [0, 0, 1, 1], [], []>} : vector<16x768xbf16>, vector<768x128xbf16>, vector<16x128xf32> -> vector<16x128xf32>
    %16 = arith.addf %11, %15 : vector<16x128xf32>
    %c0_18 = arith.constant 0 : index
    %c0_19 = arith.constant 0 : index
    %17 = vector.load %arg4[%c0_18, %c0_19] : memref<16x128xf32, #tpu.memory_space<vmem>>, vector<16x128xf32>
    tpu.vector_store %arg4[%c0_18, %c0_19], %16 {strides = array<i32>} : memref<16x128xf32, #tpu.memory_space<vmem>>, vector<16x128xf32>,
    %c0_20 = arith.constant 0 : index
    %c0_21 = arith.constant 0 : index
    %18 = vector.load %arg1[%c0_20, %c0_21] : memref<16x48xbf16, #tpu.memory_space<vmem>>, vector<16x48xbf16>
    %c0_22 = arith.constant 0 : index
    %c768 = arith.constant 768 : index
    %19 = vector.load %arg2[%c0_22, %c768] : memref<48x3840xbf16, #tpu.memory_space<vmem>>, vector<48x768xbf16>
    %cst_23 = arith.constant dense<0.000000e+00> : vector<16x768xf32>
    %20 = tpu.matmul %18, %19, %cst_23 {dimension_numbers = #tpu.dot_dimension_numbers<[1], [0], [0], [1], [0, 0, 1, 1], [], []>} : vector<16x48xbf16>, vector<48x768xbf16>, vector<16x768xf32> -> vector<16x768xf32>
    %cst_24 = arith.constant 0.000000e+00 : f32
    %21 = vector.broadcast %cst_24 : f32 to vector<16x768xf32>
    %22 = arith.maximumf %20, %21 : vector<16x768xf32>
    %23 = arith.truncf %22 : vector<16x768xf32> to vector<16x768xbf16>
    %c1 = arith.constant 1 : index
    %c0_25 = arith.constant 0 : index
    %c0_26 = arith.constant 0 : index
    %24 = vector.load %arg5[%c1, %c0_25, %c0_26] : memref<2x16x768xbf16, #tpu.memory_space<vmem>>, vector<1x16x768xbf16>
    %25 = vector.shape_cast %24 : vector<1x16x768xbf16> to vector<16x768xbf16>
    %26 = vector.shape_cast %23 : vector<16x768xbf16> to vector<1x16x768xbf16>
    tpu.vector_store %arg5[%c1, %c0_25, %c0_26], %26 {strides = array<i32>} : memref<2x16x768xbf16, #tpu.memory_space<vmem>>, vector<1x16x768xbf16>,
    %c0_27 = arith.constant 0 : index
    %c0_28 = arith.constant 0 : index
    %27 = vector.load %arg4[%c0_27, %c0_28] : memref<16x128xf32, #tpu.memory_space<vmem>>, vector<16x128xf32>
    %c1_29 = arith.constant 1 : index
    %c0_30 = arith.constant 0 : index
    %c0_31 = arith.constant 0 : index
    %28 = vector.load %arg5[%c1_29, %c0_30, %c0_31] : memref<2x16x768xbf16, #tpu.memory_space<vmem>>, vector<1x16x768xbf16>
    %29 = vector.shape_cast %28 : vector<1x16x768xbf16> to vector<16x768xbf16>
    %c768_32 = arith.constant 768 : index
    %c0_33 = arith.constant 0 : index
    %30 = vector.load %arg3[%c768_32, %c0_33] : memref<3840x128xbf16, #tpu.memory_space<vmem>>, vector<768x128xbf16>
    %cst_34 = arith.constant dense<0.000000e+00> : vector<16x128xf32>
    %31 = tpu.matmul %29, %30, %cst_34 {dimension_numbers = #tpu.dot_dimension_numbers<[1], [0], [0], [1], [0, 0, 1, 1], [], []>} : vector<16x768xbf16>, vector<768x128xbf16>, vector<16x128xf32> -> vector<16x128xf32>
    %32 = arith.addf %27, %31 : vector<16x128xf32>
    %c0_35 = arith.constant 0 : index
    %c0_36 = arith.constant 0 : index
    %33 = vector.load %arg4[%c0_35, %c0_36] : memref<16x128xf32, #tpu.memory_space<vmem>>, vector<16x128xf32>
    tpu.vector_store %arg4[%c0_35, %c0_36], %32 {strides = array<i32>} : memref<16x128xf32, #tpu.memory_space<vmem>>, vector<16x128xf32>,
    %c0_37 = arith.constant 0 : index
    %c0_38 = arith.constant 0 : index
    %34 = vector.load %arg1[%c0_37, %c0_38] : memref<16x48xbf16, #tpu.memory_space<vmem>>, vector<16x48xbf16>
    %c0_39 = arith.constant 0 : index
    %c1536 = arith.constant 1536 : index
    %35 = vector.load %arg2[%c0_39, %c1536] : memref<48x3840xbf16, #tpu.memory_space<vmem>>, vector<48x768xbf16>
    %cst_40 = arith.constant dense<0.000000e+00> : vector<16x768xf32>
    %36 = tpu.matmul %34, %35, %cst_40 {dimension_numbers = #tpu.dot_dimension_numbers<[1], [0], [0], [1], [0, 0, 1, 1], [], []>} : vector<16x48xbf16>, vector<48x768xbf16>, vector<16x768xf32> -> vector<16x768xf32>
    %cst_41 = arith.constant 0.000000e+00 : f32
    %37 = vector.broadcast %cst_41 : f32 to vector<16x768xf32>
    %38 = arith.maximumf %36, %37 : vector<16x768xf32>
    %39 = arith.truncf %38 : vector<16x768xf32> to vector<16x768xbf16>
    %c0_42 = arith.constant 0 : index
    %c0_43 = arith.constant 0 : index
    %c0_44 = arith.constant 0 : index
    %40 = vector.load %arg5[%c0_42, %c0_43, %c0_44] : memref<2x16x768xbf16, #tpu.memory_space<vmem>>, vector<1x16x768xbf16>
    %41 = vector.shape_cast %40 : vector<1x16x768xbf16> to vector<16x768xbf16>
    %42 = vector.shape_cast %39 : vector<16x768xbf16> to vector<1x16x768xbf16>
    tpu.vector_store %arg5[%c0_42, %c0_43, %c0_44], %42 {strides = array<i32>} : memref<2x16x768xbf16, #tpu.memory_space<vmem>>, vector<1x16x768xbf16>,
    %c0_45 = arith.constant 0 : index
    %c0_46 = arith.constant 0 : index
    %43 = vector.load %arg4[%c0_45, %c0_46] : memref<16x128xf32, #tpu.memory_space<vmem>>, vector<16x128xf32>
    %c0_47 = arith.constant 0 : index
    %c0_48 = arith.constant 0 : index
    %c0_49 = arith.constant 0 : index
    %44 = vector.load %arg5[%c0_47, %c0_48, %c0_49] : memref<2x16x768xbf16, #tpu.memory_space<vmem>>, vector<1x16x768xbf16>
    %45 = vector.shape_cast %44 : vector<1x16x768xbf16> to vector<16x768xbf16>
    %c1536_50 = arith.constant 1536 : index
    %c0_51 = arith.constant 0 : index
    %46 = vector.load %arg3[%c1536_50, %c0_51] : memref<3840x128xbf16, #tpu.memory_space<vmem>>, vector<768x128xbf16>
    %cst_52 = arith.constant dense<0.000000e+00> : vector<16x128xf32>
    %47 = tpu.matmul %45, %46, %cst_52 {dimension_numbers = #tpu.dot_dimension_numbers<[1], [0], [0], [1], [0, 0, 1, 1], [], []>} : vector<16x768xbf16>, vector<768x128xbf16>, vector<16x128xf32> -> vector<16x128xf32>
    %48 = arith.addf %43, %47 : vector<16x128xf32>
    %c0_53 = arith.constant 0 : index
    %c0_54 = arith.constant 0 : index
    %49 = vector.load %arg4[%c0_53, %c0_54] : memref<16x128xf32, #tpu.memory_space<vmem>>, vector<16x128xf32>
    tpu.vector_store %arg4[%c0_53, %c0_54], %48 {strides = array<i32>} : memref<16x128xf32, #tpu.memory_space<vmem>>, vector<16x128xf32>,
    %c0_55 = arith.constant 0 : index
    %c0_56 = arith.constant 0 : index
    %50 = vector.load %arg1[%c0_55, %c0_56] : memref<16x48xbf16, #tpu.memory_space<vmem>>, vector<16x48xbf16>
    %c0_57 = arith.constant 0 : index
    %c2304 = arith.constant 2304 : index
    %51 = vector.load %arg2[%c0_57, %c2304] : memref<48x3840xbf16, #tpu.memory_space<vmem>>, vector<48x768xbf16>
    %cst_58 = arith.constant dense<0.000000e+00> : vector<16x768xf32>
    %52 = tpu.matmul %50, %51, %cst_58 {dimension_numbers = #tpu.dot_dimension_numbers<[1], [0], [0], [1], [0, 0, 1, 1], [], []>} : vector<16x48xbf16>, vector<48x768xbf16>, vector<16x768xf32> -> vector<16x768xf32>
    %cst_59 = arith.constant 0.000000e+00 : f32
    %53 = vector.broadcast %cst_59 : f32 to vector<16x768xf32>
    %54 = arith.maximumf %52, %53 : vector<16x768xf32>
    %55 = arith.truncf %54 : vector<16x768xf32> to vector<16x768xbf16>
    %c1_60 = arith.constant 1 : index
    %c0_61 = arith.constant 0 : index
    %c0_62 = arith.constant 0 : index
    %56 = vector.load %arg5[%c1_60, %c0_61, %c0_62] : memref<2x16x768xbf16, #tpu.memory_space<vmem>>, vector<1x16x768xbf16>
    %57 = vector.shape_cast %56 : vector<1x16x768xbf16> to vector<16x768xbf16>
    %58 = vector.shape_cast %55 : vector<16x768xbf16> to vector<1x16x768xbf16>
    tpu.vector_store %arg5[%c1_60, %c0_61, %c0_62], %58 {strides = array<i32>} : memref<2x16x768xbf16, #tpu.memory_space<vmem>>, vector<1x16x768xbf16>,
    %c0_63 = arith.constant 0 : index
    %c0_64 = arith.constant 0 : index
    %59 = vector.load %arg4[%c0_63, %c0_64] : memref<16x128xf32, #tpu.memory_space<vmem>>, vector<16x128xf32>
    %c1_65 = arith.constant 1 : index
    %c0_66 = arith.constant 0 : index
    %c0_67 = arith.constant 0 : index
    %60 = vector.load %arg5[%c1_65, %c0_66, %c0_67] : memref<2x16x768xbf16, #tpu.memory_space<vmem>>, vector<1x16x768xbf16>
    %61 = vector.shape_cast %60 : vector<1x16x768xbf16> to vector<16x768xbf16>
    %c2304_68 = arith.constant 2304 : index
    %c0_69 = arith.constant 0 : index
    %62 = vector.load %arg3[%c2304_68, %c0_69] : memref<3840x128xbf16, #tpu.memory_space<vmem>>, vector<768x128xbf16>
    %cst_70 = arith.constant dense<0.000000e+00> : vector<16x128xf32>
    %63 = tpu.matmul %61, %62, %cst_70 {dimension_numbers = #tpu.dot_dimension_numbers<[1], [0], [0], [1], [0, 0, 1, 1], [], []>} : vector<16x768xbf16>, vector<768x128xbf16>, vector<16x128xf32> -> vector<16x128xf32>
    %64 = arith.addf %59, %63 : vector<16x128xf32>
    %c0_71 = arith.constant 0 : index
    %c0_72 = arith.constant 0 : index
    %65 = vector.load %arg4[%c0_71, %c0_72] : memref<16x128xf32, #tpu.memory_space<vmem>>, vector<16x128xf32>
    tpu.vector_store %arg4[%c0_71, %c0_72], %64 {strides = array<i32>} : memref<16x128xf32, #tpu.memory_space<vmem>>, vector<16x128xf32>,
    %c0_73 = arith.constant 0 : index
    %c0_74 = arith.constant 0 : index
    %66 = vector.load %arg1[%c0_73, %c0_74] : memref<16x48xbf16, #tpu.memory_space<vmem>>, vector<16x48xbf16>
    %c0_75 = arith.constant 0 : index
    %c3072 = arith.constant 3072 : index
    %67 = vector.load %arg2[%c0_75, %c3072] : memref<48x3840xbf16, #tpu.memory_space<vmem>>, vector<48x768xbf16>
    %cst_76 = arith.constant dense<0.000000e+00> : vector<16x768xf32>
    %68 = tpu.matmul %66, %67, %cst_76 {dimension_numbers = #tpu.dot_dimension_numbers<[1], [0], [0], [1], [0, 0, 1, 1], [], []>} : vector<16x48xbf16>, vector<48x768xbf16>, vector<16x768xf32> -> vector<16x768xf32>
    %cst_77 = arith.constant 0.000000e+00 : f32
    %69 = vector.broadcast %cst_77 : f32 to vector<16x768xf32>
    %70 = arith.maximumf %68, %69 : vector<16x768xf32>
    %71 = arith.truncf %70 : vector<16x768xf32> to vector<16x768xbf16>
    %c0_78 = arith.constant 0 : index
    %c0_79 = arith.constant 0 : index
    %c0_80 = arith.constant 0 : index
    %72 = vector.load %arg5[%c0_78, %c0_79, %c0_80] : memref<2x16x768xbf16, #tpu.memory_space<vmem>>, vector<1x16x768xbf16>
    %73 = vector.shape_cast %72 : vector<1x16x768xbf16> to vector<16x768xbf16>
    %74 = vector.shape_cast %71 : vector<16x768xbf16> to vector<1x16x768xbf16>
    tpu.vector_store %arg5[%c0_78, %c0_79, %c0_80], %74 {strides = array<i32>} : memref<2x16x768xbf16, #tpu.memory_space<vmem>>, vector<1x16x768xbf16>,
    %c0_81 = arith.constant 0 : index
    %c0_82 = arith.constant 0 : index
    %75 = vector.load %arg4[%c0_81, %c0_82] : memref<16x128xf32, #tpu.memory_space<vmem>>, vector<16x128xf32>
    %c0_83 = arith.constant 0 : index
    %c0_84 = arith.constant 0 : index
    %c0_85 = arith.constant 0 : index
    %76 = vector.load %arg5[%c0_83, %c0_84, %c0_85] : memref<2x16x768xbf16, #tpu.memory_space<vmem>>, vector<1x16x768xbf16>
    %77 = vector.shape_cast %76 : vector<1x16x768xbf16> to vector<16x768xbf16>
    %c3072_86 = arith.constant 3072 : index
    %c0_87 = arith.constant 0 : index
    %78 = vector.load %arg3[%c3072_86, %c0_87] : memref<3840x128xbf16, #tpu.memory_space<vmem>>, vector<768x128xbf16>
    %cst_88 = arith.constant dense<0.000000e+00> : vector<16x128xf32>
    %79 = tpu.matmul %77, %78, %cst_88 {dimension_numbers = #tpu.dot_dimension_numbers<[1], [0], [0], [1], [0, 0, 1, 1], [], []>} : vector<16x768xbf16>, vector<768x128xbf16>, vector<16x128xf32> -> vector<16x128xf32>
    %80 = arith.addf %75, %79 : vector<16x128xf32>
    %c0_89 = arith.constant 0 : index
    %c0_90 = arith.constant 0 : index
    %81 = vector.load %arg4[%c0_89, %c0_90] : memref<16x128xf32, #tpu.memory_space<vmem>>, vector<16x128xf32>
    tpu.vector_store %arg4[%c0_89, %c0_90], %80 {strides = array<i32>} : memref<16x128xf32, #tpu.memory_space<vmem>>, vector<16x128xf32>,
    return
  }
  func.func @transform_0(%arg0: i32) -> (i32, i32) {
    %c0_i32 = arith.constant 0 : i32
    %c0_i32_0 = arith.constant 0 : i32
    return %arg0, %c0_i32 : i32, i32
  }
  func.func @transform_1(%arg0: i32) -> (i32, i32) {
    %c0_i32 = arith.constant 0 : i32
    %c0_i32_0 = arith.constant 0 : i32
    %c0_i32_1 = arith.constant 0 : i32
    return %c0_i32, %c0_i32_0 : i32, i32
  }
  func.func @transform_2(%arg0: i32) -> (i32, i32) {
    %c0_i32 = arith.constant 0 : i32
    %c0_i32_0 = arith.constant 0 : i32
    %c0_i32_1 = arith.constant 0 : i32
    return %c0_i32, %c0_i32_0 : i32, i32
  }
  func.func @transform_3(%arg0: i32) -> (i32, i32) {
    %c0_i32 = arith.constant 0 : i32
    %c0_i32_0 = arith.constant 0 : i32
    return %arg0, %c0_i32 : i32, i32
  }
}

</mosaic_0001>

<llo_original>
// kernel: resnet50_instance_forward.1
$region0: #{resnet50_instance_forward.1}
  #allocation0 [shape = 'u32[]', space=smem, size = 0x4, offset = 0x4, fixed_abs, tag = 'smem constant byte address 0x4 - core index']
  #allocation1 [shape = 'u32[144,128]{1,0:T(1,128)}', space=vmem, size = 0x12000, scoped, tag = 'internal scratch']
  #allocation2 [shape = 'bf16[2,16,768]{2,1,0:T(16,128)(2,1)}', space=vmem, size = 0xc000, scoped, tag = 'scratch operand']
  %s0 = inlined_call_operand.vmem [shape: bf16[32,48], index: 0, kind: input, shape index: {}]
  %s1 = inlined_call_operand.vmem [shape: bf16[48,3840], index: 1, kind: input, shape index: {}]
  %s2 = inlined_call_operand.hbm [shape: bf16[3840,128], index: 2, kind: input, shape index: {}]
  %s3 = inlined_call_operand.hbm [shape: f32[32,128], index: 3, kind: output, shape index: {}]
  %s4 = sld [smem:[#allocation0]]
  $region49: #{resnet50_instance_forward.1} parent=0
    _
  %s6 = ssub.s32 1, %s4
  %s7 = scalar_select 0, %s6, %s4
  $region1: #{resnet50_instance_forward.1} parent=0
    #allocation3 [shape = 'u8[983040]{0}', space=vmem, size = 0xf0000, scoped, tag = 'input window, operand 2, single buffered']
    #allocation4 [shape = 's32[2]{0}', space=sflag, size = 0x8, scoped, tag = 'scoped memory for resnet50_instance_forward.1']
    #allocation5 [shape = 's32[2]{0}', space=sflag, size = 0x8, scoped, tag = 'scoped memory for resnet50_instance_forward.1']
    #allocation6 [shape = 'u8[16384]{0}', space=vmem, size = 0x4000, scoped, tag = 'output window, operand 0']
    %8 = vsyncpa [#allocation4], 0
    %9 = vsyncpa [#allocation5], 0
    %s10 = scalar_lea.sflag [#allocation5], 1
    %11 = vsyncpa %s10, 0
    loop: start=0, step=1, limit=4
    $region2: #{resnet50_instance_forward.1} parent=1 // loop_pre_header
      _
    $region3: #{resnet50_instance_forward.1} parent=1 // loop_header
      %s13 = sphi 0, %s17
      %p14 = scmp.ge.s32.totalorder %s13, 4
      %s23 = sphi 0, %s25
      %s26 = sphi 0, %s23
      %s27 = sphi 0, %s26
      %s43 = sphi 0, %s27
      %s47 = sphi 0, %s47
      %s49 = sphi 0, %s47
      %s50 = sphi 0, %s49
      %s64 = sphi 0, %s50
      %s68 = sphi 0, %s68
      %s70 = sphi 0, %s68
      %s71 = sphi 0, %s70
      %s85 = sphi 0, %s71
      %s91 = sphi 0, %s93
      %s94 = sphi 0, %s91
      %s95 = sphi 0, %s94
      %s111 = sphi 0, %s95
    $region4: #{resnet50_instance_forward.1} parent=1 // loop_header_branch
      %16 = sbr.rel (%p14) target = $region8
    $region5: #{resnet50_instance_forward.1} parent=1 // loop_body
      %s18 = ssub.s32 %s13, 1
      %s19 = ssub.s32 %s13, 2
      %s20 = sadd.s32 %s13, 1
      %s21 = ssub.s32 %s13, %s20
      %p22 = scmp.eq.s32.totalorder %s21, 0
      %s24 = sadd.s32 %s23, 1
      %s25 = scalar_select %p22, %s23, %s24
      %p28 = pneg %p22
      %p29 = scmp.eq.s32.totalorder %s13, 1
      %p30 = por %p28, %p29
      %p31 = scmp.ne.s32.totalorder %s23, %s26
      %p32 = scmp.eq.s32.totalorder %s13, 0
      %p33 = por %p31, %p32
      %p34 = scmp.ne.s32.totalorder %s23, %s26
      %p35 = scmp.eq.s32.totalorder %s18, 1
      %p36 = por %p34, %p35
      %p37 = scmp.ne.s32.totalorder %s26, %s27
      %p38 = scmp.eq.s32.totalorder %s18, 0
      %p39 = por %p37, %p38
      %p40 = scmp.ne.s32.totalorder %s26, %s27
      %p41 = scmp.eq.s32.totalorder %s19, 1
      %p42 = por %p40, %p41
      %p44 = scmp.ne.s32.totalorder %s27, %s43
      %p45 = scmp.eq.s32.totalorder %s19, 0
      %p46 = por %p44, %p45
      %s48 = sadd.s32 %s47, 1
      %p51 = scmp.eq.s32.totalorder %s13, 1
      %p52 = scmp.ne.s32.totalorder %s47, %s49
      %p53 = scmp.eq.s32.totalorder %s13, 0
      %p54 = por %p52, %p53
      %p55 = scmp.ne.s32.totalorder %s47, %s49
      %p56 = scmp.eq.s32.totalorder %s18, 1
      %p57 = por %p55, %p56
      %p58 = scmp.ne.s32.totalorder %s49, %s50
      %p59 = scmp.eq.s32.totalorder %s18, 0
      %p60 = por %p58, %p59
      %p61 = scmp.ne.s32.totalorder %s49, %s50
      %p62 = scmp.eq.s32.totalorder %s19, 1
      %p63 = por %p61, %p62
      %p65 = scmp.ne.s32.totalorder %s50, %s64
      %p66 = scmp.eq.s32.totalorder %s19, 0
      %p67 = por %p65, %p66
      %s69 = sadd.s32 %s68, 1
      %p72 = scmp.eq.s32.totalorder %s13, 1
      %p73 = scmp.ne.s32.totalorder %s68, %s70
      %p74 = scmp.eq.s32.totalorder %s13, 0
      %p75 = por %p73, %p74
      %p76 = scmp.ne.s32.totalorder %s68, %s70
      %p77 = scmp.eq.s32.totalorder %s18, 1
      %p78 = por %p76, %p77
      %p79 = scmp.ne.s32.totalorder %s70, %s71
      %p80 = scmp.eq.s32.totalorder %s18, 0
      %p81 = por %p79, %p80
      %p82 = scmp.ne.s32.totalorder %s70, %s71
      %p83 = scmp.eq.s32.totalorder %s19, 1
      %p84 = por %p82, %p83
      %p86 = scmp.ne.s32.totalorder %s71, %s85
      %p87 = scmp.eq.s32.totalorder %s19, 0
      %p88 = por %p86, %p87
      %s89 = ssub.s32 %s13, %s20
      %p90 = scmp.eq.s32.totalorder %s89, 0
      %s92 = sadd.s32 %s91, 1
      %s93 = scalar_select %p90, %s91, %s92
      %p96 = pneg %p90
      %p97 = scmp.eq.s32.totalorder %s13, 1
      %p98 = por %p96, %p97
      %p99 = scmp.ne.s32.totalorder %s91, %s94
      %p100 = scmp.eq.s32.totalorder %s13, 0
      %p101 = por %p99, %p100
      %p102 = scmp.ne.s32.totalorder %s91, %s94
      %p103 = scmp.eq.s32.totalorder %s18, 1
      %p104 = por %p102, %p103
      %p105 = scmp.ne.s32.totalorder %s94, %s95
      %p106 = scmp.eq.s32.totalorder %s18, 0
      %p107 = por %p105, %p106
      %p108 = scmp.ne.s32.totalorder %s94, %s95
      %p109 = scmp.eq.s32.totalorder %s19, 1
      %p110 = por %p108, %p109
      %p112 = scmp.ne.s32.totalorder %s95, %s111
      %p113 = scmp.eq.s32.totalorder %s19, 0
      %p114 = por %p112, %p113
      %p115 = scmp.le.s32.totalorder 1, %s13
      %p116 = scmp.lt.s32.totalorder %s13, 3
      %p117 = pnand %p115, %p116
      %p118 = pneg %p117
      // Predicated region
      $region9: #{resnet50_instance_forward.1} parent=5 // pred_check
        _
      $region10: #{resnet50_instance_forward.1} parent=5 // pred_check_branch
        %120 = sbr.rel (%p117) target = $region12
      $region11: #{resnet50_instance_forward.1} parent=5 // pred_region
        %s121 = ssub.s32 %s13, 1
        // Predicated region
        $region13: #{resnet50_instance_forward.1} parent=11 // pred_check
          %p122 = pneg %p60
        $region14: #{resnet50_instance_forward.1} parent=11 // pred_check_branch
          %124 = sbr.rel (%p122) target = $region16
        $region15: #{resnet50_instance_forward.1} parent=11 // pred_region
          _
        $region16: #{resnet50_instance_forward.1} parent=11 // pred_fallthru
          _
        // Predicated region
        $region17: #{resnet50_instance_forward.1} parent=11 // pred_check
          %p125 = pneg %p81
        $region18: #{resnet50_instance_forward.1} parent=11 // pred_check_branch
          %127 = sbr.rel (%p125) target = $region20
        $region19: #{resnet50_instance_forward.1} parent=11 // pred_region
          %s129 = ssub.s32 30720, 30720
          %130 = vsyncadd [#allocation4], %s129
          %s131 = sshll.u32 [#allocation3], 4
          %s132 = int_to_ptr.vmem [resolvable:$true] %s131
          %137 = dma.hbm_to_vmem [thread:$0]  %s2, 30720, %s132, [#allocation4], 64, 64, 4
        $region20: #{resnet50_instance_forward.1} parent=11 // pred_fallthru
          _
      $region12: #{resnet50_instance_forward.1} parent=5 // pred_fallthru
        _
      %p138 = scmp.lt.s32.totalorder %s13, 2
      // Predicated region
      $region21: #{resnet50_instance_forward.1} parent=5 // pred_check
        %p139 = pneg %p138
      $region22: #{resnet50_instance_forward.1} parent=5 // pred_check_branch
        %141 = sbr.rel (%p139) target = $region24
      $region23: #{resnet50_instance_forward.1} parent=5 // pred_region
        // Predicated region
        $region25: #{resnet50_instance_forward.1} parent=23 // pred_check
          %p142 = pneg %p33
        $region26: #{resnet50_instance_forward.1} parent=23 // pred_check_branch
          %144 = sbr.rel (%p142) target = $region28
        $region27: #{resnet50_instance_forward.1} parent=23 // pred_region
          %s145 = smul.u32 2, %s13
          %p146 = scmp.lt.s32.totalorder %s145, 3
          %s147 = scalar_select %p146, %s145, 3
          %s148 = smul.addr %s147, 4
          %s149 = scalar_lea.vmem %s0, %s148
          %s150 = smul.u32 2, %s13
        $region28: #{resnet50_instance_forward.1} parent=23 // pred_fallthru
          _
      $region24: #{resnet50_instance_forward.1} parent=5 // pred_fallthru
        _
      %p151 = scmp.le.s32.totalorder 1, %s13
      %p152 = scmp.lt.s32.totalorder %s13, 3
      %p153 = pnand %p151, %p152
      %p154 = pneg %p153
      // Predicated region
      $region29: #{resnet50_instance_forward.1} parent=5 // pred_check
        _
      $region30: #{resnet50_instance_forward.1} parent=5 // pred_check_branch
        %156 = sbr.rel (%p153) target = $region32
      $region31: #{resnet50_instance_forward.1} parent=5 // pred_region
        %s157 = ssub.s32 %s13, 1
        // Predicated region
        $region33: #{resnet50_instance_forward.1} parent=31 // pred_check
          %p158 = pneg %p81
        $region34: #{resnet50_instance_forward.1} parent=31 // pred_check_branch
          %160 = sbr.rel (%p158) target = $region36
        $region35: #{resnet50_instance_forward.1} parent=31 // pred_region
          %161 = dma.done [#allocation4], 30720
        $region36: #{resnet50_instance_forward.1} parent=31 // pred_fallthru
          _
        %s162 = smul.u32 2, %s18
        %p163 = scmp.lt.s32.totalorder %s162, 3
        %s164 = scalar_select %p163, %s162, 3
        %s165 = smul.addr %s164, 4
        %s166 = scalar_lea.vmem %s0, %s165
        %p167 = pneg %p39
        %p168 = pneg %p36
        %p169 = pneg %p60
        %p170 = pneg %p57
        %p171 = pneg %p81
        %p172 = pneg %p78
        %p173 = pneg %p107
        %p174 = pneg %p104
        %s175 = sand.u32 %s94, 1
        %s176 = scalar_lea.sflag [#allocation5], %s175
        %s177 = sand.u32 %s94, 1
        %s178 = smul.addr %s177, 16
        %s179 = scalar_lea.vmem [#allocation6], %s178
        %s180 = smul.u32 2, %s18
        %p181 = scmp.lt.s32.totalorder %s180, 3
        %s182 = scalar_select %p181, %s180, 3
        %s183 = smul.addr %s182, 4
        %s184 = scalar_lea.vmem %s0, %s183
        %s185 = smul.u32 2, %s18
        %s186 = smul.u32 2, %s18
        %188 = vst [vmem:[%s179] sm:$0xff] 0.0
        %189 = vst [vmem:[%s179 + $0x8] sm:$0xff] 0.0
        %v190 = vld [vmem:[%s184] sm:$0xf]
        %v191 = vld [vmem:[%s184 + $0x4] sm:$0xf]
        %v192 = vld [vmem:[%s1] sm:$0xff]
        %v193 = vld [vmem:[%s1 + $0x8] sm:$0xff]
        %v194 = vld [vmem:[%s1 + $0x10] sm:$0xff]
        %v195 = vld [vmem:[%s1 + $0x78] sm:$0xff]
        %v196 = vld [vmem:[%s1 + $0x80] sm:$0xff]
        %v197 = vld [vmem:[%s1 + $0x88] sm:$0xff]
        %v198 = vld [vmem:[%s1 + $0xf0] sm:$0xff]
        %v199 = vld [vmem:[%s1 + $0xf8] sm:$0xff]
        %v200 = vld [vmem:[%s1 + $0x100] sm:$0xff]
        %v201 = vld [vmem:[%s1 + $0x168] sm:$0xff]
        %v202 = vld [vmem:[%s1 + $0x170] sm:$0xff]
        %v203 = vld [vmem:[%s1 + $0x178] sm:$0xff]
        %v204 = vld [vmem:[%s1 + $0x1e0] sm:$0xff]
        %v205 = vld [vmem:[%s1 + $0x1e8] sm:$0xff]
        %v206 = vld [vmem:[%s1 + $0x1f0] sm:$0xff]
        %v207 = vld [vmem:[%s1 + $0x258] sm:$0xff]
        %v208 = vld [vmem:[%s1 + $0x260] sm:$0xff]
        %v209 = vld [vmem:[%s1 + $0x268] sm:$0xff]
        %v212 = vunpack.c.l.b16 %v190
        %v213 = vunpack.c.l.b16 %v191
        %v214 = vpack.c.b16 %v213, %v212
        %v233 = vunpack.c.l.b16 %v192
        %v234 = vunpack.c.h.b16 %v192
        %v235 = vunpack.c.l.b16 %v193
        %v236 = vunpack.c.h.b16 %v193
        %v237 = vunpack.c.l.b16 %v194
        %v238 = vunpack.c.h.b16 %v194
        %v239 = vunpack.c.l.b16 %v195
        %v240 = vunpack.c.h.b16 %v195
        %v241 = vunpack.c.l.b16 %v196
        %v242 = vunpack.c.h.b16 %v196
        %v243 = vunpack.c.l.b16 %v197
        %v244 = vunpack.c.h.b16 %v197
        %v245 = vunpack.c.l.b16 %v198
        %v246 = vunpack.c.h.b16 %v198
        %v247 = vunpack.c.l.b16 %v199
        %v248 = vunpack.c.h.b16 %v199
        %v249 = vunpack.c.l.b16 %v200
        %v250 = vunpack.c.h.b16 %v200
        %v251 = vunpack.c.l.b16 %v201
        %v252 = vunpack.c.h.b16 %v201
        %v253 = vunpack.c.l.b16 %v202
        %v254 = vunpack.c.h.b16 %v202
        %v255 = vunpack.c.l.b16 %v203
        %v256 = vunpack.c.h.b16 %v203
        %v257 = vunpack.c.l.b16 %v204
        %v258 = vunpack.c.h.b16 %v204
        %v259 = vunpack.c.l.b16 %v205
        %v260 = vunpack.c.h.b16 %v205
        %v261 = vunpack.c.l.b16 %v206
        %v262 = vunpack.c.h.b16 %v206
        %v263 = vunpack.c.l.b16 %v207
        %v264 = vunpack.c.h.b16 %v207
        %v265 = vunpack.c.l.b16 %v208
        %v266 = vunpack.c.h.b16 %v208
        %v267 = vunpack.c.l.b16 %v209
        %v268 = vunpack.c.h.b16 %v209
        %v269 = vpack.c.b16 %v239, %v233
        %v270 = vpack.c.b16 %v240, %v234
        %v271 = vpack.c.b16 %v241, %v235
        %v272 = vpack.c.b16 %v242, %v236
        %v273 = vpack.c.b16 %v243, %v237
        %v274 = vpack.c.b16 %v244, %v238
        %v275 = vpack.c.b16 %v251, %v245
        %v276 = vpack.c.b16 %v252, %v246
        %v277 = vpack.c.b16 %v253, %v247
        %v278 = vpack.c.b16 %v254, %v248
        %v279 = vpack.c.b16 %v255, %v249
        %v280 = vpack.c.b16 %v256, %v250
        %v281 = vpack.c.b16 %v263, %v257
        %v282 = vpack.c.b16 %v264, %v258
        %v283 = vpack.c.b16 %v265, %v259
        %v284 = vpack.c.b16 %v266, %v260
        %v285 = vpack.c.b16 %v267, %v261
        %v286 = vpack.c.b16 %v268, %v262
        %vm305 = vcmask 392192
        %v307 = vsel %vm305, %v214, 0
        %309 = vmatprep.subr.bf16.mxu0 %v270
        %310 = vmatpush1.bf16.msra.mxu0 %v269
        %311 = vmatprep.subr.bf16.mxu0 %v276
        %312 = vmatpush1.bf16.msra.mxu0 %v275
        %313 = vmatprep.subr.bf16.mxu0 %v282
        %314 = vmatpush1.bf16.msra.mxu0 %v281
        %315 = vmatprep.subr.bf16.mxu0 0
        %316 = vmatpush1.bf16.msra.mxu0 0
        %317 = vmatprep.subr.bf16.mxu0 0
        %318 = vmatpush1.bf16.msra.mxu0 0
        %319 = vmatprep.subr.bf16.mxu0 0
        %320 = vmatpush1.bf16.msra.mxu0 0
        %321 = vmatprep.subr.bf16.mxu0 0
        %322 = vmatpush1.bf16.msra.mxu0 0
        %323 = vmatprep.subr.bf16.mxu0 0
        %324 = vmatpush1.bf16.msra.mxu0 0
        %325 = vmatprep.subr.bf16.mxu0 0
        %326 = vmatpush1.bf16.msra.mxu0 0
        %327 = vmatprep.subr.bf16.mxu0 0
        %328 = vmatpush1.bf16.msra.mxu0 0
        %329 = vmatprep.subr.bf16.mxu0 0
        %330 = vmatpush1.bf16.msra.mxu0 0
        %331 = vmatprep.subr.bf16.mxu0 0
        %332 = vmatpush1.bf16.msra.mxu0 0
        %333 = vmatprep.subr.bf16.mxu0 0
        %334 = vmatpush1.bf16.msra.mxu0 0
        %335 = vmatprep.subr.bf16.mxu0 0
        %336 = vmatpush1.bf16.msra.mxu0 0
        %337 = vmatprep.subr.bf16.mxu0 0
        %338 = vmatpush1.bf16.msra.mxu0 0
        %339 = vmatprep.subr.bf16.mxu0 0
        %340 = vmatpush1.bf16.msra.mxu0 0
        %341 = vmatprep.mubr.bf16.mxu0 0
        %342 = vmatmul.mubr.bf16.gmra.mrb[0].mxu0 %v307
        %v343 = vpop.f32.mrb[0].mxu0
        %v344 = vadd.f32 0.0, %v343
        %v345 = vpop.f32.mrb[0].mxu0
        %v346 = vadd.f32 0.0, %v345
        %v347 = vpop.f32.mrb[0].mxu0
        %v348 = vadd.f32 0.0, %v347
        %v349 = vpop.f32.mrb[0].mxu0
        %v350 = vadd.f32 0.0, %v349
        %351 = vdwg.mxu0
        %352 = vmatprep.subr.bf16.mxu0 %v272
        %353 = vmatpush1.bf16.msra.mxu0 %v271
        %354 = vmatprep.subr.bf16.mxu0 %v278
        %355 = vmatpush1.bf16.msra.mxu0 %v277
        %356 = vmatprep.subr.bf16.mxu0 %v284
        %357 = vmatpush1.bf16.msra.mxu0 %v283
        %358 = vmatprep.subr.bf16.mxu0 0
        %359 = vmatpush1.bf16.msra.mxu0 0
        %360 = vmatprep.subr.bf16.mxu0 0
        %361 = vmatpush1.bf16.msra.mxu0 0
        %362 = vmatprep.subr.bf16.mxu0 0
        %363 = vmatpush1.bf16.msra.mxu0 0
        %364 = vmatprep.subr.bf16.mxu0 0
        %365 = vmatpush1.bf16.msra.mxu0 0
        %366 = vmatprep.subr.bf16.mxu0 0
        %367 = vmatpush1.bf16.msra.mxu0 0
        %368 = vmatprep.subr.bf16.mxu0 0
        %369 = vmatpush1.bf16.msra.mxu0 0
        %370 = vmatprep.subr.bf16.mxu0 0
        %371 = vmatpush1.bf16.msra.mxu0 0
        %372 = vmatprep.subr.bf16.mxu0 0
        %373 = vmatpush1.bf16.msra.mxu0 0
        %374 = vmatprep.subr.bf16.mxu0 0
        %375 = vmatpush1.bf16.msra.mxu0 0
        %376 = vmatprep.subr.bf16.mxu0 0
        %377 = vmatpush1.bf16.msra.mxu0 0
        %378 = vmatprep.subr.bf16.mxu0 0
        %379 = vmatpush1.bf16.msra.mxu0 0
        %380 = vmatprep.subr.bf16.mxu0 0
        %381 = vmatpush1.bf16.msra.mxu0 0
        %382 = vmatprep.subr.bf16.mxu0 0
        %383 = vmatpush1.bf16.msra.mxu0 0
        %384 = vmatprep.mubr.bf16.mxu0 0
        %385 = vmatmul.mubr.bf16.gmra.mrb[0].mxu0 %v307
        %v386 = vpop.f32.mrb[0].mxu0
        %v387 = vadd.f32 0.0, %v386
        %v388 = vpop.f32.mrb[0].mxu0
        %v389 = vadd.f32 0.0, %v388
        %v390 = vpop.f32.mrb[0].mxu0
        %v391 = vadd.f32 0.0, %v390
        %v392 = vpop.f32.mrb[0].mxu0
        %v393 = vadd.f32 0.0, %v392
        %394 = vdwg.mxu0
        %395 = vmatprep.subr.bf16.mxu0 %v274
        %396 = vmatpush1.bf16.msra.mxu0 %v273
        %397 = vmatprep.subr.bf16.mxu0 %v280
        %398 = vmatpush1.bf16.msra.mxu0 %v279
        %399 = vmatprep.subr.bf16.mxu0 %v286
        %400 = vmatpush1.bf16.msra.mxu0 %v285
        %401 = vmatprep.subr.bf16.mxu0 0
        %402 = vmatpush1.bf16.msra.mxu0 0
        %403 = vmatprep.subr.bf16.mxu0 0
        %404 = vmatpush1.bf16.msra.mxu0 0
        %405 = vmatprep.subr.bf16.mxu0 0
        %406 = vmatpush1.bf16.msra.mxu0 0
        %407 = vmatprep.subr.bf16.mxu0 0
        %408 = vmatpush1.bf16.msra.mxu0 0
        %409 = vmatprep.subr.bf16.mxu0 0
        %410 = vmatpush1.bf16.msra.mxu0 0
        %411 = vmatprep.subr.bf16.mxu0 0
        %412 = vmatpush1.bf16.msra.mxu0 0
        %413 = vmatprep.subr.bf16.mxu0 0
        %414 = vmatpush1.bf16.msra.mxu0 0
        %415 = vmatprep.subr.bf16.mxu0 0
        %416 = vmatpush1.bf16.msra.mxu0 0
        %417 = vmatprep.subr.bf16.mxu0 0
        %418 = vmatpush1.bf16.msra.mxu0 0
        %419 = vmatprep.subr.bf16.mxu0 0
        %420 = vmatpush1.bf16.msra.mxu0 0
        %421 = vmatprep.subr.bf16.mxu0 0
        %422 = vmatpush1.bf16.msra.mxu0 0
        %423 = vmatprep.subr.bf16.mxu0 0
        %424 = vmatpush1.bf16.msra.mxu0 0
        %425 = vmatprep.subr.bf16.mxu0 0
        %426 = vmatpush1.bf16.msra.mxu0 0
        %427 = vmatprep.mubr.bf16.mxu0 0
        %428 = vmatmul.mubr.bf16.gmra.mrb[0].mxu0 %v307
        %v429 = vpop.f32.mrb[0].mxu0
        %v430 = vadd.f32 0.0, %v429
        %v431 = vpop.f32.mrb[0].mxu0
        %v432 = vadd.f32 0.0, %v431
        %v433 = vpop.f32.mrb[0].mxu0
        %v434 = vadd.f32 0.0, %v433
        %v435 = vpop.f32.mrb[0].mxu0
        %v436 = vadd.f32 0.0, %v435
        %437 = vdwg.mxu0
        %v438 = vmax.f32 %v344, 0.0
        %v439 = vmax.f32 %v346, 0.0
        %v440 = vmax.f32 %v387, 0.0
        %v441 = vmax.f32 %v389, 0.0
        %v442 = vmax.f32 %v430, 0.0
        %v443 = vmax.f32 %v432, 0.0
        %v444 = vmax.f32 %v348, 0.0
        %v445 = vmax.f32 %v350, 0.0
        %v446 = vmax.f32 %v391, 0.0
        %v447 = vmax.f32 %v393, 0.0
        %v448 = vmax.f32 %v434, 0.0
        %v449 = vmax.f32 %v436, 0.0
        %v450 = vpack.c.bf16 %v444, %v438
        %v451 = vpack.c.bf16 %v445, %v439
        %v452 = vpack.c.bf16 %v446, %v440
        %v453 = vpack.c.bf16 %v447, %v441
        %v454 = vpack.c.bf16 %v448, %v442
        %v455 = vpack.c.bf16 %v449, %v443
        %456 = vst [vmem:[#allocation2] sm:$0xff] %v450
        %457 = vst [vmem:[#allocation2 + $0x8] sm:$0xff] %v451
        %458 = vst [vmem:[#allocation2 + $0x10] sm:$0xff] %v452
        %459 = vst [vmem:[#allocation2 + $0x18] sm:$0xff] %v453
        %460 = vst [vmem:[#allocation2 + $0x20] sm:$0xff] %v454
        %461 = vst [vmem:[#allocation2 + $0x28] sm:$0xff] %v455
        %v462 = vld [vmem:[%s179] sm:$0xff]
        %v463 = vld [vmem:[%s179 + $0x8] sm:$0xff]
        %v464 = vld [vmem:[#allocation2] sm:$0xff]
        %v465 = vld [vmem:[#allocation2 + $0x8] sm:$0xff]
        %v466 = vld [vmem:[#allocation2 + $0x10] sm:$0xff]
        %v467 = vld [vmem:[#allocation2 + $0x18] sm:$0xff]
        %v468 = vld [vmem:[#allocation2 + $0x20] sm:$0xff]
        %v469 = vld [vmem:[#allocation2 + $0x28] sm:$0xff]
        %v470 = vld [vmem:[#allocation3] sm:$0xf]
        %v471 = vld [vmem:[#allocation3 + $0x4] sm:$0xf]
        %v472 = vld [vmem:[#allocation3 + $0x8] sm:$0xf]
        %v473 = vld [vmem:[#allocation3 + $0xc] sm:$0xf]
        %v474 = vld [vmem:[#allocation3 + $0x10] sm:$0xf]
        %v475 = vld [vmem:[#allocation3 + $0x14] sm:$0xf]
        %v476 = vld [vmem:[#allocation3 + $0x18] sm:$0xf]
        %v477 = vld [vmem:[#allocation3 + $0x1c] sm:$0xf]
        %v478 = vld [vmem:[#allocation3 + $0x20] sm:$0xf]
        %v479 = vld [vmem:[#allocation3 + $0x24] sm:$0xf]
        %v480 = vld [vmem:[#allocation3 + $0x28] sm:$0xf]
        %v481 = vld [vmem:[#allocation3 + $0x2c] sm:$0xf]
        %v482 = vld [vmem:[#allocation3 + $0x30] sm:$0xf]
        %v483 = vld [vmem:[#allocation3 + $0x34] sm:$0xf]
        %v484 = vld [vmem:[#allocation3 + $0x38] sm:$0xf]
        %v485 = vld [vmem:[#allocation3 + $0x3c] sm:$0xf]
        %v486 = vld [vmem:[#allocation3 + $0x40] sm:$0xf]
        %v487 = vld [vmem:[#allocation3 + $0x44] sm:$0xf]
        %v488 = vld [vmem:[#allocation3 + $0x48] sm:$0xf]
        %v489 = vld [vmem:[#allocation3 + $0x4c] sm:$0xf]
        %v490 = vld [vmem:[#allocation3 + $0x50] sm:$0xf]
        %v491 = vld [vmem:[#allocation3 + $0x54] sm:$0xf]
        %v492 = vld [vmem:[#allocation3 + $0x58] sm:$0xf]
        %v493 = vld [vmem:[#allocation3 + $0x5c] sm:$0xf]
        %v494 = vld [vmem:[#allocation3 + $0x60] sm:$0xf]
        %v495 = vld [vmem:[#allocation3 + $0x64] sm:$0xf]
        %v496 = vld [vmem:[#allocation3 + $0x68] sm:$0xf]
        %v497 = vld [vmem:[#allocation3 + $0x6c] sm:$0xf]
        %v498 = vld [vmem:[#allocation3 + $0x70] sm:$0xf]
        %v499 = vld [vmem:[#allocation3 + $0x74] sm:$0xf]
        %v500 = vld [vmem:[#allocation3 + $0x78] sm:$0xf]
        %v501 = vld [vmem:[#allocation3 + $0x7c] sm:$0xf]
        %v502 = vld [vmem:[#allocation3 + $0x80] sm:$0xf]
        %v503 = vld [vmem:[#allocation3 + $0x84] sm:$0xf]
        %v504 = vld [vmem:[#allocation3 + $0x88] sm:$0xf]
        %v505 = vld [vmem:[#allocation3 + $0x8c] sm:$0xf]
        %v506 = vld [vmem:[#allocation3 + $0x90] sm:$0xf]
        %v507 = vld [vmem:[#allocation3 + $0x94] sm:$0xf]
        %v508 = vld [vmem:[#allocation3 + $0x98] sm:$0xf]
        %v509 = vld [vmem:[#allocation3 + $0x9c] sm:$0xf]
        %v510 = vld [vmem:[#allocation3 + $0xa0] sm:$0xf]
        %v511 = vld [vmem:[#allocation3 + $0xa4] sm:$0xf]
        %v512 = vld [vmem:[#allocation3 + $0xa8] sm:$0xf]
        %v513 = vld [vmem:[#allocation3 + $0xac] sm:$0xf]
        %v514 = vld [vmem:[#allocation3 + $0xb0] sm:$0xf]
        %v515 = vld [vmem:[#allocation3 + $0xb4] sm:$0xf]
        %v516 = vld [vmem:[#allocation3 + $0xb8] sm:$0xf]
        %v517 = vld [vmem:[#allocation3 + $0xbc] sm:$0xf]
        %v518 = vld [vmem:[#allocation3 + $0xc0] sm:$0xf]
        %v519 = vld [vmem:[#allocation3 + $0xc4] sm:$0xf]
        %v520 = vld [vmem:[#allocation3 + $0xc8] sm:$0xf]
        %v521 = vld [vmem:[#allocation3 + $0xcc] sm:$0xf]
        %v522 = vld [vmem:[#allocation3 + $0xd0] sm:$0xf]
        %v523 = vld [vmem:[#allocation3 + $0xd4] sm:$0xf]
        %v524 = vld [vmem:[#allocation3 + $0xd8] sm:$0xf]
        %v525 = vld [vmem:[#allocation3 + $0xdc] sm:$0xf]
        %v526 = vld [vmem:[#allocation3 + $0xe0] sm:$0xf]
        %v527 = vld [vmem:[#allocation3 + $0xe4] sm:$0xf]
        %v528 = vld [vmem:[#allocation3 + $0xe8] sm:$0xf]
        %v529 = vld [vmem:[#allocation3 + $0xec] sm:$0xf]
        %v530 = vld [vmem:[#allocation3 + $0xf0] sm:$0xf]
        %v531 = vld [vmem:[#allocation3 + $0xf4] sm:$0xf]
        %v532 = vld [vmem:[#allocation3 + $0xf8] sm:$0xf]
        %v533 = vld [vmem:[#allocation3 + $0xfc] sm:$0xf]
        %v534 = vld [vmem:[#allocation3 + $0x100] sm:$0xf]
        %v535 = vld [vmem:[#allocation3 + $0x104] sm:$0xf]
        %v536 = vld [vmem:[#allocation3 + $0x108] sm:$0xf]
        %v537 = vld [vmem:[#allocation3 + $0x10c] sm:$0xf]
        %v538 = vld [vmem:[#allocation3 + $0x110] sm:$0xf]
        %v539 = vld [vmem:[#allocation3 + $0x114] sm:$0xf]
        %v540 = vld [vmem:[#allocation3 + $0x118] sm:$0xf]
        %v541 = vld [vmem:[#allocation3 + $0x11c] sm:$0xf]
        %v542 = vld [vmem:[#allocation3 + $0x120] sm:$0xf]
        %v543 = vld [vmem:[#allocation3 + $0x124] sm:$0xf]
        %v544 = vld [vmem:[#allocation3 + $0x128] sm:$0xf]
        %v545 = vld [vmem:[#allocation3 + $0x12c] sm:$0xf]
        %v546 = vld [vmem:[#allocation3 + $0x130] sm:$0xf]
        %v547 = vld [vmem:[#allocation3 + $0x134] sm:$0xf]
        %v548 = vld [vmem:[#allocation3 + $0x138] sm:$0xf]
        %v549 = vld [vmem:[#allocation3 + $0x13c] sm:$0xf]
        %v550 = vld [vmem:[#allocation3 + $0x140] sm:$0xf]
        %v551 = vld [vmem:[#allocation3 + $0x144] sm:$0xf]
        %v552 = vld [vmem:[#allocation3 + $0x148] sm:$0xf]
        %v553 = vld [vmem:[#allocation3 + $0x14c] sm:$0xf]
        %v554 = vld [vmem:[#allocation3 + $0x150] sm:$0xf]
        %v555 = vld [vmem:[#allocation3 + $0x154] sm:$0xf]
        %v556 = vld [vmem:[#allocation3 + $0x158] sm:$0xf]
        %v557 = vld [vmem:[#allocation3 + $0x15c] sm:$0xf]
        %v558 = vld [vmem:[#allocation3 + $0x160] sm:$0xf]
        %v559 = vld [vmem:[#allocation3 + $0x164] sm:$0xf]
        %v560 = vld [vmem:[#allocation3 + $0x168] sm:$0xf]
        %v561 = vld [vmem:[#allocation3 + $0x16c] sm:$0xf]
        %v562 = vld [vmem:[#allocation3 + $0x170] sm:$0xf]
        %v563 = vld [vmem:[#allocation3 + $0x174] sm:$0xf]
        %v564 = vld [vmem:[#allocation3 + $0x178] sm:$0xf]
        %v565 = vld [vmem:[#allocation3 + $0x17c] sm:$0xf]
        %v662 = vunpack.c.l.b16 %v470
        %v663 = vunpack.c.l.b16 %v471
        %v664 = vunpack.c.l.b16 %v472
        %v665 = vunpack.c.l.b16 %v473
        %v666 = vunpack.c.l.b16 %v474
        %v667 = vunpack.c.l.b16 %v475
        %v668 = vunpack.c.l.b16 %v476
        %v669 = vunpack.c.l.b16 %v477
        %v670 = vunpack.c.l.b16 %v478
        %v671 = vunpack.c.l.b16 %v479
        %v672 = vunpack.c.l.b16 %v480
        %v673 = vunpack.c.l.b16 %v481
        %v674 = vunpack.c.l.b16 %v482
        %v675 = vunpack.c.l.b16 %v483
        %v676 = vunpack.c.l.b16 %v484
        %v677 = vunpack.c.l.b16 %v485
        %v678 = vunpack.c.l.b16 %v486
        %v679 = vunpack.c.l.b16 %v487
        %v680 = vunpack.c.l.b16 %v488
        %v681 = vunpack.c.l.b16 %v489
        %v682 = vunpack.c.l.b16 %v490
        %v683 = vunpack.c.l.b16 %v491
        %v684 = vunpack.c.l.b16 %v492
        %v685 = vunpack.c.l.b16 %v493
        %v686 = vunpack.c.l.b16 %v494
        %v687 = vunpack.c.l.b16 %v495
        %v688 = vunpack.c.l.b16 %v496
        %v689 = vunpack.c.l.b16 %v497
        %v690 = vunpack.c.l.b16 %v498
        %v691 = vunpack.c.l.b16 %v499
        %v692 = vunpack.c.l.b16 %v500
        %v693 = vunpack.c.l.b16 %v501
        %v694 = vunpack.c.l.b16 %v502
        %v695 = vunpack.c.l.b16 %v503
        %v696 = vunpack.c.l.b16 %v504
        %v697 = vunpack.c.l.b16 %v505
        %v698 = vunpack.c.l.b16 %v506
        %v699 = vunpack.c.l.b16 %v507
        %v700 = vunpack.c.l.b16 %v508
        %v701 = vunpack.c.l.b16 %v509
        %v702 = vunpack.c.l.b16 %v510
        %v703 = vunpack.c.l.b16 %v511
        %v704 = vunpack.c.l.b16 %v512
        %v705 = vunpack.c.l.b16 %v513
        %v706 = vunpack.c.l.b16 %v514
        %v707 = vunpack.c.l.b16 %v515
        %v708 = vunpack.c.l.b16 %v516
        %v709 = vunpack.c.l.b16 %v517
        %v710 = vunpack.c.l.b16 %v518
        %v711 = vunpack.c.l.b16 %v519
        %v712 = vunpack.c.l.b16 %v520
        %v713 = vunpack.c.l.b16 %v521
        %v714 = vunpack.c.l.b16 %v522
        %v715 = vunpack.c.l.b16 %v523
        %v716 = vunpack.c.l.b16 %v524
        %v717 = vunpack.c.l.b16 %v525
        %v718 = vunpack.c.l.b16 %v526
        %v719 = vunpack.c.l.b16 %v527
        %v720 = vunpack.c.l.b16 %v528
        %v721 = vunpack.c.l.b16 %v529
        %v722 = vunpack.c.l.b16 %v530
        %v723 = vunpack.c.l.b16 %v531
        %v724 = vunpack.c.l.b16 %v532
        %v725 = vunpack.c.l.b16 %v533
        %v726 = vunpack.c.l.b16 %v534
        %v727 = vunpack.c.l.b16 %v535
        %v728 = vunpack.c.l.b16 %v536
        %v729 = vunpack.c.l.b16 %v537
        %v730 = vunpack.c.l.b16 %v538
        %v731 = vunpack.c.l.b16 %v539
        %v732 = vunpack.c.l.b16 %v540
        %v733 = vunpack.c.l.b16 %v541
        %v734 = vunpack.c.l.b16 %v542
        %v735 = vunpack.c.l.b16 %v543
        %v736 = vunpack.c.l.b16 %v544
        %v737 = vunpack.c.l.b16 %v545
        %v738 = vunpack.c.l.b16 %v546
        %v739 = vunpack.c.l.b16 %v547
        %v740 = vunpack.c.l.b16 %v548
        %v741 = vunpack.c.l.b16 %v549
        %v742 = vunpack.c.l.b16 %v550
        %v743 = vunpack.c.l.b16 %v551
        %v744 = vunpack.c.l.b16 %v552
        %v745 = vunpack.c.l.b16 %v553
        %v746 = vunpack.c.l.b16 %v554
        %v747 = vunpack.c.l.b16 %v555
        %v748 = vunpack.c.l.b16 %v556
        %v749 = vunpack.c.l.b16 %v557
        %v750 = vunpack.c.l.b16 %v558
        %v751 = vunpack.c.l.b16 %v559
        %v752 = vunpack.c.l.b16 %v560
        %v753 = vunpack.c.l.b16 %v561
        %v754 = vunpack.c.l.b16 %v562
        %v755 = vunpack.c.l.b16 %v563
        %v756 = vunpack.c.l.b16 %v564
        %v757 = vunpack.c.l.b16 %v565
        %v758 = vpack.c.b16 %v663, %v662
        %v759 = vpack.c.b16 %v665, %v664
        %v760 = vpack.c.b16 %v667, %v666
        %v761 = vpack.c.b16 %v669, %v668
        %v762 = vpack.c.b16 %v671, %v670
        %v763 = vpack.c.b16 %v673, %v672
        %v764 = vpack.c.b16 %v675, %v674
        %v765 = vpack.c.b16 %v677, %v676
        %v766 = vpack.c.b16 %v679, %v678
        %v767 = vpack.c.b16 %v681, %v680
        %v768 = vpack.c.b16 %v683, %v682
        %v769 = vpack.c.b16 %v685, %v684
        %v770 = vpack.c.b16 %v687, %v686
        %v771 = vpack.c.b16 %v689, %v688
        %v772 = vpack.c.b16 %v691, %v690
        %v773 = vpack.c.b16 %v693, %v692
        %v774 = vpack.c.b16 %v695, %v694
        %v775 = vpack.c.b16 %v697, %v696
        %v776 = vpack.c.b16 %v699, %v698
        %v777 = vpack.c.b16 %v701, %v700
        %v778 = vpack.c.b16 %v703, %v702
        %v779 = vpack.c.b16 %v705, %v704
        %v780 = vpack.c.b16 %v707, %v706
        %v781 = vpack.c.b16 %v709, %v708
        %v782 = vpack.c.b16 %v711, %v710
        %v783 = vpack.c.b16 %v713, %v712
        %v784 = vpack.c.b16 %v715, %v714
        %v785 = vpack.c.b16 %v717, %v716
        %v786 = vpack.c.b16 %v719, %v718
        %v787 = vpack.c.b16 %v721, %v720
        %v788 = vpack.c.b16 %v723, %v722
        %v789 = vpack.c.b16 %v725, %v724
        %v790 = vpack.c.b16 %v727, %v726
        %v791 = vpack.c.b16 %v729, %v728
        %v792 = vpack.c.b16 %v731, %v730
        %v793 = vpack.c.b16 %v733, %v732
        %v794 = vpack.c.b16 %v735, %v734
        %v795 = vpack.c.b16 %v737, %v736
        %v796 = vpack.c.b16 %v739, %v738
        %v797 = vpack.c.b16 %v741, %v740
        %v798 = vpack.c.b16 %v743, %v742
        %v799 = vpack.c.b16 %v745, %v744
        %v800 = vpack.c.b16 %v747, %v746
        %v801 = vpack.c.b16 %v749, %v748
        %v802 = vpack.c.b16 %v751, %v750
        %v803 = vpack.c.b16 %v753, %v752
        %v804 = vpack.c.b16 %v755, %v754
        %v805 = vpack.c.b16 %v757, %v756
        %854 = vmatprep.subr.bf16.mxu0 0
        %855 = vmatpush1.bf16.msra.mxu0 %v758
        %856 = vmatprep.subr.bf16.mxu0 0
        %857 = vmatpush1.bf16.msra.mxu0 %v759
        %858 = vmatprep.subr.bf16.mxu0 0
        %859 = vmatpush1.bf16.msra.mxu0 %v760
        %860 = vmatprep.subr.bf16.mxu0 0
        %861 = vmatpush1.bf16.msra.mxu0 %v761
        %862 = vmatprep.subr.bf16.mxu0 0
        %863 = vmatpush1.bf16.msra.mxu0 %v762
        %864 = vmatprep.subr.bf16.mxu0 0
        %865 = vmatpush1.bf16.msra.mxu0 %v763
        %866 = vmatprep.subr.bf16.mxu0 0
        %867 = vmatpush1.bf16.msra.mxu0 %v764
        %868 = vmatprep.subr.bf16.mxu0 0
        %869 = vmatpush1.bf16.msra.mxu0 %v765
        %870 = vmatprep.subr.bf16.mxu0 0
        %871 = vmatpush1.bf16.msra.mxu0 %v766
        %872 = vmatprep.subr.bf16.mxu0 0
        %873 = vmatpush1.bf16.msra.mxu0 %v767
        %874 = vmatprep.subr.bf16.mxu0 0
        %875 = vmatpush1.bf16.msra.mxu0 %v768
        %876 = vmatprep.subr.bf16.mxu0 0
        %877 = vmatpush1.bf16.msra.mxu0 %v769
        %878 = vmatprep.subr.bf16.mxu0 0
        %879 = vmatpush1.bf16.msra.mxu0 %v770
        %880 = vmatprep.subr.bf16.mxu0 0
        %881 = vmatpush1.bf16.msra.mxu0 %v771
        %882 = vmatprep.subr.bf16.mxu0 0
        %883 = vmatpush1.bf16.msra.mxu0 %v772
        %884 = vmatprep.subr.bf16.mxu0 0
        %885 = vmatpush1.bf16.msra.mxu0 %v773
        %886 = vmatprep.mubr.bf16.mxu0 %v465
        %887 = vmatmul.mubr.bf16.gmra.mrb[0].mxu0 %v464
        %v888 = vpop.f32.mrb[0].mxu0
        %v889 = vadd.f32 0.0, %v888
        %v890 = vpop.f32.mrb[0].mxu0
        %v891 = vpop.f32.mrb[0].mxu0
        %v892 = vadd.f32 0.0, %v891
        %v893 = vpop.f32.mrb[0].mxu0
        %894 = vdwg.mxu0
        %895 = vmatprep.subr.bf16.mxu0 0
        %896 = vmatpush1.bf16.msra.mxu0 %v774
        %897 = vmatprep.subr.bf16.mxu0 0
        %898 = vmatpush1.bf16.msra.mxu0 %v775
        %899 = vmatprep.subr.bf16.mxu0 0
        %900 = vmatpush1.bf16.msra.mxu0 %v776
        %901 = vmatprep.subr.bf16.mxu0 0
        %902 = vmatpush1.bf16.msra.mxu0 %v777
        %903 = vmatprep.subr.bf16.mxu0 0
        %904 = vmatpush1.bf16.msra.mxu0 %v778
        %905 = vmatprep.subr.bf16.mxu0 0
        %906 = vmatpush1.bf16.msra.mxu0 %v779
        %907 = vmatprep.subr.bf16.mxu0 0
        %908 = vmatpush1.bf16.msra.mxu0 %v780
        %909 = vmatprep.subr.bf16.mxu0 0
        %910 = vmatpush1.bf16.msra.mxu0 %v781
        %911 = vmatprep.subr.bf16.mxu0 0
        %912 = vmatpush1.bf16.msra.mxu0 %v782
        %913 = vmatprep.subr.bf16.mxu0 0
        %914 = vmatpush1.bf16.msra.mxu0 %v783
        %915 = vmatprep.subr.bf16.mxu0 0
        %916 = vmatpush1.bf16.msra.mxu0 %v784
        %917 = vmatprep.subr.bf16.mxu0 0
        %918 = vmatpush1.bf16.msra.mxu0 %v785
        %919 = vmatprep.subr.bf16.mxu0 0
        %920 = vmatpush1.bf16.msra.mxu0 %v786
        %921 = vmatprep.subr.bf16.mxu0 0
        %922 = vmatpush1.bf16.msra.mxu0 %v787
        %923 = vmatprep.subr.bf16.mxu0 0
        %924 = vmatpush1.bf16.msra.mxu0 %v788
        %925 = vmatprep.subr.bf16.mxu0 0
        %926 = vmatpush1.bf16.msra.mxu0 %v789
        %927 = vmatprep.mubr.bf16.mxu0 %v467
        %928 = vmatmul.mubr.bf16.gmra.mrb[0].mxu0 %v466
        %v929 = vpop.f32.mrb[0].mxu0
        %v930 = vadd.f32 %v889, %v929
        %v931 = vpop.f32.mrb[0].mxu0
        %v932 = vpop.f32.mrb[0].mxu0
        %v933 = vadd.f32 %v892, %v932
        %v934 = vpop.f32.mrb[0].mxu0
        %935 = vdwg.mxu0
        %936 = vmatprep.subr.bf16.mxu0 0
        %937 = vmatpush1.bf16.msra.mxu0 %v790
        %938 = vmatprep.subr.bf16.mxu0 0
        %939 = vmatpush1.bf16.msra.mxu0 %v791
        %940 = vmatprep.subr.bf16.mxu0 0
        %941 = vmatpush1.bf16.msra.mxu0 %v792
        %942 = vmatprep.subr.bf16.mxu0 0
        %943 = vmatpush1.bf16.msra.mxu0 %v793
        %944 = vmatprep.subr.bf16.mxu0 0
        %945 = vmatpush1.bf16.msra.mxu0 %v794
        %946 = vmatprep.subr.bf16.mxu0 0
        %947 = vmatpush1.bf16.msra.mxu0 %v795
        %948 = vmatprep.subr.bf16.mxu0 0
        %949 = vmatpush1.bf16.msra.mxu0 %v796
        %950 = vmatprep.subr.bf16.mxu0 0
        %951 = vmatpush1.bf16.msra.mxu0 %v797
        %952 = vmatprep.subr.bf16.mxu0 0
        %953 = vmatpush1.bf16.msra.mxu0 %v798
        %954 = vmatprep.subr.bf16.mxu0 0
        %955 = vmatpush1.bf16.msra.mxu0 %v799
        %956 = vmatprep.subr.bf16.mxu0 0
        %957 = vmatpush1.bf16.msra.mxu0 %v800
        %958 = vmatprep.subr.bf16.mxu0 0
        %959 = vmatpush1.bf16.msra.mxu0 %v801
        %960 = vmatprep.subr.bf16.mxu0 0
        %961 = vmatpush1.bf16.msra.mxu0 %v802
        %962 = vmatprep.subr.bf16.mxu0 0
        %963 = vmatpush1.bf16.msra.mxu0 %v803
        %964 = vmatprep.subr.bf16.mxu0 0
        %965 = vmatpush1.bf16.msra.mxu0 %v804
        %966 = vmatprep.subr.bf16.mxu0 0
        %967 = vmatpush1.bf16.msra.mxu0 %v805
        %968 = vmatprep.mubr.bf16.mxu0 %v469
        %969 = vmatmul.mubr.bf16.gmra.mrb[0].mxu0 %v468
        %v970 = vpop.f32.mrb[0].mxu0
        %v971 = vadd.f32 %v930, %v970
        %v972 = vpop.f32.mrb[0].mxu0
        %v973 = vpop.f32.mrb[0].mxu0
        %v974 = vadd.f32 %v933, %v973
        %v975 = vpop.f32.mrb[0].mxu0
        %976 = vdwg.mxu0
        %v977 = vadd.f32 %v462, %v971
        %v978 = vadd.f32 %v463, %v974
        %979 = vst [vmem:[%s179] sm:$0xff] %v977
        %980 = vst [vmem:[%s179 + $0x8] sm:$0xff] %v978
        %v981 = vld [vmem:[%s184] sm:$0xf]
        %v982 = vld [vmem:[%s184 + $0x4] sm:$0xf]
        %v983 = vld [vmem:[%s1 + $0x18] sm:$0xff]
        %v984 = vld [vmem:[%s1 + $0x20] sm:$0xff]
        %v985 = vld [vmem:[%s1 + $0x28] sm:$0xff]
        %v986 = vld [vmem:[%s1 + $0x90] sm:$0xff]
        %v987 = vld [vmem:[%s1 + $0x98] sm:$0xff]
        %v988 = vld [vmem:[%s1 + $0xa0] sm:$0xff]
        %v989 = vld [vmem:[%s1 + $0x108] sm:$0xff]
        %v990 = vld [vmem:[%s1 + $0x110] sm:$0xff]
        %v991 = vld [vmem:[%s1 + $0x118] sm:$0xff]
        %v992 = vld [vmem:[%s1 + $0x180] sm:$0xff]
        %v993 = vld [vmem:[%s1 + $0x188] sm:$0xff]
        %v994 = vld [vmem:[%s1 + $0x190] sm:$0xff]
        %v995 = vld [vmem:[%s1 + $0x1f8] sm:$0xff]
        %v996 = vld [vmem:[%s1 + $0x200] sm:$0xff]
        %v997 = vld [vmem:[%s1 + $0x208] sm:$0xff]
        %v998 = vld [vmem:[%s1 + $0x270] sm:$0xff]
        %v999 = vld [vmem:[%s1 + $0x278] sm:$0xff]
        %v1000 = vld [vmem:[%s1 + $0x280] sm:$0xff]
        %v1003 = vunpack.c.l.b16 %v981
        %v1004 = vunpack.c.l.b16 %v982
        %v1005 = vpack.c.b16 %v1004, %v1003
        %v1024 = vunpack.c.l.b16 %v983
        %v1025 = vunpack.c.h.b16 %v983
        %v1026 = vunpack.c.l.b16 %v984
        %v1027 = vunpack.c.h.b16 %v984
        %v1028 = vunpack.c.l.b16 %v985
        %v1029 = vunpack.c.h.b16 %v985
        %v1030 = vunpack.c.l.b16 %v986
        %v1031 = vunpack.c.h.b16 %v986
        %v1032 = vunpack.c.l.b16 %v987
        %v1033 = vunpack.c.h.b16 %v987
        %v1034 = vunpack.c.l.b16 %v988
        %v1035 = vunpack.c.h.b16 %v988
        %v1036 = vunpack.c.l.b16 %v989
        %v1037 = vunpack.c.h.b16 %v989
        %v1038 = vunpack.c.l.b16 %v990
        %v1039 = vunpack.c.h.b16 %v990
        %v1040 = vunpack.c.l.b16 %v991
        %v1041 = vunpack.c.h.b16 %v991
        %v1042 = vunpack.c.l.b16 %v992
        %v1043 = vunpack.c.h.b16 %v992
        %v1044 = vunpack.c.l.b16 %v993
        %v1045 = vunpack.c.h.b16 %v993
        %v1046 = vunpack.c.l.b16 %v994
        %v1047 = vunpack.c.h.b16 %v994
        %v1048 = vunpack.c.l.b16 %v995
        %v1049 = vunpack.c.h.b16 %v995
        %v1050 = vunpack.c.l.b16 %v996
        %v1051 = vunpack.c.h.b16 %v996
        %v1052 = vunpack.c.l.b16 %v997
        %v1053 = vunpack.c.h.b16 %v997
        %v1054 = vunpack.c.l.b16 %v998
        %v1055 = vunpack.c.h.b16 %v998
        %v1056 = vunpack.c.l.b16 %v999
        %v1057 = vunpack.c.h.b16 %v999
        %v1058 = vunpack.c.l.b16 %v1000
        %v1059 = vunpack.c.h.b16 %v1000
        %v1060 = vpack.c.b16 %v1030, %v1024
        %v1061 = vpack.c.b16 %v1031, %v1025
        %v1062 = vpack.c.b16 %v1032, %v1026
        %v1063 = vpack.c.b16 %v1033, %v1027
        %v1064 = vpack.c.b16 %v1034, %v1028
        %v1065 = vpack.c.b16 %v1035, %v1029
        %v1066 = vpack.c.b16 %v1042, %v1036
        %v1067 = vpack.c.b16 %v1043, %v1037
        %v1068 = vpack.c.b16 %v1044, %v1038
        %v1069 = vpack.c.b16 %v1045, %v1039
        %v1070 = vpack.c.b16 %v1046, %v1040
        %v1071 = vpack.c.b16 %v1047, %v1041
        %v1072 = vpack.c.b16 %v1054, %v1048
        %v1073 = vpack.c.b16 %v1055, %v1049
        %v1074 = vpack.c.b16 %v1056, %v1050
        %v1075 = vpack.c.b16 %v1057, %v1051
        %v1076 = vpack.c.b16 %v1058, %v1052
        %v1077 = vpack.c.b16 %v1059, %v1053
        %v1097 = vsel %vm305, %v1005, 0
        %1099 = vmatprep.subr.bf16.mxu0 %v1061
        %1100 = vmatpush1.bf16.msra.mxu0 %v1060
        %1101 = vmatprep.subr.bf16.mxu0 %v1067
        %1102 = vmatpush1.bf16.msra.mxu0 %v1066
        %1103 = vmatprep.subr.bf16.mxu0 %v1073
        %1104 = vmatpush1.bf16.msra.mxu0 %v1072
        %1105 = vmatprep.subr.bf16.mxu0 0
        %1106 = vmatpush1.bf16.msra.mxu0 0
        %1107 = vmatprep.subr.bf16.mxu0 0
        %1108 = vmatpush1.bf16.msra.mxu0 0
        %1109 = vmatprep.subr.bf16.mxu0 0
        %1110 = vmatpush1.bf16.msra.mxu0 0
        %1111 = vmatprep.subr.bf16.mxu0 0
        %1112 = vmatpush1.bf16.msra.mxu0 0
        %1113 = vmatprep.subr.bf16.mxu0 0
        %1114 = vmatpush1.bf16.msra.mxu0 0
        %1115 = vmatprep.subr.bf16.mxu0 0
        %1116 = vmatpush1.bf16.msra.mxu0 0
        %1117 = vmatprep.subr.bf16.mxu0 0
        %1118 = vmatpush1.bf16.msra.mxu0 0
        %1119 = vmatprep.subr.bf16.mxu0 0
        %1120 = vmatpush1.bf16.msra.mxu0 0
        %1121 = vmatprep.subr.bf16.mxu0 0
        %1122 = vmatpush1.bf16.msra.mxu0 0
        %1123 = vmatprep.subr.bf16.mxu0 0
        %1124 = vmatpush1.bf16.msra.mxu0 0
        %1125 = vmatprep.subr.bf16.mxu0 0
        %1126 = vmatpush1.bf16.msra.mxu0 0
        %1127 = vmatprep.subr.bf16.mxu0 0
        %1128 = vmatpush1.bf16.msra.mxu0 0
        %1129 = vmatprep.subr.bf16.mxu0 0
        %1130 = vmatpush1.bf16.msra.mxu0 0
        %1131 = vmatprep.mubr.bf16.mxu0 0
        %1132 = vmatmul.mubr.bf16.gmra.mrb[0].mxu0 %v1097
        %v1133 = vpop.f32.mrb[0].mxu0
        %v1134 = vadd.f32 0.0, %v1133
        %v1135 = vpop.f32.mrb[0].mxu0
        %v1136 = vadd.f32 0.0, %v1135
        %v1137 = vpop.f32.mrb[0].mxu0
        %v1138 = vadd.f32 0.0, %v1137
        %v1139 = vpop.f32.mrb[0].mxu0
        %v1140 = vadd.f32 0.0, %v1139
        %1141 = vdwg.mxu0
        %1142 = vmatprep.subr.bf16.mxu0 %v1063
        %1143 = vmatpush1.bf16.msra.mxu0 %v1062
        %1144 = vmatprep.subr.bf16.mxu0 %v1069
        %1145 = vmatpush1.bf16.msra.mxu0 %v1068
        %1146 = vmatprep.subr.bf16.mxu0 %v1075
        %1147 = vmatpush1.bf16.msra.mxu0 %v1074
        %1148 = vmatprep.subr.bf16.mxu0 0
        %1149 = vmatpush1.bf16.msra.mxu0 0
        %1150 = vmatprep.subr.bf16.mxu0 0
        %1151 = vmatpush1.bf16.msra.mxu0 0
        %1152 = vmatprep.subr.bf16.mxu0 0
        %1153 = vmatpush1.bf16.msra.mxu0 0
        %1154 = vmatprep.subr.bf16.mxu0 0
        %1155 = vmatpush1.bf16.msra.mxu0 0
        %1156 = vmatprep.subr.bf16.mxu0 0
        %1157 = vmatpush1.bf16.msra.mxu0 0
        %1158 = vmatprep.subr.bf16.mxu0 0
        %1159 = vmatpush1.bf16.msra.mxu0 0
        %1160 = vmatprep.subr.bf16.mxu0 0
        %1161 = vmatpush1.bf16.msra.mxu0 0
        %1162 = vmatprep.subr.bf16.mxu0 0
        %1163 = vmatpush1.bf16.msra.mxu0 0
        %1164 = vmatprep.subr.bf16.mxu0 0
        %1165 = vmatpush1.bf16.msra.mxu0 0
        %1166 = vmatprep.subr.bf16.mxu0 0
        %1167 = vmatpush1.bf16.msra.mxu0 0
        %1168 = vmatprep.subr.bf16.mxu0 0
        %1169 = vmatpush1.bf16.msra.mxu0 0
        %1170 = vmatprep.subr.bf16.mxu0 0
        %1171 = vmatpush1.bf16.msra.mxu0 0
        %1172 = vmatprep.subr.bf16.mxu0 0
        %1173 = vmatpush1.bf16.msra.mxu0 0
        %1174 = vmatprep.mubr.bf16.mxu0 0
        %1175 = vmatmul.mubr.bf16.gmra.mrb[0].mxu0 %v1097
        %v1176 = vpop.f32.mrb[0].mxu0
        %v1177 = vadd.f32 0.0, %v1176
        %v1178 = vpop.f32.mrb[0].mxu0
        %v1179 = vadd.f32 0.0, %v1178
        %v1180 = vpop.f32.mrb[0].mxu0
        %v1181 = vadd.f32 0.0, %v1180
        %v1182 = vpop.f32.mrb[0].mxu0
        %v1183 = vadd.f32 0.0, %v1182
        %1184 = vdwg.mxu0
        %1185 = vmatprep.subr.bf16.mxu0 %v1065
        %1186 = vmatpush1.bf16.msra.mxu0 %v1064
        %1187 = vmatprep.subr.bf16.mxu0 %v1071
        %1188 = vmatpush1.bf16.msra.mxu0 %v1070
        %1189 = vmatprep.subr.bf16.mxu0 %v1077
        %1190 = vmatpush1.bf16.msra.mxu0 %v1076
        %1191 = vmatprep.subr.bf16.mxu0 0
        %1192 = vmatpush1.bf16.msra.mxu0 0
        %1193 = vmatprep.subr.bf16.mxu0 0
        %1194 = vmatpush1.bf16.msra.mxu0 0
        %1195 = vmatprep.subr.bf16.mxu0 0
        %1196 = vmatpush1.bf16.msra.mxu0 0
        %1197 = vmatprep.subr.bf16.mxu0 0
        %1198 = vmatpush1.bf16.msra.mxu0 0
        %1199 = vmatprep.subr.bf16.mxu0 0
        %1200 = vmatpush1.bf16.msra.mxu0 0
        %1201 = vmatprep.subr.bf16.mxu0 0
        %1202 = vmatpush1.bf16.msra.mxu0 0
        %1203 = vmatprep.subr.bf16.mxu0 0
        %1204 = vmatpush1.bf16.msra.mxu0 0
        %1205 = vmatprep.subr.bf16.mxu0 0
        %1206 = vmatpush1.bf16.msra.mxu0 0
        %1207 = vmatprep.subr.bf16.mxu0 0
        %1208 = vmatpush1.bf16.msra.mxu0 0
        %1209 = vmatprep.subr.bf16.mxu0 0
        %1210 = vmatpush1.bf16.msra.mxu0 0
        %1211 = vmatprep.subr.bf16.mxu0 0
        %1212 = vmatpush1.bf16.msra.mxu0 0
        %1213 = vmatprep.subr.bf16.mxu0 0
        %1214 = vmatpush1.bf16.msra.mxu0 0
        %1215 = vmatprep.subr.bf16.mxu0 0
        %1216 = vmatpush1.bf16.msra.mxu0 0
        %1217 = vmatprep.mubr.bf16.mxu0 0
        %1218 = vmatmul.mubr.bf16.gmra.mrb[0].mxu0 %v1097
        %v1219 = vpop.f32.mrb[0].mxu0
        %v1220 = vadd.f32 0.0, %v1219
        %v1221 = vpop.f32.mrb[0].mxu0
        %v1222 = vadd.f32 0.0, %v1221
        %v1223 = vpop.f32.mrb[0].mxu0
        %v1224 = vadd.f32 0.0, %v1223
        %v1225 = vpop.f32.mrb[0].mxu0
        %v1226 = vadd.f32 0.0, %v1225
        %1227 = vdwg.mxu0
        %v1228 = vmax.f32 %v1134, 0.0
        %v1229 = vmax.f32 %v1136, 0.0
        %v1230 = vmax.f32 %v1177, 0.0
        %v1231 = vmax.f32 %v1179, 0.0
        %v1232 = vmax.f32 %v1220, 0.0
        %v1233 = vmax.f32 %v1222, 0.0
        %v1234 = vmax.f32 %v1138, 0.0
        %v1235 = vmax.f32 %v1140, 0.0
        %v1236 = vmax.f32 %v1181, 0.0
        %v1237 = vmax.f32 %v1183, 0.0
        %v1238 = vmax.f32 %v1224, 0.0
        %v1239 = vmax.f32 %v1226, 0.0
        %v1240 = vpack.c.bf16 %v1234, %v1228
        %v1241 = vpack.c.bf16 %v1235, %v1229
        %v1242 = vpack.c.bf16 %v1236, %v1230
        %v1243 = vpack.c.bf16 %v1237, %v1231
        %v1244 = vpack.c.bf16 %v1238, %v1232
        %v1245 = vpack.c.bf16 %v1239, %v1233
        %s1246 = scalar_lea.vmem [#allocation2], 48
        %1247 = vst [vmem:[%s1246] sm:$0xff] %v1240
        %1248 = vst [vmem:[%s1246 + $0x8] sm:$0xff] %v1241
        %1249 = vst [vmem:[%s1246 + $0x10] sm:$0xff] %v1242
        %1250 = vst [vmem:[%s1246 + $0x18] sm:$0xff] %v1243
        %1251 = vst [vmem:[%s1246 + $0x20] sm:$0xff] %v1244
        %1252 = vst [vmem:[%s1246 + $0x28] sm:$0xff] %v1245
        %v1253 = vld [vmem:[%s179] sm:$0xff]
        %v1254 = vld [vmem:[%s179 + $0x8] sm:$0xff]
        %v1255 = vld [vmem:[%s1246] sm:$0xff]
        %v1256 = vld [vmem:[%s1246 + $0x8] sm:$0xff]
        %v1257 = vld [vmem:[%s1246 + $0x10] sm:$0xff]
        %v1258 = vld [vmem:[%s1246 + $0x18] sm:$0xff]
        %v1259 = vld [vmem:[%s1246 + $0x20] sm:$0xff]
        %v1260 = vld [vmem:[%s1246 + $0x28] sm:$0xff]
        %v1261 = vld [vmem:[#allocation3 + $0x180] sm:$0xf]
        %v1262 = vld [vmem:[#allocation3 + $0x184] sm:$0xf]
        %v1263 = vld [vmem:[#allocation3 + $0x188] sm:$0xf]
        %v1264 = vld [vmem:[#allocation3 + $0x18c] sm:$0xf]
        %v1265 = vld [vmem:[#allocation3 + $0x190] sm:$0xf]
        %v1266 = vld [vmem:[#allocation3 + $0x194] sm:$0xf]
        %v1267 = vld [vmem:[#allocation3 + $0x198] sm:$0xf]
        %v1268 = vld [vmem:[#allocation3 + $0x19c] sm:$0xf]
        %v1269 = vld [vmem:[#allocation3 + $0x1a0] sm:$0xf]
        %v1270 = vld [vmem:[#allocation3 + $0x1a4] sm:$0xf]
        %v1271 = vld [vmem:[#allocation3 + $0x1a8] sm:$0xf]
        %v1272 = vld [vmem:[#allocation3 + $0x1ac] sm:$0xf]
        %v1273 = vld [vmem:[#allocation3 + $0x1b0] sm:$0xf]
        %v1274 = vld [vmem:[#allocation3 + $0x1b4] sm:$0xf]
        %v1275 = vld [vmem:[#allocation3 + $0x1b8] sm:$0xf]
        %v1276 = vld [vmem:[#allocation3 + $0x1bc] sm:$0xf]
        %v1277 = vld [vmem:[#allocation3 + $0x1c0] sm:$0xf]
        %v1278 = vld [vmem:[#allocation3 + $0x1c4] sm:$0xf]
        %v1279 = vld [vmem:[#allocation3 + $0x1c8] sm:$0xf]
        %v1280 = vld [vmem:[#allocation3 + $0x1cc] sm:$0xf]
        %v1281 = vld [vmem:[#allocation3 + $0x1d0] sm:$0xf]
        %v1282 = vld [vmem:[#allocation3 + $0x1d4] sm:$0xf]
        %v1283 = vld [vmem:[#allocation3 + $0x1d8] sm:$0xf]
        %v1284 = vld [vmem:[#allocation3 + $0x1dc] sm:$0xf]
        %v1285 = vld [vmem:[#allocation3 + $0x1e0] sm:$0xf]
        %v1286 = vld [vmem:[#allocation3 + $0x1e4] sm:$0xf]
        %v1287 = vld [vmem:[#allocation3 + $0x1e8] sm:$0xf]
        %v1288 = vld [vmem:[#allocation3 + $0x1ec] sm:$0xf]
        %v1289 = vld [vmem:[#allocation3 + $0x1f0] sm:$0xf]
        %v1290 = vld [vmem:[#allocation3 + $0x1f4] sm:$0xf]
        %v1291 = vld [vmem:[#allocation3 + $0x1f8] sm:$0xf]
        %v1292 = vld [vmem:[#allocation3 + $0x1fc] sm:$0xf]
        %v1293 = vld [vmem:[#allocation3 + $0x200] sm:$0xf]
        %v1294 = vld [vmem:[#allocation3 + $0x204] sm:$0xf]
        %v1295 = vld [vmem:[#allocation3 + $0x208] sm:$0xf]
        %v1296 = vld [vmem:[#allocation3 + $0x20c] sm:$0xf]
        %v1297 = vld [vmem:[#allocation3 + $0x210] sm:$0xf]
        %v1298 = vld [vmem:[#allocation3 + $0x214] sm:$0xf]
        %v1299 = vld [vmem:[#allocation3 + $0x218] sm:$0xf]
        %v1300 = vld [vmem:[#allocation3 + $0x21c] sm:$0xf]
        %v1301 = vld [vmem:[#allocation3 + $0x220] sm:$0xf]
        %v1302 = vld [vmem:[#allocation3 + $0x224] sm:$0xf]
        %v1303 = vld [vmem:[#allocation3 + $0x228] sm:$0xf]
        %v1304 = vld [vmem:[#allocation3 + $0x22c] sm:$0xf]
        %v1305 = vld [vmem:[#allocation3 + $0x230] sm:$0xf]
        %v1306 = vld [vmem:[#allocation3 + $0x234] sm:$0xf]
        %v1307 = vld [vmem:[#allocation3 + $0x238] sm:$0xf]
        %v1308 = vld [vmem:[#allocation3 + $0x23c] sm:$0xf]
        %v1309 = vld [vmem:[#allocation3 + $0x240] sm:$0xf]
        %v1310 = vld [vmem:[#allocation3 + $0x244] sm:$0xf]
        %v1311 = vld [vmem:[#allocation3 + $0x248] sm:$0xf]
        %v1312 = vld [vmem:[#allocation3 + $0x24c] sm:$0xf]
        %v1313 = vld [vmem:[#allocation3 + $0x250] sm:$0xf]
        %v1314 = vld [vmem:[#allocation3 + $0x254] sm:$0xf]
        %v1315 = vld [vmem:[#allocation3 + $0x258] sm:$0xf]
        %v1316 = vld [vmem:[#allocation3 + $0x25c] sm:$0xf]
        %v1317 = vld [vmem:[#allocation3 + $0x260] sm:$0xf]
        %v1318 = vld [vmem:[#allocation3 + $0x264] sm:$0xf]
        %v1319 = vld [vmem:[#allocation3 + $0x268] sm:$0xf]
        %v1320 = vld [vmem:[#allocation3 + $0x26c] sm:$0xf]
        %v1321 = vld [vmem:[#allocation3 + $0x270] sm:$0xf]
        %v1322 = vld [vmem:[#allocation3 + $0x274] sm:$0xf]
        %v1323 = vld [vmem:[#allocation3 + $0x278] sm:$0xf]
        %v1324 = vld [vmem:[#allocation3 + $0x27c] sm:$0xf]
        %v1325 = vld [vmem:[#allocation3 + $0x280] sm:$0xf]
        %v1326 = vld [vmem:[#allocation3 + $0x284] sm:$0xf]
        %v1327 = vld [vmem:[#allocation3 + $0x288] sm:$0xf]
        %v1328 = vld [vmem:[#allocation3 + $0x28c] sm:$0xf]
        %v1329 = vld [vmem:[#allocation3 + $0x290] sm:$0xf]
        %v1330 = vld [vmem:[#allocation3 + $0x294] sm:$0xf]
        %v1331 = vld [vmem:[#allocation3 + $0x298] sm:$0xf]
        %v1332 = vld [vmem:[#allocation3 + $0x29c] sm:$0xf]
        %v1333 = vld [vmem:[#allocation3 + $0x2a0] sm:$0xf]
        %v1334 = vld [vmem:[#allocation3 + $0x2a4] sm:$0xf]
        %v1335 = vld [vmem:[#allocation3 + $0x2a8] sm:$0xf]
        %v1336 = vld [vmem:[#allocation3 + $0x2ac] sm:$0xf]
        %v1337 = vld [vmem:[#allocation3 + $0x2b0] sm:$0xf]
        %v1338 = vld [vmem:[#allocation3 + $0x2b4] sm:$0xf]
        %v1339 = vld [vmem:[#allocation3 + $0x2b8] sm:$0xf]
        %v1340 = vld [vmem:[#allocation3 + $0x2bc] sm:$0xf]
        %v1341 = vld [vmem:[#allocation3 + $0x2c0] sm:$0xf]
        %v1342 = vld [vmem:[#allocation3 + $0x2c4] sm:$0xf]
        %v1343 = vld [vmem:[#allocation3 + $0x2c8] sm:$0xf]
        %v1344 = vld [vmem:[#allocation3 + $0x2cc] sm:$0xf]
        %v1345 = vld [vmem:[#allocation3 + $0x2d0] sm:$0xf]
        %v1346 = vld [vmem:[#allocation3 + $0x2d4] sm:$0xf]
        %v1347 = vld [vmem:[#allocation3 + $0x2d8] sm:$0xf]
        %v1348 = vld [vmem:[#allocation3 + $0x2dc] sm:$0xf]
        %v1349 = vld [vmem:[#allocation3 + $0x2e0] sm:$0xf]
        %v1350 = vld [vmem:[#allocation3 + $0x2e4] sm:$0xf]
        %v1351 = vld [vmem:[#allocation3 + $0x2e8] sm:$0xf]
        %v1352 = vld [vmem:[#allocation3 + $0x2ec] sm:$0xf]
        %v1353 = vld [vmem:[#allocation3 + $0x2f0] sm:$0xf]
        %v1354 = vld [vmem:[#allocation3 + $0x2f4] sm:$0xf]
        %v1355 = vld [vmem:[#allocation3 + $0x2f8] sm:$0xf]
        %v1356 = vld [vmem:[#allocation3 + $0x2fc] sm:$0xf]
        %v1453 = vunpack.c.l.b16 %v1261
        %v1454 = vunpack.c.l.b16 %v1262
        %v1455 = vunpack.c.l.b16 %v1263
        %v1456 = vunpack.c.l.b16 %v1264
        %v1457 = vunpack.c.l.b16 %v1265
        %v1458 = vunpack.c.l.b16 %v1266
        %v1459 = vunpack.c.l.b16 %v1267
        %v1460 = vunpack.c.l.b16 %v1268
        %v1461 = vunpack.c.l.b16 %v1269
        %v1462 = vunpack.c.l.b16 %v1270
        %v1463 = vunpack.c.l.b16 %v1271
        %v1464 = vunpack.c.l.b16 %v1272
        %v1465 = vunpack.c.l.b16 %v1273
        %v1466 = vunpack.c.l.b16 %v1274
        %v1467 = vunpack.c.l.b16 %v1275
        %v1468 = vunpack.c.l.b16 %v1276
        %v1469 = vunpack.c.l.b16 %v1277
        %v1470 = vunpack.c.l.b16 %v1278
        %v1471 = vunpack.c.l.b16 %v1279
        %v1472 = vunpack.c.l.b16 %v1280
        %v1473 = vunpack.c.l.b16 %v1281
        %v1474 = vunpack.c.l.b16 %v1282
        %v1475 = vunpack.c.l.b16 %v1283
        %v1476 = vunpack.c.l.b16 %v1284
        %v1477 = vunpack.c.l.b16 %v1285
        %v1478 = vunpack.c.l.b16 %v1286
        %v1479 = vunpack.c.l.b16 %v1287
        %v1480 = vunpack.c.l.b16 %v1288
        %v1481 = vunpack.c.l.b16 %v1289
        %v1482 = vunpack.c.l.b16 %v1290
        %v1483 = vunpack.c.l.b16 %v1291
        %v1484 = vunpack.c.l.b16 %v1292
        %v1485 = vunpack.c.l.b16 %v1293
        %v1486 = vunpack.c.l.b16 %v1294
        %v1487 = vunpack.c.l.b16 %v1295
        %v1488 = vunpack.c.l.b16 %v1296
        %v1489 = vunpack.c.l.b16 %v1297
        %v1490 = vunpack.c.l.b16 %v1298
        %v1491 = vunpack.c.l.b16 %v1299
        %v1492 = vunpack.c.l.b16 %v1300
        %v1493 = vunpack.c.l.b16 %v1301
        %v1494 = vunpack.c.l.b16 %v1302
        %v1495 = vunpack.c.l.b16 %v1303
        %v1496 = vunpack.c.l.b16 %v1304
        %v1497 = vunpack.c.l.b16 %v1305
        %v1498 = vunpack.c.l.b16 %v1306
        %v1499 = vunpack.c.l.b16 %v1307
        %v1500 = vunpack.c.l.b16 %v1308
        %v1501 = vunpack.c.l.b16 %v1309
        %v1502 = vunpack.c.l.b16 %v1310
        %v1503 = vunpack.c.l.b16 %v1311
        %v1504 = vunpack.c.l.b16 %v1312
        %v1505 = vunpack.c.l.b16 %v1313
        %v1506 = vunpack.c.l.b16 %v1314
        %v1507 = vunpack.c.l.b16 %v1315
        %v1508 = vunpack.c.l.b16 %v1316
        %v1509 = vunpack.c.l.b16 %v1317
        %v1510 = vunpack.c.l.b16 %v1318
        %v1511 = vunpack.c.l.b16 %v1319
        %v1512 = vunpack.c.l.b16 %v1320
        %v1513 = vunpack.c.l.b16 %v1321
        %v1514 = vunpack.c.l.b16 %v1322
        %v1515 = vunpack.c.l.b16 %v1323
        %v1516 = vunpack.c.l.b16 %v1324
        %v1517 = vunpack.c.l.b16 %v1325
        %v1518 = vunpack.c.l.b16 %v1326
        %v1519 = vunpack.c.l.b16 %v1327
        %v1520 = vunpack.c.l.b16 %v1328
        %v1521 = vunpack.c.l.b16 %v1329
        %v1522 = vunpack.c.l.b16 %v1330
        %v1523 = vunpack.c.l.b16 %v1331
        %v1524 = vunpack.c.l.b16 %v1332
        %v1525 = vunpack.c.l.b16 %v1333
        %v1526 = vunpack.c.l.b16 %v1334
        %v1527 = vunpack.c.l.b16 %v1335
        %v1528 = vunpack.c.l.b16 %v1336
        %v1529 = vunpack.c.l.b16 %v1337
        %v1530 = vunpack.c.l.b16 %v1338
        %v1531 = vunpack.c.l.b16 %v1339
        %v1532 = vunpack.c.l.b16 %v1340
        %v1533 = vunpack.c.l.b16 %v1341
        %v1534 = vunpack.c.l.b16 %v1342
        %v1535 = vunpack.c.l.b16 %v1343
        %v1536 = vunpack.c.l.b16 %v1344
        %v1537 = vunpack.c.l.b16 %v1345
        %v1538 = vunpack.c.l.b16 %v1346
        %v1539 = vunpack.c.l.b16 %v1347
        %v1540 = vunpack.c.l.b16 %v1348
        %v1541 = vunpack.c.l.b16 %v1349
        %v1542 = vunpack.c.l.b16 %v1350
        %v1543 = vunpack.c.l.b16 %v1351
        %v1544 = vunpack.c.l.b16 %v1352
        %v1545 = vunpack.c.l.b16 %v1353
        %v1546 = vunpack.c.l.b16 %v1354
        %v1547 = vunpack.c.l.b16 %v1355
        %v1548 = vunpack.c.l.b16 %v1356
        %v1549 = vpack.c.b16 %v1454, %v1453
        %v1550 = vpack.c.b16 %v1456, %v1455
        %v1551 = vpack.c.b16 %v1458, %v1457
        %v1552 = vpack.c.b16 %v1460, %v1459
        %v1553 = vpack.c.b16 %v1462, %v1461
        %v1554 = vpack.c.b16 %v1464, %v1463
        %v1555 = vpack.c.b16 %v1466, %v1465
        %v1556 = vpack.c.b16 %v1468, %v1467
        %v1557 = vpack.c.b16 %v1470, %v1469
        %v1558 = vpack.c.b16 %v1472, %v1471
        %v1559 = vpack.c.b16 %v1474, %v1473
        %v1560 = vpack.c.b16 %v1476, %v1475
        %v1561 = vpack.c.b16 %v1478, %v1477
        %v1562 = vpack.c.b16 %v1480, %v1479
        %v1563 = vpack.c.b16 %v1482, %v1481
        %v1564 = vpack.c.b16 %v1484, %v1483
        %v1565 = vpack.c.b16 %v1486, %v1485
        %v1566 = vpack.c.b16 %v1488, %v1487
        %v1567 = vpack.c.b16 %v1490, %v1489
        %v1568 = vpack.c.b16 %v1492, %v1491
        %v1569 = vpack.c.b16 %v1494, %v1493
        %v1570 = vpack.c.b16 %v1496, %v1495
        %v1571 = vpack.c.b16 %v1498, %v1497
        %v1572 = vpack.c.b16 %v1500, %v1499
        %v1573 = vpack.c.b16 %v1502, %v1501
        %v1574 = vpack.c.b16 %v1504, %v1503
        %v1575 = vpack.c.b16 %v1506, %v1505
        %v1576 = vpack.c.b16 %v1508, %v1507
        %v1577 = vpack.c.b16 %v1510, %v1509
        %v1578 = vpack.c.b16 %v1512, %v1511
        %v1579 = vpack.c.b16 %v1514, %v1513
        %v1580 = vpack.c.b16 %v1516, %v1515
        %v1581 = vpack.c.b16 %v1518, %v1517
        %v1582 = vpack.c.b16 %v1520, %v1519
        %v1583 = vpack.c.b16 %v1522, %v1521
        %v1584 = vpack.c.b16 %v1524, %v1523
        %v1585 = vpack.c.b16 %v1526, %v1525
        %v1586 = vpack.c.b16 %v1528, %v1527
        %v1587 = vpack.c.b16 %v1530, %v1529
        %v1588 = vpack.c.b16 %v1532, %v1531
        %v1589 = vpack.c.b16 %v1534, %v1533
        %v1590 = vpack.c.b16 %v1536, %v1535
        %v1591 = vpack.c.b16 %v1538, %v1537
        %v1592 = vpack.c.b16 %v1540, %v1539
        %v1593 = vpack.c.b16 %v1542, %v1541
        %v1594 = vpack.c.b16 %v1544, %v1543
        %v1595 = vpack.c.b16 %v1546, %v1545
        %v1596 = vpack.c.b16 %v1548, %v1547
        %1645 = vmatprep.subr.bf16.mxu0 0
        %1646 = vmatpush1.bf16.msra.mxu0 %v1549
        %1647 = vmatprep.subr.bf16.mxu0 0
        %1648 = vmatpush1.bf16.msra.mxu0 %v1550
        %1649 = vmatprep.subr.bf16.mxu0 0
        %1650 = vmatpush1.bf16.msra.mxu0 %v1551
        %1651 = vmatprep.subr.bf16.mxu0 0
        %1652 = vmatpush1.bf16.msra.mxu0 %v1552
        %1653 = vmatprep.subr.bf16.mxu0 0
        %1654 = vmatpush1.bf16.msra.mxu0 %v1553
        %1655 = vmatprep.subr.bf16.mxu0 0
        %1656 = vmatpush1.bf16.msra.mxu0 %v1554
        %1657 = vmatprep.subr.bf16.mxu0 0
        %1658 = vmatpush1.bf16.msra.mxu0 %v1555
        %1659 = vmatprep.subr.bf16.mxu0 0
        %1660 = vmatpush1.bf16.msra.mxu0 %v1556
        %1661 = vmatprep.subr.bf16.mxu0 0
        %1662 = vmatpush1.bf16.msra.mxu0 %v1557
        %1663 = vmatprep.subr.bf16.mxu0 0
        %1664 = vmatpush1.bf16.msra.mxu0 %v1558
        %1665 = vmatprep.subr.bf16.mxu0 0
        %1666 = vmatpush1.bf16.msra.mxu0 %v1559
        %1667 = vmatprep.subr.bf16.mxu0 0
        %1668 = vmatpush1.bf16.msra.mxu0 %v1560
        %1669 = vmatprep.subr.bf16.mxu0 0
        %1670 = vmatpush1.bf16.msra.mxu0 %v1561
        %1671 = vmatprep.subr.bf16.mxu0 0
        %1672 = vmatpush1.bf16.msra.mxu0 %v1562
        %1673 = vmatprep.subr.bf16.mxu0 0
        %1674 = vmatpush1.bf16.msra.mxu0 %v1563
        %1675 = vmatprep.subr.bf16.mxu0 0
        %1676 = vmatpush1.bf16.msra.mxu0 %v1564
        %1677 = vmatprep.mubr.bf16.mxu0 %v1256
        %1678 = vmatmul.mubr.bf16.gmra.mrb[0].mxu0 %v1255
        %v1679 = vpop.f32.mrb[0].mxu0
        %v1680 = vadd.f32 0.0, %v1679
        %v1681 = vpop.f32.mrb[0].mxu0
        %v1682 = vpop.f32.mrb[0].mxu0
        %v1683 = vadd.f32 0.0, %v1682
        %v1684 = vpop.f32.mrb[0].mxu0
        %1685 = vdwg.mxu0
        %1686 = vmatprep.subr.bf16.mxu0 0
        %1687 = vmatpush1.bf16.msra.mxu0 %v1565
        %1688 = vmatprep.subr.bf16.mxu0 0
        %1689 = vmatpush1.bf16.msra.mxu0 %v1566
        %1690 = vmatprep.subr.bf16.mxu0 0
        %1691 = vmatpush1.bf16.msra.mxu0 %v1567
        %1692 = vmatprep.subr.bf16.mxu0 0
        %1693 = vmatpush1.bf16.msra.mxu0 %v1568
        %1694 = vmatprep.subr.bf16.mxu0 0
        %1695 = vmatpush1.bf16.msra.mxu0 %v1569
        %1696 = vmatprep.subr.bf16.mxu0 0
        %1697 = vmatpush1.bf16.msra.mxu0 %v1570
        %1698 = vmatprep.subr.bf16.mxu0 0
        %1699 = vmatpush1.bf16.msra.mxu0 %v1571
        %1700 = vmatprep.subr.bf16.mxu0 0
        %1701 = vmatpush1.bf16.msra.mxu0 %v1572
        %1702 = vmatprep.subr.bf16.mxu0 0
        %1703 = vmatpush1.bf16.msra.mxu0 %v1573
        %1704 = vmatprep.subr.bf16.mxu0 0
        %1705 = vmatpush1.bf16.msra.mxu0 %v1574
        %1706 = vmatprep.subr.bf16.mxu0 0
        %1707 = vmatpush1.bf16.msra.mxu0 %v1575
        %1708 = vmatprep.subr.bf16.mxu0 0
        %1709 = vmatpush1.bf16.msra.mxu0 %v1576
        %1710 = vmatprep.subr.bf16.mxu0 0
        %1711 = vmatpush1.bf16.msra.mxu0 %v1577
        %1712 = vmatprep.subr.bf16.mxu0 0
        %1713 = vmatpush1.bf16.msra.mxu0 %v1578
        %1714 = vmatprep.subr.bf16.mxu0 0
        %1715 = vmatpush1.bf16.msra.mxu0 %v1579
        %1716 = vmatprep.subr.bf16.mxu0 0
        %1717 = vmatpush1.bf16.msra.mxu0 %v1580
        %1718 = vmatprep.mubr.bf16.mxu0 %v1258
        %1719 = vmatmul.mubr.bf16.gmra.mrb[0].mxu0 %v1257
        %v1720 = vpop.f32.mrb[0].mxu0
        %v1721 = vadd.f32 %v1680, %v1720
        %v1722 = vpop.f32.mrb[0].mxu0
        %v1723 = vpop.f32.mrb[0].mxu0
        %v1724 = vadd.f32 %v1683, %v1723
        %v1725 = vpop.f32.mrb[0].mxu0
        %1726 = vdwg.mxu0
        %1727 = vmatprep.subr.bf16.mxu0 0
        %1728 = vmatpush1.bf16.msra.mxu0 %v1581
        %1729 = vmatprep.subr.bf16.mxu0 0
        %1730 = vmatpush1.bf16.msra.mxu0 %v1582
        %1731 = vmatprep.subr.bf16.mxu0 0
        %1732 = vmatpush1.bf16.msra.mxu0 %v1583
        %1733 = vmatprep.subr.bf16.mxu0 0
        %1734 = vmatpush1.bf16.msra.mxu0 %v1584
        %1735 = vmatprep.subr.bf16.mxu0 0
        %1736 = vmatpush1.bf16.msra.mxu0 %v1585
        %1737 = vmatprep.subr.bf16.mxu0 0
        %1738 = vmatpush1.bf16.msra.mxu0 %v1586
        %1739 = vmatprep.subr.bf16.mxu0 0
        %1740 = vmatpush1.bf16.msra.mxu0 %v1587
        %1741 = vmatprep.subr.bf16.mxu0 0
        %1742 = vmatpush1.bf16.msra.mxu0 %v1588
        %1743 = vmatprep.subr.bf16.mxu0 0
        %1744 = vmatpush1.bf16.msra.mxu0 %v1589
        %1745 = vmatprep.subr.bf16.mxu0 0
        %1746 = vmatpush1.bf16.msra.mxu0 %v1590
        %1747 = vmatprep.subr.bf16.mxu0 0
        %1748 = vmatpush1.bf16.msra.mxu0 %v1591
        %1749 = vmatprep.subr.bf16.mxu0 0
        %1750 = vmatpush1.bf16.msra.mxu0 %v1592
        %1751 = vmatprep.subr.bf16.mxu0 0
        %1752 = vmatpush1.bf16.msra.mxu0 %v1593
        %1753 = vmatprep.subr.bf16.mxu0 0
        %1754 = vmatpush1.bf16.msra.mxu0 %v1594
        %1755 = vmatprep.subr.bf16.mxu0 0
        %1756 = vmatpush1.bf16.msra.mxu0 %v1595
        %1757 = vmatprep.subr.bf16.mxu0 0
        %1758 = vmatpush1.bf16.msra.mxu0 %v1596
        %1759 = vmatprep.mubr.bf16.mxu0 %v1260
        %1760 = vmatmul.mubr.bf16.gmra.mrb[0].mxu0 %v1259
        %v1761 = vpop.f32.mrb[0].mxu0
        %v1762 = vadd.f32 %v1721, %v1761
        %v1763 = vpop.f32.mrb[0].mxu0
        %v1764 = vpop.f32.mrb[0].mxu0
        %v1765 = vadd.f32 %v1724, %v1764
        %v1766 = vpop.f32.mrb[0].mxu0
        %1767 = vdwg.mxu0
        %v1768 = vadd.f32 %v1253, %v1762
        %v1769 = vadd.f32 %v1254, %v1765
        %1770 = vst [vmem:[%s179] sm:$0xff] %v1768
        %1771 = vst [vmem:[%s179 + $0x8] sm:$0xff] %v1769
        %v1772 = vld [vmem:[%s184] sm:$0xf]
        %v1773 = vld [vmem:[%s184 + $0x4] sm:$0xf]
        %v1774 = vld [vmem:[%s1 + $0x30] sm:$0xff]
        %v1775 = vld [vmem:[%s1 + $0x38] sm:$0xff]
        %v1776 = vld [vmem:[%s1 + $0x40] sm:$0xff]
        %v1777 = vld [vmem:[%s1 + $0xa8] sm:$0xff]
        %v1778 = vld [vmem:[%s1 + $0xb0] sm:$0xff]
        %v1779 = vld [vmem:[%s1 + $0xb8] sm:$0xff]
        %v1780 = vld [vmem:[%s1 + $0x120] sm:$0xff]
        %v1781 = vld [vmem:[%s1 + $0x128] sm:$0xff]
        %v1782 = vld [vmem:[%s1 + $0x130] sm:$0xff]
        %v1783 = vld [vmem:[%s1 + $0x198] sm:$0xff]
        %v1784 = vld [vmem:[%s1 + $0x1a0] sm:$0xff]
        %v1785 = vld [vmem:[%s1 + $0x1a8] sm:$0xff]
        %v1786 = vld [vmem:[%s1 + $0x210] sm:$0xff]
        %v1787 = vld [vmem:[%s1 + $0x218] sm:$0xff]
        %v1788 = vld [vmem:[%s1 + $0x220] sm:$0xff]
        %v1789 = vld [vmem:[%s1 + $0x288] sm:$0xff]
        %v1790 = vld [vmem:[%s1 + $0x290] sm:$0xff]
        %v1791 = vld [vmem:[%s1 + $0x298] sm:$0xff]
        %v1794 = vunpack.c.l.b16 %v1772
        %v1795 = vunpack.c.l.b16 %v1773
        %v1796 = vpack.c.b16 %v1795, %v1794
        %v1815 = vunpack.c.l.b16 %v1774
        %v1816 = vunpack.c.h.b16 %v1774
        %v1817 = vunpack.c.l.b16 %v1775
        %v1818 = vunpack.c.h.b16 %v1775
        %v1819 = vunpack.c.l.b16 %v1776
        %v1820 = vunpack.c.h.b16 %v1776
        %v1821 = vunpack.c.l.b16 %v1777
        %v1822 = vunpack.c.h.b16 %v1777
        %v1823 = vunpack.c.l.b16 %v1778
        %v1824 = vunpack.c.h.b16 %v1778
        %v1825 = vunpack.c.l.b16 %v1779
        %v1826 = vunpack.c.h.b16 %v1779
        %v1827 = vunpack.c.l.b16 %v1780
        %v1828 = vunpack.c.h.b16 %v1780
        %v1829 = vunpack.c.l.b16 %v1781
        %v1830 = vunpack.c.h.b16 %v1781
        %v1831 = vunpack.c.l.b16 %v1782
        %v1832 = vunpack.c.h.b16 %v1782
        %v1833 = vunpack.c.l.b16 %v1783
        %v1834 = vunpack.c.h.b16 %v1783
        %v1835 = vunpack.c.l.b16 %v1784
        %v1836 = vunpack.c.h.b16 %v1784
        %v1837 = vunpack.c.l.b16 %v1785
        %v1838 = vunpack.c.h.b16 %v1785
        %v1839 = vunpack.c.l.b16 %v1786
        %v1840 = vunpack.c.h.b16 %v1786
        %v1841 = vunpack.c.l.b16 %v1787
        %v1842 = vunpack.c.h.b16 %v1787
        %v1843 = vunpack.c.l.b16 %v1788
        %v1844 = vunpack.c.h.b16 %v1788
        %v1845 = vunpack.c.l.b16 %v1789
        %v1846 = vunpack.c.h.b16 %v1789
        %v1847 = vunpack.c.l.b16 %v1790
        %v1848 = vunpack.c.h.b16 %v1790
        %v1849 = vunpack.c.l.b16 %v1791
        %v1850 = vunpack.c.h.b16 %v1791
        %v1851 = vpack.c.b16 %v1821, %v1815
        %v1852 = vpack.c.b16 %v1822, %v1816
        %v1853 = vpack.c.b16 %v1823, %v1817
        %v1854 = vpack.c.b16 %v1824, %v1818
        %v1855 = vpack.c.b16 %v1825, %v1819
        %v1856 = vpack.c.b16 %v1826, %v1820
        %v1857 = vpack.c.b16 %v1833, %v1827
        %v1858 = vpack.c.b16 %v1834, %v1828
        %v1859 = vpack.c.b16 %v1835, %v1829
        %v1860 = vpack.c.b16 %v1836, %v1830
        %v1861 = vpack.c.b16 %v1837, %v1831
        %v1862 = vpack.c.b16 %v1838, %v1832
        %v1863 = vpack.c.b16 %v1845, %v1839
        %v1864 = vpack.c.b16 %v1846, %v1840
        %v1865 = vpack.c.b16 %v1847, %v1841
        %v1866 = vpack.c.b16 %v1848, %v1842
        %v1867 = vpack.c.b16 %v1849, %v1843
        %v1868 = vpack.c.b16 %v1850, %v1844
        %v1888 = vsel %vm305, %v1796, 0
        %1890 = vmatprep.subr.bf16.mxu0 %v1852
        %1891 = vmatpush1.bf16.msra.mxu0 %v1851
        %1892 = vmatprep.subr.bf16.mxu0 %v1858
        %1893 = vmatpush1.bf16.msra.mxu0 %v1857
        %1894 = vmatprep.subr.bf16.mxu0 %v1864
        %1895 = vmatpush1.bf16.msra.mxu0 %v1863
        %1896 = vmatprep.subr.bf16.mxu0 0
        %1897 = vmatpush1.bf16.msra.mxu0 0
        %1898 = vmatprep.subr.bf16.mxu0 0
        %1899 = vmatpush1.bf16.msra.mxu0 0
        %1900 = vmatprep.subr.bf16.mxu0 0
        %1901 = vmatpush1.bf16.msra.mxu0 0
        %1902 = vmatprep.subr.bf16.mxu0 0
        %1903 = vmatpush1.bf16.msra.mxu0 0
        %1904 = vmatprep.subr.bf16.mxu0 0
        %1905 = vmatpush1.bf16.msra.mxu0 0
        %1906 = vmatprep.subr.bf16.mxu0 0
        %1907 = vmatpush1.bf16.msra.mxu0 0
        %1908 = vmatprep.subr.bf16.mxu0 0
        %1909 = vmatpush1.bf16.msra.mxu0 0
        %1910 = vmatprep.subr.bf16.mxu0 0
        %1911 = vmatpush1.bf16.msra.mxu0 0
        %1912 = vmatprep.subr.bf16.mxu0 0
        %1913 = vmatpush1.bf16.msra.mxu0 0
        %1914 = vmatprep.subr.bf16.mxu0 0
        %1915 = vmatpush1.bf16.msra.mxu0 0
        %1916 = vmatprep.subr.bf16.mxu0 0
        %1917 = vmatpush1.bf16.msra.mxu0 0
        %1918 = vmatprep.subr.bf16.mxu0 0
        %1919 = vmatpush1.bf16.msra.mxu0 0
        %1920 = vmatprep.subr.bf16.mxu0 0
        %1921 = vmatpush1.bf16.msra.mxu0 0
        %1922 = vmatprep.mubr.bf16.mxu0 0
        %1923 = vmatmul.mubr.bf16.gmra.mrb[0].mxu0 %v1888
        %v1924 = vpop.f32.mrb[0].mxu0
        %v1925 = vadd.f32 0.0, %v1924
        %v1926 = vpop.f32.mrb[0].mxu0
        %v1927 = vadd.f32 0.0, %v1926
        %v1928 = vpop.f32.mrb[0].mxu0
        %v1929 = vadd.f32 0.0, %v1928
        %v1930 = vpop.f32.mrb[0].mxu0
        %v1931 = vadd.f32 0.0, %v1930
        %1932 = vdwg.mxu0
        %1933 = vmatprep.subr.bf16.mxu0 %v1854
        %1934 = vmatpush1.bf16.msra.mxu0 %v1853
        %1935 = vmatprep.subr.bf16.mxu0 %v1860
        %1936 = vmatpush1.bf16.msra.mxu0 %v1859
        %1937 = vmatprep.subr.bf16.mxu0 %v1866
        %1938 = vmatpush1.bf16.msra.mxu0 %v1865
        %1939 = vmatprep.subr.bf16.mxu0 0
        %1940 = vmatpush1.bf16.msra.mxu0 0
        %1941 = vmatprep.subr.bf16.mxu0 0
        %1942 = vmatpush1.bf16.msra.mxu0 0
        %1943 = vmatprep.subr.bf16.mxu0 0
        %1944 = vmatpush1.bf16.msra.mxu0 0
        %1945 = vmatprep.subr.bf16.mxu0 0
        %1946 = vmatpush1.bf16.msra.mxu0 0
        %1947 = vmatprep.subr.bf16.mxu0 0
        %1948 = vmatpush1.bf16.msra.mxu0 0
        %1949 = vmatprep.subr.bf16.mxu0 0
        %1950 = vmatpush1.bf16.msra.mxu0 0
        %1951 = vmatprep.subr.bf16.mxu0 0
        %1952 = vmatpush1.bf16.msra.mxu0 0
        %1953 = vmatprep.subr.bf16.mxu0 0
        %1954 = vmatpush1.bf16.msra.mxu0 0
        %1955 = vmatprep.subr.bf16.mxu0 0
        %1956 = vmatpush1.bf16.msra.mxu0 0
        %1957 = vmatprep.subr.bf16.mxu0 0
        %1958 = vmatpush1.bf16.msra.mxu0 0
        %1959 = vmatprep.subr.bf16.mxu0 0
        %1960 = vmatpush1.bf16.msra.mxu0 0
        %1961 = vmatprep.subr.bf16.mxu0 0
        %1962 = vmatpush1.bf16.msra.mxu0 0
        %1963 = vmatprep.subr.bf16.mxu0 0
        %1964 = vmatpush1.bf16.msra.mxu0 0
        %1965 = vmatprep.mubr.bf16.mxu0 0
        %1966 = vmatmul.mubr.bf16.gmra.mrb[0].mxu0 %v1888
        %v1967 = vpop.f32.mrb[0].mxu0
        %v1968 = vadd.f32 0.0, %v1967
        %v1969 = vpop.f32.mrb[0].mxu0
        %v1970 = vadd.f32 0.0, %v1969
        %v1971 = vpop.f32.mrb[0].mxu0
        %v1972 = vadd.f32 0.0, %v1971
        %v1973 = vpop.f32.mrb[0].mxu0
        %v1974 = vadd.f32 0.0, %v1973
        %1975 = vdwg.mxu0
        %1976 = vmatprep.subr.bf16.mxu0 %v1856
        %1977 = vmatpush1.bf16.msra.mxu0 %v1855
        %1978 = vmatprep.subr.bf16.mxu0 %v1862
        %1979 = vmatpush1.bf16.msra.mxu0 %v1861
        %1980 = vmatprep.subr.bf16.mxu0 %v1868
        %1981 = vmatpush1.bf16.msra.mxu0 %v1867
        %1982 = vmatprep.subr.bf16.mxu0 0
        %1983 = vmatpush1.bf16.msra.mxu0 0
        %1984 = vmatprep.subr.bf16.mxu0 0
        %1985 = vmatpush1.bf16.msra.mxu0 0
        %1986 = vmatprep.subr.bf16.mxu0 0
        %1987 = vmatpush1.bf16.msra.mxu0 0
        %1988 = vmatprep.subr.bf16.mxu0 0
        %1989 = vmatpush1.bf16.msra.mxu0 0
        %1990 = vmatprep.subr.bf16.mxu0 0
        %1991 = vmatpush1.bf16.msra.mxu0 0
        %1992 = vmatprep.subr.bf16.mxu0 0
        %1993 = vmatpush1.bf16.msra.mxu0 0
        %1994 = vmatprep.subr.bf16.mxu0 0
        %1995 = vmatpush1.bf16.msra.mxu0 0
        %1996 = vmatprep.subr.bf16.mxu0 0
        %1997 = vmatpush1.bf16.msra.mxu0 0
        %1998 = vmatprep.subr.bf16.mxu0 0
        %1999 = vmatpush1.bf16.msra.mxu0 0
        %2000 = vmatprep.subr.bf16.mxu0 0
        %2001 = vmatpush1.bf16.msra.mxu0 0
        %2002 = vmatprep.subr.bf16.mxu0 0
        %2003 = vmatpush1.bf16.msra.mxu0 0
        %2004 = vmatprep.subr.bf16.mxu0 0
        %2005 = vmatpush1.bf16.msra.mxu0 0
        %2006 = vmatprep.subr.bf16.mxu0 0
        %2007 = vmatpush1.bf16.msra.mxu0 0
        %2008 = vmatprep.mubr.bf16.mxu0 0
        %2009 = vmatmul.mubr.bf16.gmra.mrb[0].mxu0 %v1888
        %v2010 = vpop.f32.mrb[0].mxu0
        %v2011 = vadd.f32 0.0, %v2010
        %v2012 = vpop.f32.mrb[0].mxu0
        %v2013 = vadd.f32 0.0, %v2012
        %v2014 = vpop.f32.mrb[0].mxu0
        %v2015 = vadd.f32 0.0, %v2014
        %v2016 = vpop.f32.mrb[0].mxu0
        %v2017 = vadd.f32 0.0, %v2016
        %2018 = vdwg.mxu0
        %v2019 = vmax.f32 %v1925, 0.0
        %v2020 = vmax.f32 %v1927, 0.0
        %v2021 = vmax.f32 %v1968, 0.0
        %v2022 = vmax.f32 %v1970, 0.0
        %v2023 = vmax.f32 %v2011, 0.0
        %v2024 = vmax.f32 %v2013, 0.0
        %v2025 = vmax.f32 %v1929, 0.0
        %v2026 = vmax.f32 %v1931, 0.0
        %v2027 = vmax.f32 %v1972, 0.0
        %v2028 = vmax.f32 %v1974, 0.0
        %v2029 = vmax.f32 %v2015, 0.0
        %v2030 = vmax.f32 %v2017, 0.0
        %v2031 = vpack.c.bf16 %v2025, %v2019
        %v2032 = vpack.c.bf16 %v2026, %v2020
        %v2033 = vpack.c.bf16 %v2027, %v2021
        %v2034 = vpack.c.bf16 %v2028, %v2022
        %v2035 = vpack.c.bf16 %v2029, %v2023
        %v2036 = vpack.c.bf16 %v2030, %v2024
        %2037 = vst [vmem:[#allocation2] sm:$0xff] %v2031
        %2038 = vst [vmem:[#allocation2 + $0x8] sm:$0xff] %v2032
        %2039 = vst [vmem:[#allocation2 + $0x10] sm:$0xff] %v2033
        %2040 = vst [vmem:[#allocation2 + $0x18] sm:$0xff] %v2034
        %2041 = vst [vmem:[#allocation2 + $0x20] sm:$0xff] %v2035
        %2042 = vst [vmem:[#allocation2 + $0x28] sm:$0xff] %v2036
        %v2043 = vld [vmem:[%s179] sm:$0xff]
        %v2044 = vld [vmem:[%s179 + $0x8] sm:$0xff]
        %v2045 = vld [vmem:[#allocation2] sm:$0xff]
        %v2046 = vld [vmem:[#allocation2 + $0x8] sm:$0xff]
        %v2047 = vld [vmem:[#allocation2 + $0x10] sm:$0xff]
        %v2048 = vld [vmem:[#allocation2 + $0x18] sm:$0xff]
        %v2049 = vld [vmem:[#allocation2 + $0x20] sm:$0xff]
        %v2050 = vld [vmem:[#allocation2 + $0x28] sm:$0xff]
        %v2051 = vld [vmem:[#allocation3 + $0x300] sm:$0xf]
        %v2052 = vld [vmem:[#allocation3 + $0x304] sm:$0xf]
        %v2053 = vld [vmem:[#allocation3 + $0x308] sm:$0xf]
        %v2054 = vld [vmem:[#allocation3 + $0x30c] sm:$0xf]
        %v2055 = vld [vmem:[#allocation3 + $0x310] sm:$0xf]
        %v2056 = vld [vmem:[#allocation3 + $0x314] sm:$0xf]
        %v2057 = vld [vmem:[#allocation3 + $0x318] sm:$0xf]
        %v2058 = vld [vmem:[#allocation3 + $0x31c] sm:$0xf]
        %v2059 = vld [vmem:[#allocation3 + $0x320] sm:$0xf]
        %v2060 = vld [vmem:[#allocation3 + $0x324] sm:$0xf]
        %v2061 = vld [vmem:[#allocation3 + $0x328] sm:$0xf]
        %v2062 = vld [vmem:[#allocation3 + $0x32c] sm:$0xf]
        %v2063 = vld [vmem:[#allocation3 + $0x330] sm:$0xf]
        %v2064 = vld [vmem:[#allocation3 + $0x334] sm:$0xf]
        %v2065 = vld [vmem:[#allocation3 + $0x338] sm:$0xf]
        %v2066 = vld [vmem:[#allocation3 + $0x33c] sm:$0xf]
        %v2067 = vld [vmem:[#allocation3 + $0x340] sm:$0xf]
        %v2068 = vld [vmem:[#allocation3 + $0x344] sm:$0xf]
        %v2069 = vld [vmem:[#allocation3 + $0x348] sm:$0xf]
        %v2070 = vld [vmem:[#allocation3 + $0x34c] sm:$0xf]
        %v2071 = vld [vmem:[#allocation3 + $0x350] sm:$0xf]
        %v2072 = vld [vmem:[#allocation3 + $0x354] sm:$0xf]
        %v2073 = vld [vmem:[#allocation3 + $0x358] sm:$0xf]
        %v2074 = vld [vmem:[#allocation3 + $0x35c] sm:$0xf]
        %v2075 = vld [vmem:[#allocation3 + $0x360] sm:$0xf]
        %v2076 = vld [vmem:[#allocation3 + $0x364] sm:$0xf]
        %v2077 = vld [vmem:[#allocation3 + $0x368] sm:$0xf]
        %v2078 = vld [vmem:[#allocation3 + $0x36c] sm:$0xf]
        %v2079 = vld [vmem:[#allocation3 + $0x370] sm:$0xf]
        %v2080 = vld [vmem:[#allocation3 + $0x374] sm:$0xf]
        %v2081 = vld [vmem:[#allocation3 + $0x378] sm:$0xf]
        %v2082 = vld [vmem:[#allocation3 + $0x37c] sm:$0xf]
        %v2083 = vld [vmem:[#allocation3 + $0x380] sm:$0xf]
        %v2084 = vld [vmem:[#allocation3 + $0x384] sm:$0xf]
        %v2085 = vld [vmem:[#allocation3 + $0x388] sm:$0xf]
        %v2086 = vld [vmem:[#allocation3 + $0x38c] sm:$0xf]
        %v2087 = vld [vmem:[#allocation3 + $0x390] sm:$0xf]
        %v2088 = vld [vmem:[#allocation3 + $0x394] sm:$0xf]
        %v2089 = vld [vmem:[#allocation3 + $0x398] sm:$0xf]
        %v2090 = vld [vmem:[#allocation3 + $0x39c] sm:$0xf]
        %v2091 = vld [vmem:[#allocation3 + $0x3a0] sm:$0xf]
        %v2092 = vld [vmem:[#allocation3 + $0x3a4] sm:$0xf]
        %v2093 = vld [vmem:[#allocation3 + $0x3a8] sm:$0xf]
        %v2094 = vld [vmem:[#allocation3 + $0x3ac] sm:$0xf]
        %v2095 = vld [vmem:[#allocation3 + $0x3b0] sm:$0xf]
        %v2096 = vld [vmem:[#allocation3 + $0x3b4] sm:$0xf]
        %v2097 = vld [vmem:[#allocation3 + $0x3b8] sm:$0xf]
        %v2098 = vld [vmem:[#allocation3 + $0x3bc] sm:$0xf]
        %v2099 = vld [vmem:[#allocation3 + $0x3c0] sm:$0xf]
        %v2100 = vld [vmem:[#allocation3 + $0x3c4] sm:$0xf]
        %v2101 = vld [vmem:[#allocation3 + $0x3c8] sm:$0xf]
        %v2102 = vld [vmem:[#allocation3 + $0x3cc] sm:$0xf]
        %v2103 = vld [vmem:[#allocation3 + $0x3d0] sm:$0xf]
        %v2104 = vld [vmem:[#allocation3 + $0x3d4] sm:$0xf]
        %v2105 = vld [vmem:[#allocation3 + $0x3d8] sm:$0xf]
        %v2106 = vld [vmem:[#allocation3 + $0x3dc] sm:$0xf]
        %v2107 = vld [vmem:[#allocation3 + $0x3e0] sm:$0xf]
        %v2108 = vld [vmem:[#allocation3 + $0x3e4] sm:$0xf]
        %v2109 = vld [vmem:[#allocation3 + $0x3e8] sm:$0xf]
        %v2110 = vld [vmem:[#allocation3 + $0x3ec] sm:$0xf]
        %v2111 = vld [vmem:[#allocation3 + $0x3f0] sm:$0xf]
        %v2112 = vld [vmem:[#allocation3 + $0x3f4] sm:$0xf]
        %v2113 = vld [vmem:[#allocation3 + $0x3f8] sm:$0xf]
        %v2114 = vld [vmem:[#allocation3 + $0x3fc] sm:$0xf]
        %v2115 = vld [vmem:[#allocation3 + $0x400] sm:$0xf]
        %v2116 = vld [vmem:[#allocation3 + $0x404] sm:$0xf]
        %v2117 = vld [vmem:[#allocation3 + $0x408] sm:$0xf]
        %v2118 = vld [vmem:[#allocation3 + $0x40c] sm:$0xf]
        %v2119 = vld [vmem:[#allocation3 + $0x410] sm:$0xf]
        %v2120 = vld [vmem:[#allocation3 + $0x414] sm:$0xf]
        %v2121 = vld [vmem:[#allocation3 + $0x418] sm:$0xf]
        %v2122 = vld [vmem:[#allocation3 + $0x41c] sm:$0xf]
        %v2123 = vld [vmem:[#allocation3 + $0x420] sm:$0xf]
        %v2124 = vld [vmem:[#allocation3 + $0x424] sm:$0xf]
        %v2125 = vld [vmem:[#allocation3 + $0x428] sm:$0xf]
        %v2126 = vld [vmem:[#allocation3 + $0x42c] sm:$0xf]
        %v2127 = vld [vmem:[#allocation3 + $0x430] sm:$0xf]
        %v2128 = vld [vmem:[#allocation3 + $0x434] sm:$0xf]
        %v2129 = vld [vmem:[#allocation3 + $0x438] sm:$0xf]
        %v2130 = vld [vmem:[#allocation3 + $0x43c] sm:$0xf]
        %v2131 = vld [vmem:[#allocation3 + $0x440] sm:$0xf]
        %v2132 = vld [vmem:[#allocation3 + $0x444] sm:$0xf]
        %v2133 = vld [vmem:[#allocation3 + $0x448] sm:$0xf]
        %v2134 = vld [vmem:[#allocation3 + $0x44c] sm:$0xf]
        %v2135 = vld [vmem:[#allocation3 + $0x450] sm:$0xf]
        %v2136 = vld [vmem:[#allocation3 + $0x454] sm:$0xf]
        %v2137 = vld [vmem:[#allocation3 + $0x458] sm:$0xf]
        %v2138 = vld [vmem:[#allocation3 + $0x45c] sm:$0xf]
        %v2139 = vld [vmem:[#allocation3 + $0x460] sm:$0xf]
        %v2140 = vld [vmem:[#allocation3 + $0x464] sm:$0xf]
        %v2141 = vld [vmem:[#allocation3 + $0x468] sm:$0xf]
        %v2142 = vld [vmem:[#allocation3 + $0x46c] sm:$0xf]
        %v2143 = vld [vmem:[#allocation3 + $0x470] sm:$0xf]
        %v2144 = vld [vmem:[#allocation3 + $0x474] sm:$0xf]
        %v2145 = vld [vmem:[#allocation3 + $0x478] sm:$0xf]
        %v2146 = vld [vmem:[#allocation3 + $0x47c] sm:$0xf]
        %v2243 = vunpack.c.l.b16 %v2051
        %v2244 = vunpack.c.l.b16 %v2052
        %v2245 = vunpack.c.l.b16 %v2053
        %v2246 = vunpack.c.l.b16 %v2054
        %v2247 = vunpack.c.l.b16 %v2055
        %v2248 = vunpack.c.l.b16 %v2056
        %v2249 = vunpack.c.l.b16 %v2057
        %v2250 = vunpack.c.l.b16 %v2058
        %v2251 = vunpack.c.l.b16 %v2059
        %v2252 = vunpack.c.l.b16 %v2060
        %v2253 = vunpack.c.l.b16 %v2061
        %v2254 = vunpack.c.l.b16 %v2062
        %v2255 = vunpack.c.l.b16 %v2063
        %v2256 = vunpack.c.l.b16 %v2064
        %v2257 = vunpack.c.l.b16 %v2065
        %v2258 = vunpack.c.l.b16 %v2066
        %v2259 = vunpack.c.l.b16 %v2067
        %v2260 = vunpack.c.l.b16 %v2068
        %v2261 = vunpack.c.l.b16 %v2069
        %v2262 = vunpack.c.l.b16 %v2070
        %v2263 = vunpack.c.l.b16 %v2071
        %v2264 = vunpack.c.l.b16 %v2072
        %v2265 = vunpack.c.l.b16 %v2073
        %v2266 = vunpack.c.l.b16 %v2074
        %v2267 = vunpack.c.l.b16 %v2075
        %v2268 = vunpack.c.l.b16 %v2076
        %v2269 = vunpack.c.l.b16 %v2077
        %v2270 = vunpack.c.l.b16 %v2078
        %v2271 = vunpack.c.l.b16 %v2079
        %v2272 = vunpack.c.l.b16 %v2080
        %v2273 = vunpack.c.l.b16 %v2081
        %v2274 = vunpack.c.l.b16 %v2082
        %v2275 = vunpack.c.l.b16 %v2083
        %v2276 = vunpack.c.l.b16 %v2084
        %v2277 = vunpack.c.l.b16 %v2085
        %v2278 = vunpack.c.l.b16 %v2086
        %v2279 = vunpack.c.l.b16 %v2087
        %v2280 = vunpack.c.l.b16 %v2088
        %v2281 = vunpack.c.l.b16 %v2089
        %v2282 = vunpack.c.l.b16 %v2090
        %v2283 = vunpack.c.l.b16 %v2091
        %v2284 = vunpack.c.l.b16 %v2092
        %v2285 = vunpack.c.l.b16 %v2093
        %v2286 = vunpack.c.l.b16 %v2094
        %v2287 = vunpack.c.l.b16 %v2095
        %v2288 = vunpack.c.l.b16 %v2096
        %v2289 = vunpack.c.l.b16 %v2097
        %v2290 = vunpack.c.l.b16 %v2098
        %v2291 = vunpack.c.l.b16 %v2099
        %v2292 = vunpack.c.l.b16 %v2100
        %v2293 = vunpack.c.l.b16 %v2101
        %v2294 = vunpack.c.l.b16 %v2102
        %v2295 = vunpack.c.l.b16 %v2103
        %v2296 = vunpack.c.l.b16 %v2104
        %v2297 = vunpack.c.l.b16 %v2105
        %v2298 = vunpack.c.l.b16 %v2106
        %v2299 = vunpack.c.l.b16 %v2107
        %v2300 = vunpack.c.l.b16 %v2108
        %v2301 = vunpack.c.l.b16 %v2109
        %v2302 = vunpack.c.l.b16 %v2110
        %v2303 = vunpack.c.l.b16 %v2111
        %v2304 = vunpack.c.l.b16 %v2112
        %v2305 = vunpack.c.l.b16 %v2113
        %v2306 = vunpack.c.l.b16 %v2114
        %v2307 = vunpack.c.l.b16 %v2115
        %v2308 = vunpack.c.l.b16 %v2116
        %v2309 = vunpack.c.l.b16 %v2117
        %v2310 = vunpack.c.l.b16 %v2118
        %v2311 = vunpack.c.l.b16 %v2119
        %v2312 = vunpack.c.l.b16 %v2120
        %v2313 = vunpack.c.l.b16 %v2121
        %v2314 = vunpack.c.l.b16 %v2122
        %v2315 = vunpack.c.l.b16 %v2123
        %v2316 = vunpack.c.l.b16 %v2124
        %v2317 = vunpack.c.l.b16 %v2125
        %v2318 = vunpack.c.l.b16 %v2126
        %v2319 = vunpack.c.l.b16 %v2127
        %v2320 = vunpack.c.l.b16 %v2128
        %v2321 = vunpack.c.l.b16 %v2129
        %v2322 = vunpack.c.l.b16 %v2130
        %v2323 = vunpack.c.l.b16 %v2131
        %v2324 = vunpack.c.l.b16 %v2132
        %v2325 = vunpack.c.l.b16 %v2133
        %v2326 = vunpack.c.l.b16 %v2134
        %v2327 = vunpack.c.l.b16 %v2135
        %v2328 = vunpack.c.l.b16 %v2136
        %v2329 = vunpack.c.l.b16 %v2137
        %v2330 = vunpack.c.l.b16 %v2138
        %v2331 = vunpack.c.l.b16 %v2139
        %v2332 = vunpack.c.l.b16 %v2140
        %v2333 = vunpack.c.l.b16 %v2141
        %v2334 = vunpack.c.l.b16 %v2142
        %v2335 = vunpack.c.l.b16 %v2143
        %v2336 = vunpack.c.l.b16 %v2144
        %v2337 = vunpack.c.l.b16 %v2145
        %v2338 = vunpack.c.l.b16 %v2146
        %v2339 = vpack.c.b16 %v2244, %v2243
        %v2340 = vpack.c.b16 %v2246, %v2245
        %v2341 = vpack.c.b16 %v2248, %v2247
        %v2342 = vpack.c.b16 %v2250, %v2249
        %v2343 = vpack.c.b16 %v2252, %v2251
        %v2344 = vpack.c.b16 %v2254, %v2253
        %v2345 = vpack.c.b16 %v2256, %v2255
        %v2346 = vpack.c.b16 %v2258, %v2257
        %v2347 = vpack.c.b16 %v2260, %v2259
        %v2348 = vpack.c.b16 %v2262, %v2261
        %v2349 = vpack.c.b16 %v2264, %v2263
        %v2350 = vpack.c.b16 %v2266, %v2265
        %v2351 = vpack.c.b16 %v2268, %v2267
        %v2352 = vpack.c.b16 %v2270, %v2269
        %v2353 = vpack.c.b16 %v2272, %v2271
        %v2354 = vpack.c.b16 %v2274, %v2273
        %v2355 = vpack.c.b16 %v2276, %v2275
        %v2356 = vpack.c.b16 %v2278, %v2277
        %v2357 = vpack.c.b16 %v2280, %v2279
        %v2358 = vpack.c.b16 %v2282, %v2281
        %v2359 = vpack.c.b16 %v2284, %v2283
        %v2360 = vpack.c.b16 %v2286, %v2285
        %v2361 = vpack.c.b16 %v2288, %v2287
        %v2362 = vpack.c.b16 %v2290, %v2289
        %v2363 = vpack.c.b16 %v2292, %v2291
        %v2364 = vpack.c.b16 %v2294, %v2293
        %v2365 = vpack.c.b16 %v2296, %v2295
        %v2366 = vpack.c.b16 %v2298, %v2297
        %v2367 = vpack.c.b16 %v2300, %v2299
        %v2368 = vpack.c.b16 %v2302, %v2301
        %v2369 = vpack.c.b16 %v2304, %v2303
        %v2370 = vpack.c.b16 %v2306, %v2305
        %v2371 = vpack.c.b16 %v2308, %v2307
        %v2372 = vpack.c.b16 %v2310, %v2309
        %v2373 = vpack.c.b16 %v2312, %v2311
        %v2374 = vpack.c.b16 %v2314, %v2313
        %v2375 = vpack.c.b16 %v2316, %v2315
        %v2376 = vpack.c.b16 %v2318, %v2317
        %v2377 = vpack.c.b16 %v2320, %v2319
        %v2378 = vpack.c.b16 %v2322, %v2321
        %v2379 = vpack.c.b16 %v2324, %v2323
        %v2380 = vpack.c.b16 %v2326, %v2325
        %v2381 = vpack.c.b16 %v2328, %v2327
        %v2382 = vpack.c.b16 %v2330, %v2329
        %v2383 = vpack.c.b16 %v2332, %v2331
        %v2384 = vpack.c.b16 %v2334, %v2333
        %v2385 = vpack.c.b16 %v2336, %v2335
        %v2386 = vpack.c.b16 %v2338, %v2337
        %2435 = vmatprep.subr.bf16.mxu0 0
        %2436 = vmatpush1.bf16.msra.mxu0 %v2339
        %2437 = vmatprep.subr.bf16.mxu0 0
        %2438 = vmatpush1.bf16.msra.mxu0 %v2340
        %2439 = vmatprep.subr.bf16.mxu0 0
        %2440 = vmatpush1.bf16.msra.mxu0 %v2341
        %2441 = vmatprep.subr.bf16.mxu0 0
        %2442 = vmatpush1.bf16.msra.mxu0 %v2342
        %2443 = vmatprep.subr.bf16.mxu0 0
        %2444 = vmatpush1.bf16.msra.mxu0 %v2343
        %2445 = vmatprep.subr.bf16.mxu0 0
        %2446 = vmatpush1.bf16.msra.mxu0 %v2344
        %2447 = vmatprep.subr.bf16.mxu0 0
        %2448 = vmatpush1.bf16.msra.mxu0 %v2345
        %2449 = vmatprep.subr.bf16.mxu0 0
        %2450 = vmatpush1.bf16.msra.mxu0 %v2346
        %2451 = vmatprep.subr.bf16.mxu0 0
        %2452 = vmatpush1.bf16.msra.mxu0 %v2347
        %2453 = vmatprep.subr.bf16.mxu0 0
        %2454 = vmatpush1.bf16.msra.mxu0 %v2348
        %2455 = vmatprep.subr.bf16.mxu0 0
        %2456 = vmatpush1.bf16.msra.mxu0 %v2349
        %2457 = vmatprep.subr.bf16.mxu0 0
        %2458 = vmatpush1.bf16.msra.mxu0 %v2350
        %2459 = vmatprep.subr.bf16.mxu0 0
        %2460 = vmatpush1.bf16.msra.mxu0 %v2351
        %2461 = vmatprep.subr.bf16.mxu0 0
        %2462 = vmatpush1.bf16.msra.mxu0 %v2352
        %2463 = vmatprep.subr.bf16.mxu0 0
        %2464 = vmatpush1.bf16.msra.mxu0 %v2353
        %2465 = vmatprep.subr.bf16.mxu0 0
        %2466 = vmatpush1.bf16.msra.mxu0 %v2354
        %2467 = vmatprep.mubr.bf16.mxu0 %v2046
        %2468 = vmatmul.mubr.bf16.gmra.mrb[0].mxu0 %v2045
        %v2469 = vpop.f32.mrb[0].mxu0
        %v2470 = vadd.f32 0.0, %v2469
        %v2471 = vpop.f32.mrb[0].mxu0
        %v2472 = vpop.f32.mrb[0].mxu0
        %v2473 = vadd.f32 0.0, %v2472
        %v2474 = vpop.f32.mrb[0].mxu0
        %2475 = vdwg.mxu0
        %2476 = vmatprep.subr.bf16.mxu0 0
        %2477 = vmatpush1.bf16.msra.mxu0 %v2355
        %2478 = vmatprep.subr.bf16.mxu0 0
        %2479 = vmatpush1.bf16.msra.mxu0 %v2356
        %2480 = vmatprep.subr.bf16.mxu0 0
        %2481 = vmatpush1.bf16.msra.mxu0 %v2357
        %2482 = vmatprep.subr.bf16.mxu0 0
        %2483 = vmatpush1.bf16.msra.mxu0 %v2358
        %2484 = vmatprep.subr.bf16.mxu0 0
        %2485 = vmatpush1.bf16.msra.mxu0 %v2359
        %2486 = vmatprep.subr.bf16.mxu0 0
        %2487 = vmatpush1.bf16.msra.mxu0 %v2360
        %2488 = vmatprep.subr.bf16.mxu0 0
        %2489 = vmatpush1.bf16.msra.mxu0 %v2361
        %2490 = vmatprep.subr.bf16.mxu0 0
        %2491 = vmatpush1.bf16.msra.mxu0 %v2362
        %2492 = vmatprep.subr.bf16.mxu0 0
        %2493 = vmatpush1.bf16.msra.mxu0 %v2363
        %2494 = vmatprep.subr.bf16.mxu0 0
        %2495 = vmatpush1.bf16.msra.mxu0 %v2364
        %2496 = vmatprep.subr.bf16.mxu0 0
        %2497 = vmatpush1.bf16.msra.mxu0 %v2365
        %2498 = vmatprep.subr.bf16.mxu0 0
        %2499 = vmatpush1.bf16.msra.mxu0 %v2366
        %2500 = vmatprep.subr.bf16.mxu0 0
        %2501 = vmatpush1.bf16.msra.mxu0 %v2367
        %2502 = vmatprep.subr.bf16.mxu0 0
        %2503 = vmatpush1.bf16.msra.mxu0 %v2368
        %2504 = vmatprep.subr.bf16.mxu0 0
        %2505 = vmatpush1.bf16.msra.mxu0 %v2369
        %2506 = vmatprep.subr.bf16.mxu0 0
        %2507 = vmatpush1.bf16.msra.mxu0 %v2370
        %2508 = vmatprep.mubr.bf16.mxu0 %v2048
        %2509 = vmatmul.mubr.bf16.gmra.mrb[0].mxu0 %v2047
        %v2510 = vpop.f32.mrb[0].mxu0
        %v2511 = vadd.f32 %v2470, %v2510
        %v2512 = vpop.f32.mrb[0].mxu0
        %v2513 = vpop.f32.mrb[0].mxu0
        %v2514 = vadd.f32 %v2473, %v2513
        %v2515 = vpop.f32.mrb[0].mxu0
        %2516 = vdwg.mxu0
        %2517 = vmatprep.subr.bf16.mxu0 0
        %2518 = vmatpush1.bf16.msra.mxu0 %v2371
        %2519 = vmatprep.subr.bf16.mxu0 0
        %2520 = vmatpush1.bf16.msra.mxu0 %v2372
        %2521 = vmatprep.subr.bf16.mxu0 0
        %2522 = vmatpush1.bf16.msra.mxu0 %v2373
        %2523 = vmatprep.subr.bf16.mxu0 0
        %2524 = vmatpush1.bf16.msra.mxu0 %v2374
        %2525 = vmatprep.subr.bf16.mxu0 0
        %2526 = vmatpush1.bf16.msra.mxu0 %v2375
        %2527 = vmatprep.subr.bf16.mxu0 0
        %2528 = vmatpush1.bf16.msra.mxu0 %v2376
        %2529 = vmatprep.subr.bf16.mxu0 0
        %2530 = vmatpush1.bf16.msra.mxu0 %v2377
        %2531 = vmatprep.subr.bf16.mxu0 0
        %2532 = vmatpush1.bf16.msra.mxu0 %v2378
        %2533 = vmatprep.subr.bf16.mxu0 0
        %2534 = vmatpush1.bf16.msra.mxu0 %v2379
        %2535 = vmatprep.subr.bf16.mxu0 0
        %2536 = vmatpush1.bf16.msra.mxu0 %v2380
        %2537 = vmatprep.subr.bf16.mxu0 0
        %2538 = vmatpush1.bf16.msra.mxu0 %v2381
        %2539 = vmatprep.subr.bf16.mxu0 0
        %2540 = vmatpush1.bf16.msra.mxu0 %v2382
        %2541 = vmatprep.subr.bf16.mxu0 0
        %2542 = vmatpush1.bf16.msra.mxu0 %v2383
        %2543 = vmatprep.subr.bf16.mxu0 0
        %2544 = vmatpush1.bf16.msra.mxu0 %v2384
        %2545 = vmatprep.subr.bf16.mxu0 0
        %2546 = vmatpush1.bf16.msra.mxu0 %v2385
        %2547 = vmatprep.subr.bf16.mxu0 0
        %2548 = vmatpush1.bf16.msra.mxu0 %v2386
        %2549 = vmatprep.mubr.bf16.mxu0 %v2050
        %2550 = vmatmul.mubr.bf16.gmra.mrb[0].mxu0 %v2049
        %v2551 = vpop.f32.mrb[0].mxu0
        %v2552 = vadd.f32 %v2511, %v2551
        %v2553 = vpop.f32.mrb[0].mxu0
        %v2554 = vpop.f32.mrb[0].mxu0
        %v2555 = vadd.f32 %v2514, %v2554
        %v2556 = vpop.f32.mrb[0].mxu0
        %2557 = vdwg.mxu0
        %v2558 = vadd.f32 %v2043, %v2552
        %v2559 = vadd.f32 %v2044, %v2555
        %2560 = vst [vmem:[%s179] sm:$0xff] %v2558
        %2561 = vst [vmem:[%s179 + $0x8] sm:$0xff] %v2559
        %v2562 = vld [vmem:[%s184] sm:$0xf]
        %v2563 = vld [vmem:[%s184 + $0x4] sm:$0xf]
        %v2564 = vld [vmem:[%s1 + $0x48] sm:$0xff]
        %v2565 = vld [vmem:[%s1 + $0x50] sm:$0xff]
        %v2566 = vld [vmem:[%s1 + $0x58] sm:$0xff]
        %v2567 = vld [vmem:[%s1 + $0xc0] sm:$0xff]
        %v2568 = vld [vmem:[%s1 + $0xc8] sm:$0xff]
        %v2569 = vld [vmem:[%s1 + $0xd0] sm:$0xff]
        %v2570 = vld [vmem:[%s1 + $0x138] sm:$0xff]
        %v2571 = vld [vmem:[%s1 + $0x140] sm:$0xff]
        %v2572 = vld [vmem:[%s1 + $0x148] sm:$0xff]
        %v2573 = vld [vmem:[%s1 + $0x1b0] sm:$0xff]
        %v2574 = vld [vmem:[%s1 + $0x1b8] sm:$0xff]
        %v2575 = vld [vmem:[%s1 + $0x1c0] sm:$0xff]
        %v2576 = vld [vmem:[%s1 + $0x228] sm:$0xff]
        %v2577 = vld [vmem:[%s1 + $0x230] sm:$0xff]
        %v2578 = vld [vmem:[%s1 + $0x238] sm:$0xff]
        %v2579 = vld [vmem:[%s1 + $0x2a0] sm:$0xff]
        %v2580 = vld [vmem:[%s1 + $0x2a8] sm:$0xff]
        %v2581 = vld [vmem:[%s1 + $0x2b0] sm:$0xff]
        %v2584 = vunpack.c.l.b16 %v2562
        %v2585 = vunpack.c.l.b16 %v2563
        %v2586 = vpack.c.b16 %v2585, %v2584
        %v2605 = vunpack.c.l.b16 %v2564
        %v2606 = vunpack.c.h.b16 %v2564
        %v2607 = vunpack.c.l.b16 %v2565
        %v2608 = vunpack.c.h.b16 %v2565
        %v2609 = vunpack.c.l.b16 %v2566
        %v2610 = vunpack.c.h.b16 %v2566
        %v2611 = vunpack.c.l.b16 %v2567
        %v2612 = vunpack.c.h.b16 %v2567
        %v2613 = vunpack.c.l.b16 %v2568
        %v2614 = vunpack.c.h.b16 %v2568
        %v2615 = vunpack.c.l.b16 %v2569
        %v2616 = vunpack.c.h.b16 %v2569
        %v2617 = vunpack.c.l.b16 %v2570
        %v2618 = vunpack.c.h.b16 %v2570
        %v2619 = vunpack.c.l.b16 %v2571
        %v2620 = vunpack.c.h.b16 %v2571
        %v2621 = vunpack.c.l.b16 %v2572
        %v2622 = vunpack.c.h.b16 %v2572
        %v2623 = vunpack.c.l.b16 %v2573
        %v2624 = vunpack.c.h.b16 %v2573
        %v2625 = vunpack.c.l.b16 %v2574
        %v2626 = vunpack.c.h.b16 %v2574
        %v2627 = vunpack.c.l.b16 %v2575
        %v2628 = vunpack.c.h.b16 %v2575
        %v2629 = vunpack.c.l.b16 %v2576
        %v2630 = vunpack.c.h.b16 %v2576
        %v2631 = vunpack.c.l.b16 %v2577
        %v2632 = vunpack.c.h.b16 %v2577
        %v2633 = vunpack.c.l.b16 %v2578
        %v2634 = vunpack.c.h.b16 %v2578
        %v2635 = vunpack.c.l.b16 %v2579
        %v2636 = vunpack.c.h.b16 %v2579
        %v2637 = vunpack.c.l.b16 %v2580
        %v2638 = vunpack.c.h.b16 %v2580
        %v2639 = vunpack.c.l.b16 %v2581
        %v2640 = vunpack.c.h.b16 %v2581
        %v2641 = vpack.c.b16 %v2611, %v2605
        %v2642 = vpack.c.b16 %v2612, %v2606
        %v2643 = vpack.c.b16 %v2613, %v2607
        %v2644 = vpack.c.b16 %v2614, %v2608
        %v2645 = vpack.c.b16 %v2615, %v2609
        %v2646 = vpack.c.b16 %v2616, %v2610
        %v2647 = vpack.c.b16 %v2623, %v2617
        %v2648 = vpack.c.b16 %v2624, %v2618
        %v2649 = vpack.c.b16 %v2625, %v2619
        %v2650 = vpack.c.b16 %v2626, %v2620
        %v2651 = vpack.c.b16 %v2627, %v2621
        %v2652 = vpack.c.b16 %v2628, %v2622
        %v2653 = vpack.c.b16 %v2635, %v2629
        %v2654 = vpack.c.b16 %v2636, %v2630
        %v2655 = vpack.c.b16 %v2637, %v2631
        %v2656 = vpack.c.b16 %v2638, %v2632
        %v2657 = vpack.c.b16 %v2639, %v2633
        %v2658 = vpack.c.b16 %v2640, %v2634
        %v2678 = vsel %vm305, %v2586, 0
        %2680 = vmatprep.subr.bf16.mxu0 %v2642
        %2681 = vmatpush1.bf16.msra.mxu0 %v2641
        %2682 = vmatprep.subr.bf16.mxu0 %v2648
        %2683 = vmatpush1.bf16.msra.mxu0 %v2647
        %2684 = vmatprep.subr.bf16.mxu0 %v2654
        %2685 = vmatpush1.bf16.msra.mxu0 %v2653
        %2686 = vmatprep.subr.bf16.mxu0 0
        %2687 = vmatpush1.bf16.msra.mxu0 0
        %2688 = vmatprep.subr.bf16.mxu0 0
        %2689 = vmatpush1.bf16.msra.mxu0 0
        %2690 = vmatprep.subr.bf16.mxu0 0
        %2691 = vmatpush1.bf16.msra.mxu0 0
        %2692 = vmatprep.subr.bf16.mxu0 0
        %2693 = vmatpush1.bf16.msra.mxu0 0
        %2694 = vmatprep.subr.bf16.mxu0 0
        %2695 = vmatpush1.bf16.msra.mxu0 0
        %2696 = vmatprep.subr.bf16.mxu0 0
        %2697 = vmatpush1.bf16.msra.mxu0 0
        %2698 = vmatprep.subr.bf16.mxu0 0
        %2699 = vmatpush1.bf16.msra.mxu0 0
        %2700 = vmatprep.subr.bf16.mxu0 0
        %2701 = vmatpush1.bf16.msra.mxu0 0
        %2702 = vmatprep.subr.bf16.mxu0 0
        %2703 = vmatpush1.bf16.msra.mxu0 0
        %2704 = vmatprep.subr.bf16.mxu0 0
        %2705 = vmatpush1.bf16.msra.mxu0 0
        %2706 = vmatprep.subr.bf16.mxu0 0
        %2707 = vmatpush1.bf16.msra.mxu0 0
        %2708 = vmatprep.subr.bf16.mxu0 0
        %2709 = vmatpush1.bf16.msra.mxu0 0
        %2710 = vmatprep.subr.bf16.mxu0 0
        %2711 = vmatpush1.bf16.msra.mxu0 0
        %2712 = vmatprep.mubr.bf16.mxu0 0
        %2713 = vmatmul.mubr.bf16.gmra.mrb[0].mxu0 %v2678
        %v2714 = vpop.f32.mrb[0].mxu0
        %v2715 = vadd.f32 0.0, %v2714
        %v2716 = vpop.f32.mrb[0].mxu0
        %v2717 = vadd.f32 0.0, %v2716
        %v2718 = vpop.f32.mrb[0].mxu0
        %v2719 = vadd.f32 0.0, %v2718
        %v2720 = vpop.f32.mrb[0].mxu0
        %v2721 = vadd.f32 0.0, %v2720
        %2722 = vdwg.mxu0
        %2723 = vmatprep.subr.bf16.mxu0 %v2644
        %2724 = vmatpush1.bf16.msra.mxu0 %v2643
        %2725 = vmatprep.subr.bf16.mxu0 %v2650
        %2726 = vmatpush1.bf16.msra.mxu0 %v2649
        %2727 = vmatprep.subr.bf16.mxu0 %v2656
        %2728 = vmatpush1.bf16.msra.mxu0 %v2655
        %2729 = vmatprep.subr.bf16.mxu0 0
        %2730 = vmatpush1.bf16.msra.mxu0 0
        %2731 = vmatprep.subr.bf16.mxu0 0
        %2732 = vmatpush1.bf16.msra.mxu0 0
        %2733 = vmatprep.subr.bf16.mxu0 0
        %2734 = vmatpush1.bf16.msra.mxu0 0
        %2735 = vmatprep.subr.bf16.mxu0 0
        %2736 = vmatpush1.bf16.msra.mxu0 0
        %2737 = vmatprep.subr.bf16.mxu0 0
        %2738 = vmatpush1.bf16.msra.mxu0 0
        %2739 = vmatprep.subr.bf16.mxu0 0
        %2740 = vmatpush1.bf16.msra.mxu0 0
        %2741 = vmatprep.subr.bf16.mxu0 0
        %2742 = vmatpush1.bf16.msra.mxu0 0
        %2743 = vmatprep.subr.bf16.mxu0 0
        %2744 = vmatpush1.bf16.msra.mxu0 0
        %2745 = vmatprep.subr.bf16.mxu0 0
        %2746 = vmatpush1.bf16.msra.mxu0 0
        %2747 = vmatprep.subr.bf16.mxu0 0
        %2748 = vmatpush1.bf16.msra.mxu0 0
        %2749 = vmatprep.subr.bf16.mxu0 0
        %2750 = vmatpush1.bf16.msra.mxu0 0
        %2751 = vmatprep.subr.bf16.mxu0 0
        %2752 = vmatpush1.bf16.msra.mxu0 0
        %2753 = vmatprep.subr.bf16.mxu0 0
        %2754 = vmatpush1.bf16.msra.mxu0 0
        %2755 = vmatprep.mubr.bf16.mxu0 0
        %2756 = vmatmul.mubr.bf16.gmra.mrb[0].mxu0 %v2678
        %v2757 = vpop.f32.mrb[0].mxu0
        %v2758 = vadd.f32 0.0, %v2757
        %v2759 = vpop.f32.mrb[0].mxu0
        %v2760 = vadd.f32 0.0, %v2759
        %v2761 = vpop.f32.mrb[0].mxu0
        %v2762 = vadd.f32 0.0, %v2761
        %v2763 = vpop.f32.mrb[0].mxu0
        %v2764 = vadd.f32 0.0, %v2763
        %2765 = vdwg.mxu0
        %2766 = vmatprep.subr.bf16.mxu0 %v2646
        %2767 = vmatpush1.bf16.msra.mxu0 %v2645
        %2768 = vmatprep.subr.bf16.mxu0 %v2652
        %2769 = vmatpush1.bf16.msra.mxu0 %v2651
        %2770 = vmatprep.subr.bf16.mxu0 %v2658
        %2771 = vmatpush1.bf16.msra.mxu0 %v2657
        %2772 = vmatprep.subr.bf16.mxu0 0
        %2773 = vmatpush1.bf16.msra.mxu0 0
        %2774 = vmatprep.subr.bf16.mxu0 0
        %2775 = vmatpush1.bf16.msra.mxu0 0
        %2776 = vmatprep.subr.bf16.mxu0 0
        %2777 = vmatpush1.bf16.msra.mxu0 0
        %2778 = vmatprep.subr.bf16.mxu0 0
        %2779 = vmatpush1.bf16.msra.mxu0 0
        %2780 = vmatprep.subr.bf16.mxu0 0
        %2781 = vmatpush1.bf16.msra.mxu0 0
        %2782 = vmatprep.subr.bf16.mxu0 0
        %2783 = vmatpush1.bf16.msra.mxu0 0
        %2784 = vmatprep.subr.bf16.mxu0 0
        %2785 = vmatpush1.bf16.msra.mxu0 0
        %2786 = vmatprep.subr.bf16.mxu0 0
        %2787 = vmatpush1.bf16.msra.mxu0 0
        %2788 = vmatprep.subr.bf16.mxu0 0
        %2789 = vmatpush1.bf16.msra.mxu0 0
        %2790 = vmatprep.subr.bf16.mxu0 0
        %2791 = vmatpush1.bf16.msra.mxu0 0
        %2792 = vmatprep.subr.bf16.mxu0 0
        %2793 = vmatpush1.bf16.msra.mxu0 0
        %2794 = vmatprep.subr.bf16.mxu0 0
        %2795 = vmatpush1.bf16.msra.mxu0 0
        %2796 = vmatprep.subr.bf16.mxu0 0
        %2797 = vmatpush1.bf16.msra.mxu0 0
        %2798 = vmatprep.mubr.bf16.mxu0 0
        %2799 = vmatmul.mubr.bf16.gmra.mrb[0].mxu0 %v2678
        %v2800 = vpop.f32.mrb[0].mxu0
        %v2801 = vadd.f32 0.0, %v2800
        %v2802 = vpop.f32.mrb[0].mxu0
        %v2803 = vadd.f32 0.0, %v2802
        %v2804 = vpop.f32.mrb[0].mxu0
        %v2805 = vadd.f32 0.0, %v2804
        %v2806 = vpop.f32.mrb[0].mxu0
        %v2807 = vadd.f32 0.0, %v2806
        %2808 = vdwg.mxu0
        %v2809 = vmax.f32 %v2715, 0.0
        %v2810 = vmax.f32 %v2717, 0.0
        %v2811 = vmax.f32 %v2758, 0.0
        %v2812 = vmax.f32 %v2760, 0.0
        %v2813 = vmax.f32 %v2801, 0.0
        %v2814 = vmax.f32 %v2803, 0.0
        %v2815 = vmax.f32 %v2719, 0.0
        %v2816 = vmax.f32 %v2721, 0.0
        %v2817 = vmax.f32 %v2762, 0.0
        %v2818 = vmax.f32 %v2764, 0.0
        %v2819 = vmax.f32 %v2805, 0.0
        %v2820 = vmax.f32 %v2807, 0.0
        %v2821 = vpack.c.bf16 %v2815, %v2809
        %v2822 = vpack.c.bf16 %v2816, %v2810
        %v2823 = vpack.c.bf16 %v2817, %v2811
        %v2824 = vpack.c.bf16 %v2818, %v2812
        %v2825 = vpack.c.bf16 %v2819, %v2813
        %v2826 = vpack.c.bf16 %v2820, %v2814
        %2827 = vst [vmem:[%s1246] sm:$0xff] %v2821
        %2828 = vst [vmem:[%s1246 + $0x8] sm:$0xff] %v2822
        %2829 = vst [vmem:[%s1246 + $0x10] sm:$0xff] %v2823
        %2830 = vst [vmem:[%s1246 + $0x18] sm:$0xff] %v2824
        %2831 = vst [vmem:[%s1246 + $0x20] sm:$0xff] %v2825
        %2832 = vst [vmem:[%s1246 + $0x28] sm:$0xff] %v2826
        %v2833 = vld [vmem:[%s179] sm:$0xff]
        %v2834 = vld [vmem:[%s179 + $0x8] sm:$0xff]
        %v2835 = vld [vmem:[%s1246] sm:$0xff]
        %v2836 = vld [vmem:[%s1246 + $0x8] sm:$0xff]
        %v2837 = vld [vmem:[%s1246 + $0x10] sm:$0xff]
        %v2838 = vld [vmem:[%s1246 + $0x18] sm:$0xff]
        %v2839 = vld [vmem:[%s1246 + $0x20] sm:$0xff]
        %v2840 = vld [vmem:[%s1246 + $0x28] sm:$0xff]
        %v2841 = vld [vmem:[#allocation3 + $0x480] sm:$0xf]
        %v2842 = vld [vmem:[#allocation3 + $0x484] sm:$0xf]
        %v2843 = vld [vmem:[#allocation3 + $0x488] sm:$0xf]
        %v2844 = vld [vmem:[#allocation3 + $0x48c] sm:$0xf]
        %v2845 = vld [vmem:[#allocation3 + $0x490] sm:$0xf]
        %v2846 = vld [vmem:[#allocation3 + $0x494] sm:$0xf]
        %v2847 = vld [vmem:[#allocation3 + $0x498] sm:$0xf]
        %v2848 = vld [vmem:[#allocation3 + $0x49c] sm:$0xf]
        %v2849 = vld [vmem:[#allocation3 + $0x4a0] sm:$0xf]
        %v2850 = vld [vmem:[#allocation3 + $0x4a4] sm:$0xf]
        %v2851 = vld [vmem:[#allocation3 + $0x4a8] sm:$0xf]
        %v2852 = vld [vmem:[#allocation3 + $0x4ac] sm:$0xf]
        %v2853 = vld [vmem:[#allocation3 + $0x4b0] sm:$0xf]
        %v2854 = vld [vmem:[#allocation3 + $0x4b4] sm:$0xf]
        %v2855 = vld [vmem:[#allocation3 + $0x4b8] sm:$0xf]
        %v2856 = vld [vmem:[#allocation3 + $0x4bc] sm:$0xf]
        %v2857 = vld [vmem:[#allocation3 + $0x4c0] sm:$0xf]
        %v2858 = vld [vmem:[#allocation3 + $0x4c4] sm:$0xf]
        %v2859 = vld [vmem:[#allocation3 + $0x4c8] sm:$0xf]
        %v2860 = vld [vmem:[#allocation3 + $0x4cc] sm:$0xf]
        %v2861 = vld [vmem:[#allocation3 + $0x4d0] sm:$0xf]
        %v2862 = vld [vmem:[#allocation3 + $0x4d4] sm:$0xf]
        %v2863 = vld [vmem:[#allocation3 + $0x4d8] sm:$0xf]
        %v2864 = vld [vmem:[#allocation3 + $0x4dc] sm:$0xf]
        %v2865 = vld [vmem:[#allocation3 + $0x4e0] sm:$0xf]
        %v2866 = vld [vmem:[#allocation3 + $0x4e4] sm:$0xf]
        %v2867 = vld [vmem:[#allocation3 + $0x4e8] sm:$0xf]
        %v2868 = vld [vmem:[#allocation3 + $0x4ec] sm:$0xf]
        %v2869 = vld [vmem:[#allocation3 + $0x4f0] sm:$0xf]
        %v2870 = vld [vmem:[#allocation3 + $0x4f4] sm:$0xf]
        %v2871 = vld [vmem:[#allocation3 + $0x4f8] sm:$0xf]
        %v2872 = vld [vmem:[#allocation3 + $0x4fc] sm:$0xf]
        %v2873 = vld [vmem:[#allocation3 + $0x500] sm:$0xf]
        %v2874 = vld [vmem:[#allocation3 + $0x504] sm:$0xf]
        %v2875 = vld [vmem:[#allocation3 + $0x508] sm:$0xf]
        %v2876 = vld [vmem:[#allocation3 + $0x50c] sm:$0xf]
        %v2877 = vld [vmem:[#allocation3 + $0x510] sm:$0xf]
        %v2878 = vld [vmem:[#allocation3 + $0x514] sm:$0xf]
        %v2879 = vld [vmem:[#allocation3 + $0x518] sm:$0xf]
        %v2880 = vld [vmem:[#allocation3 + $0x51c] sm:$0xf]
        %v2881 = vld [vmem:[#allocation3 + $0x520] sm:$0xf]
        %v2882 = vld [vmem:[#allocation3 + $0x524] sm:$0xf]
        %v2883 = vld [vmem:[#allocation3 + $0x528] sm:$0xf]
        %v2884 = vld [vmem:[#allocation3 + $0x52c] sm:$0xf]
        %v2885 = vld [vmem:[#allocation3 + $0x530] sm:$0xf]
        %v2886 = vld [vmem:[#allocation3 + $0x534] sm:$0xf]
        %v2887 = vld [vmem:[#allocation3 + $0x538] sm:$0xf]
        %v2888 = vld [vmem:[#allocation3 + $0x53c] sm:$0xf]
        %v2889 = vld [vmem:[#allocation3 + $0x540] sm:$0xf]
        %v2890 = vld [vmem:[#allocation3 + $0x544] sm:$0xf]
        %v2891 = vld [vmem:[#allocation3 + $0x548] sm:$0xf]
        %v2892 = vld [vmem:[#allocation3 + $0x54c] sm:$0xf]
        %v2893 = vld [vmem:[#allocation3 + $0x550] sm:$0xf]
        %v2894 = vld [vmem:[#allocation3 + $0x554] sm:$0xf]
        %v2895 = vld [vmem:[#allocation3 + $0x558] sm:$0xf]
        %v2896 = vld [vmem:[#allocation3 + $0x55c] sm:$0xf]
        %v2897 = vld [vmem:[#allocation3 + $0x560] sm:$0xf]
        %v2898 = vld [vmem:[#allocation3 + $0x564] sm:$0xf]
        %v2899 = vld [vmem:[#allocation3 + $0x568] sm:$0xf]
        %v2900 = vld [vmem:[#allocation3 + $0x56c] sm:$0xf]
        %v2901 = vld [vmem:[#allocation3 + $0x570] sm:$0xf]
        %v2902 = vld [vmem:[#allocation3 + $0x574] sm:$0xf]
        %v2903 = vld [vmem:[#allocation3 + $0x578] sm:$0xf]
        %v2904 = vld [vmem:[#allocation3 + $0x57c] sm:$0xf]
        %v2905 = vld [vmem:[#allocation3 + $0x580] sm:$0xf]
        %v2906 = vld [vmem:[#allocation3 + $0x584] sm:$0xf]
        %v2907 = vld [vmem:[#allocation3 + $0x588] sm:$0xf]
        %v2908 = vld [vmem:[#allocation3 + $0x58c] sm:$0xf]
        %v2909 = vld [vmem:[#allocation3 + $0x590] sm:$0xf]
        %v2910 = vld [vmem:[#allocation3 + $0x594] sm:$0xf]
        %v2911 = vld [vmem:[#allocation3 + $0x598] sm:$0xf]
        %v2912 = vld [vmem:[#allocation3 + $0x59c] sm:$0xf]
        %v2913 = vld [vmem:[#allocation3 + $0x5a0] sm:$0xf]
        %v2914 = vld [vmem:[#allocation3 + $0x5a4] sm:$0xf]
        %v2915 = vld [vmem:[#allocation3 + $0x5a8] sm:$0xf]
        %v2916 = vld [vmem:[#allocation3 + $0x5ac] sm:$0xf]
        %v2917 = vld [vmem:[#allocation3 + $0x5b0] sm:$0xf]
        %v2918 = vld [vmem:[#allocation3 + $0x5b4] sm:$0xf]
        %v2919 = vld [vmem:[#allocation3 + $0x5b8] sm:$0xf]
        %v2920 = vld [vmem:[#allocation3 + $0x5bc] sm:$0xf]
        %v2921 = vld [vmem:[#allocation3 + $0x5c0] sm:$0xf]
        %v2922 = vld [vmem:[#allocation3 + $0x5c4] sm:$0xf]
        %v2923 = vld [vmem:[#allocation3 + $0x5c8] sm:$0xf]
        %v2924 = vld [vmem:[#allocation3 + $0x5cc] sm:$0xf]
        %v2925 = vld [vmem:[#allocation3 + $0x5d0] sm:$0xf]
        %v2926 = vld [vmem:[#allocation3 + $0x5d4] sm:$0xf]
        %v2927 = vld [vmem:[#allocation3 + $0x5d8] sm:$0xf]
        %v2928 = vld [vmem:[#allocation3 + $0x5dc] sm:$0xf]
        %v2929 = vld [vmem:[#allocation3 + $0x5e0] sm:$0xf]
        %v2930 = vld [vmem:[#allocation3 + $0x5e4] sm:$0xf]
        %v2931 = vld [vmem:[#allocation3 + $0x5e8] sm:$0xf]
        %v2932 = vld [vmem:[#allocation3 + $0x5ec] sm:$0xf]
        %v2933 = vld [vmem:[#allocation3 + $0x5f0] sm:$0xf]
        %v2934 = vld [vmem:[#allocation3 + $0x5f4] sm:$0xf]
        %v2935 = vld [vmem:[#allocation3 + $0x5f8] sm:$0xf]
        %v2936 = vld [vmem:[#allocation3 + $0x5fc] sm:$0xf]
        %v3033 = vunpack.c.l.b16 %v2841
        %v3034 = vunpack.c.l.b16 %v2842
        %v3035 = vunpack.c.l.b16 %v2843
        %v3036 = vunpack.c.l.b16 %v2844
        %v3037 = vunpack.c.l.b16 %v2845
        %v3038 = vunpack.c.l.b16 %v2846
        %v3039 = vunpack.c.l.b16 %v2847
        %v3040 = vunpack.c.l.b16 %v2848
        %v3041 = vunpack.c.l.b16 %v2849
        %v3042 = vunpack.c.l.b16 %v2850
        %v3043 = vunpack.c.l.b16 %v2851
        %v3044 = vunpack.c.l.b16 %v2852
        %v3045 = vunpack.c.l.b16 %v2853
        %v3046 = vunpack.c.l.b16 %v2854
        %v3047 = vunpack.c.l.b16 %v2855
        %v3048 = vunpack.c.l.b16 %v2856
        %v3049 = vunpack.c.l.b16 %v2857
        %v3050 = vunpack.c.l.b16 %v2858
        %v3051 = vunpack.c.l.b16 %v2859
        %v3052 = vunpack.c.l.b16 %v2860
        %v3053 = vunpack.c.l.b16 %v2861
        %v3054 = vunpack.c.l.b16 %v2862
        %v3055 = vunpack.c.l.b16 %v2863
        %v3056 = vunpack.c.l.b16 %v2864
        %v3057 = vunpack.c.l.b16 %v2865
        %v3058 = vunpack.c.l.b16 %v2866
        %v3059 = vunpack.c.l.b16 %v2867
        %v3060 = vunpack.c.l.b16 %v2868
        %v3061 = vunpack.c.l.b16 %v2869
        %v3062 = vunpack.c.l.b16 %v2870
        %v3063 = vunpack.c.l.b16 %v2871
        %v3064 = vunpack.c.l.b16 %v2872
        %v3065 = vunpack.c.l.b16 %v2873
        %v3066 = vunpack.c.l.b16 %v2874
        %v3067 = vunpack.c.l.b16 %v2875
        %v3068 = vunpack.c.l.b16 %v2876
        %v3069 = vunpack.c.l.b16 %v2877
        %v3070 = vunpack.c.l.b16 %v2878
        %v3071 = vunpack.c.l.b16 %v2879
        %v3072 = vunpack.c.l.b16 %v2880
        %v3073 = vunpack.c.l.b16 %v2881
        %v3074 = vunpack.c.l.b16 %v2882
        %v3075 = vunpack.c.l.b16 %v2883
        %v3076 = vunpack.c.l.b16 %v2884
        %v3077 = vunpack.c.l.b16 %v2885
        %v3078 = vunpack.c.l.b16 %v2886
        %v3079 = vunpack.c.l.b16 %v2887
        %v3080 = vunpack.c.l.b16 %v2888
        %v3081 = vunpack.c.l.b16 %v2889
        %v3082 = vunpack.c.l.b16 %v2890
        %v3083 = vunpack.c.l.b16 %v2891
        %v3084 = vunpack.c.l.b16 %v2892
        %v3085 = vunpack.c.l.b16 %v2893
        %v3086 = vunpack.c.l.b16 %v2894
        %v3087 = vunpack.c.l.b16 %v2895
        %v3088 = vunpack.c.l.b16 %v2896
        %v3089 = vunpack.c.l.b16 %v2897
        %v3090 = vunpack.c.l.b16 %v2898
        %v3091 = vunpack.c.l.b16 %v2899
        %v3092 = vunpack.c.l.b16 %v2900
        %v3093 = vunpack.c.l.b16 %v2901
        %v3094 = vunpack.c.l.b16 %v2902
        %v3095 = vunpack.c.l.b16 %v2903
        %v3096 = vunpack.c.l.b16 %v2904
        %v3097 = vunpack.c.l.b16 %v2905
        %v3098 = vunpack.c.l.b16 %v2906
        %v3099 = vunpack.c.l.b16 %v2907
        %v3100 = vunpack.c.l.b16 %v2908
        %v3101 = vunpack.c.l.b16 %v2909
        %v3102 = vunpack.c.l.b16 %v2910
        %v3103 = vunpack.c.l.b16 %v2911
        %v3104 = vunpack.c.l.b16 %v2912
        %v3105 = vunpack.c.l.b16 %v2913
        %v3106 = vunpack.c.l.b16 %v2914
        %v3107 = vunpack.c.l.b16 %v2915
        %v3108 = vunpack.c.l.b16 %v2916
        %v3109 = vunpack.c.l.b16 %v2917
        %v3110 = vunpack.c.l.b16 %v2918
        %v3111 = vunpack.c.l.b16 %v2919
        %v3112 = vunpack.c.l.b16 %v2920
        %v3113 = vunpack.c.l.b16 %v2921
        %v3114 = vunpack.c.l.b16 %v2922
        %v3115 = vunpack.c.l.b16 %v2923
        %v3116 = vunpack.c.l.b16 %v2924
        %v3117 = vunpack.c.l.b16 %v2925
        %v3118 = vunpack.c.l.b16 %v2926
        %v3119 = vunpack.c.l.b16 %v2927
        %v3120 = vunpack.c.l.b16 %v2928
        %v3121 = vunpack.c.l.b16 %v2929
        %v3122 = vunpack.c.l.b16 %v2930
        %v3123 = vunpack.c.l.b16 %v2931
        %v3124 = vunpack.c.l.b16 %v2932
        %v3125 = vunpack.c.l.b16 %v2933
        %v3126 = vunpack.c.l.b16 %v2934
        %v3127 = vunpack.c.l.b16 %v2935
        %v3128 = vunpack.c.l.b16 %v2936
        %v3129 = vpack.c.b16 %v3034, %v3033
        %v3130 = vpack.c.b16 %v3036, %v3035
        %v3131 = vpack.c.b16 %v3038, %v3037
        %v3132 = vpack.c.b16 %v3040, %v3039
        %v3133 = vpack.c.b16 %v3042, %v3041
        %v3134 = vpack.c.b16 %v3044, %v3043
        %v3135 = vpack.c.b16 %v3046, %v3045
        %v3136 = vpack.c.b16 %v3048, %v3047
        %v3137 = vpack.c.b16 %v3050, %v3049
        %v3138 = vpack.c.b16 %v3052, %v3051
        %v3139 = vpack.c.b16 %v3054, %v3053
        %v3140 = vpack.c.b16 %v3056, %v3055
        %v3141 = vpack.c.b16 %v3058, %v3057
        %v3142 = vpack.c.b16 %v3060, %v3059
        %v3143 = vpack.c.b16 %v3062, %v3061
        %v3144 = vpack.c.b16 %v3064, %v3063
        %v3145 = vpack.c.b16 %v3066, %v3065
        %v3146 = vpack.c.b16 %v3068, %v3067
        %v3147 = vpack.c.b16 %v3070, %v3069
        %v3148 = vpack.c.b16 %v3072, %v3071
        %v3149 = vpack.c.b16 %v3074, %v3073
        %v3150 = vpack.c.b16 %v3076, %v3075
        %v3151 = vpack.c.b16 %v3078, %v3077
        %v3152 = vpack.c.b16 %v3080, %v3079
        %v3153 = vpack.c.b16 %v3082, %v3081
        %v3154 = vpack.c.b16 %v3084, %v3083
        %v3155 = vpack.c.b16 %v3086, %v3085
        %v3156 = vpack.c.b16 %v3088, %v3087
        %v3157 = vpack.c.b16 %v3090, %v3089
        %v3158 = vpack.c.b16 %v3092, %v3091
        %v3159 = vpack.c.b16 %v3094, %v3093
        %v3160 = vpack.c.b16 %v3096, %v3095
        %v3161 = vpack.c.b16 %v3098, %v3097
        %v3162 = vpack.c.b16 %v3100, %v3099
        %v3163 = vpack.c.b16 %v3102, %v3101
        %v3164 = vpack.c.b16 %v3104, %v3103
        %v3165 = vpack.c.b16 %v3106, %v3105
        %v3166 = vpack.c.b16 %v3108, %v3107
        %v3167 = vpack.c.b16 %v3110, %v3109
        %v3168 = vpack.c.b16 %v3112, %v3111
        %v3169 = vpack.c.b16 %v3114, %v3113
        %v3170 = vpack.c.b16 %v3116, %v3115
        %v3171 = vpack.c.b16 %v3118, %v3117
        %v3172 = vpack.c.b16 %v3120, %v3119
        %v3173 = vpack.c.b16 %v3122, %v3121
        %v3174 = vpack.c.b16 %v3124, %v3123
        %v3175 = vpack.c.b16 %v3126, %v3125
        %v3176 = vpack.c.b16 %v3128, %v3127
        %3225 = vmatprep.subr.bf16.mxu0 0
        %3226 = vmatpush1.bf16.msra.mxu0 %v3129
        %3227 = vmatprep.subr.bf16.mxu0 0
        %3228 = vmatpush1.bf16.msra.mxu0 %v3130
        %3229 = vmatprep.subr.bf16.mxu0 0
        %3230 = vmatpush1.bf16.msra.mxu0 %v3131
        %3231 = vmatprep.subr.bf16.mxu0 0
        %3232 = vmatpush1.bf16.msra.mxu0 %v3132
        %3233 = vmatprep.subr.bf16.mxu0 0
        %3234 = vmatpush1.bf16.msra.mxu0 %v3133
        %3235 = vmatprep.subr.bf16.mxu0 0
        %3236 = vmatpush1.bf16.msra.mxu0 %v3134
        %3237 = vmatprep.subr.bf16.mxu0 0
        %3238 = vmatpush1.bf16.msra.mxu0 %v3135
        %3239 = vmatprep.subr.bf16.mxu0 0
        %3240 = vmatpush1.bf16.msra.mxu0 %v3136
        %3241 = vmatprep.subr.bf16.mxu0 0
        %3242 = vmatpush1.bf16.msra.mxu0 %v3137
        %3243 = vmatprep.subr.bf16.mxu0 0
        %3244 = vmatpush1.bf16.msra.mxu0 %v3138
        %3245 = vmatprep.subr.bf16.mxu0 0
        %3246 = vmatpush1.bf16.msra.mxu0 %v3139
        %3247 = vmatprep.subr.bf16.mxu0 0
        %3248 = vmatpush1.bf16.msra.mxu0 %v3140
        %3249 = vmatprep.subr.bf16.mxu0 0
        %3250 = vmatpush1.bf16.msra.mxu0 %v3141
        %3251 = vmatprep.subr.bf16.mxu0 0
        %3252 = vmatpush1.bf16.msra.mxu0 %v3142
        %3253 = vmatprep.subr.bf16.mxu0 0
        %3254 = vmatpush1.bf16.msra.mxu0 %v3143
        %3255 = vmatprep.subr.bf16.mxu0 0
        %3256 = vmatpush1.bf16.msra.mxu0 %v3144
        %3257 = vmatprep.mubr.bf16.mxu0 %v2836
        %3258 = vmatmul.mubr.bf16.gmra.mrb[0].mxu0 %v2835
        %v3259 = vpop.f32.mrb[0].mxu0
        %v3260 = vadd.f32 0.0, %v3259
        %v3261 = vpop.f32.mrb[0].mxu0
        %v3262 = vpop.f32.mrb[0].mxu0
        %v3263 = vadd.f32 0.0, %v3262
        %v3264 = vpop.f32.mrb[0].mxu0
        %3265 = vdwg.mxu0
        %3266 = vmatprep.subr.bf16.mxu0 0
        %3267 = vmatpush1.bf16.msra.mxu0 %v3145
        %3268 = vmatprep.subr.bf16.mxu0 0
        %3269 = vmatpush1.bf16.msra.mxu0 %v3146
        %3270 = vmatprep.subr.bf16.mxu0 0
        %3271 = vmatpush1.bf16.msra.mxu0 %v3147
        %3272 = vmatprep.subr.bf16.mxu0 0
        %3273 = vmatpush1.bf16.msra.mxu0 %v3148
        %3274 = vmatprep.subr.bf16.mxu0 0
        %3275 = vmatpush1.bf16.msra.mxu0 %v3149
        %3276 = vmatprep.subr.bf16.mxu0 0
        %3277 = vmatpush1.bf16.msra.mxu0 %v3150
        %3278 = vmatprep.subr.bf16.mxu0 0
        %3279 = vmatpush1.bf16.msra.mxu0 %v3151
        %3280 = vmatprep.subr.bf16.mxu0 0
        %3281 = vmatpush1.bf16.msra.mxu0 %v3152
        %3282 = vmatprep.subr.bf16.mxu0 0
        %3283 = vmatpush1.bf16.msra.mxu0 %v3153
        %3284 = vmatprep.subr.bf16.mxu0 0
        %3285 = vmatpush1.bf16.msra.mxu0 %v3154
        %3286 = vmatprep.subr.bf16.mxu0 0
        %3287 = vmatpush1.bf16.msra.mxu0 %v3155
        %3288 = vmatprep.subr.bf16.mxu0 0
        %3289 = vmatpush1.bf16.msra.mxu0 %v3156
        %3290 = vmatprep.subr.bf16.mxu0 0
        %3291 = vmatpush1.bf16.msra.mxu0 %v3157
        %3292 = vmatprep.subr.bf16.mxu0 0
        %3293 = vmatpush1.bf16.msra.mxu0 %v3158
        %3294 = vmatprep.subr.bf16.mxu0 0
        %3295 = vmatpush1.bf16.msra.mxu0 %v3159
        %3296 = vmatprep.subr.bf16.mxu0 0
        %3297 = vmatpush1.bf16.msra.mxu0 %v3160
        %3298 = vmatprep.mubr.bf16.mxu0 %v2838
        %3299 = vmatmul.mubr.bf16.gmra.mrb[0].mxu0 %v2837
        %v3300 = vpop.f32.mrb[0].mxu0
        %v3301 = vadd.f32 %v3260, %v3300
        %v3302 = vpop.f32.mrb[0].mxu0
        %v3303 = vpop.f32.mrb[0].mxu0
        %v3304 = vadd.f32 %v3263, %v3303
        %v3305 = vpop.f32.mrb[0].mxu0
        %3306 = vdwg.mxu0
        %3307 = vmatprep.subr.bf16.mxu0 0
        %3308 = vmatpush1.bf16.msra.mxu0 %v3161
        %3309 = vmatprep.subr.bf16.mxu0 0
        %3310 = vmatpush1.bf16.msra.mxu0 %v3162
        %3311 = vmatprep.subr.bf16.mxu0 0
        %3312 = vmatpush1.bf16.msra.mxu0 %v3163
        %3313 = vmatprep.subr.bf16.mxu0 0
        %3314 = vmatpush1.bf16.msra.mxu0 %v3164
        %3315 = vmatprep.subr.bf16.mxu0 0
        %3316 = vmatpush1.bf16.msra.mxu0 %v3165
        %3317 = vmatprep.subr.bf16.mxu0 0
        %3318 = vmatpush1.bf16.msra.mxu0 %v3166
        %3319 = vmatprep.subr.bf16.mxu0 0
        %3320 = vmatpush1.bf16.msra.mxu0 %v3167
        %3321 = vmatprep.subr.bf16.mxu0 0
        %3322 = vmatpush1.bf16.msra.mxu0 %v3168
        %3323 = vmatprep.subr.bf16.mxu0 0
        %3324 = vmatpush1.bf16.msra.mxu0 %v3169
        %3325 = vmatprep.subr.bf16.mxu0 0
        %3326 = vmatpush1.bf16.msra.mxu0 %v3170
        %3327 = vmatprep.subr.bf16.mxu0 0
        %3328 = vmatpush1.bf16.msra.mxu0 %v3171
        %3329 = vmatprep.subr.bf16.mxu0 0
        %3330 = vmatpush1.bf16.msra.mxu0 %v3172
        %3331 = vmatprep.subr.bf16.mxu0 0
        %3332 = vmatpush1.bf16.msra.mxu0 %v3173
        %3333 = vmatprep.subr.bf16.mxu0 0
        %3334 = vmatpush1.bf16.msra.mxu0 %v3174
        %3335 = vmatprep.subr.bf16.mxu0 0
        %3336 = vmatpush1.bf16.msra.mxu0 %v3175
        %3337 = vmatprep.subr.bf16.mxu0 0
        %3338 = vmatpush1.bf16.msra.mxu0 %v3176
        %3339 = vmatprep.mubr.bf16.mxu0 %v2840
        %3340 = vmatmul.mubr.bf16.gmra.mrb[0].mxu0 %v2839
        %v3341 = vpop.f32.mrb[0].mxu0
        %v3342 = vadd.f32 %v3301, %v3341
        %v3343 = vpop.f32.mrb[0].mxu0
        %v3344 = vpop.f32.mrb[0].mxu0
        %v3345 = vadd.f32 %v3304, %v3344
        %v3346 = vpop.f32.mrb[0].mxu0
        %3347 = vdwg.mxu0
        %v3348 = vadd.f32 %v2833, %v3342
        %v3349 = vadd.f32 %v2834, %v3345
        %3350 = vst [vmem:[%s179] sm:$0xff] %v3348
        %3351 = vst [vmem:[%s179 + $0x8] sm:$0xff] %v3349
        %v3352 = vld [vmem:[%s184] sm:$0xf]
        %v3353 = vld [vmem:[%s184 + $0x4] sm:$0xf]
        %v3354 = vld [vmem:[%s1 + $0x60] sm:$0xff]
        %v3355 = vld [vmem:[%s1 + $0x68] sm:$0xff]
        %v3356 = vld [vmem:[%s1 + $0x70] sm:$0xff]
        %v3357 = vld [vmem:[%s1 + $0xd8] sm:$0xff]
        %v3358 = vld [vmem:[%s1 + $0xe0] sm:$0xff]
        %v3359 = vld [vmem:[%s1 + $0xe8] sm:$0xff]
        %v3360 = vld [vmem:[%s1 + $0x150] sm:$0xff]
        %v3361 = vld [vmem:[%s1 + $0x158] sm:$0xff]
        %v3362 = vld [vmem:[%s1 + $0x160] sm:$0xff]
        %v3363 = vld [vmem:[%s1 + $0x1c8] sm:$0xff]
        %v3364 = vld [vmem:[%s1 + $0x1d0] sm:$0xff]
        %v3365 = vld [vmem:[%s1 + $0x1d8] sm:$0xff]
        %v3366 = vld [vmem:[%s1 + $0x240] sm:$0xff]
        %v3367 = vld [vmem:[%s1 + $0x248] sm:$0xff]
        %v3368 = vld [vmem:[%s1 + $0x250] sm:$0xff]
        %v3369 = vld [vmem:[%s1 + $0x2b8] sm:$0xff]
        %v3370 = vld [vmem:[%s1 + $0x2c0] sm:$0xff]
        %v3371 = vld [vmem:[%s1 + $0x2c8] sm:$0xff]
        %v3374 = vunpack.c.l.b16 %v3352
        %v3375 = vunpack.c.l.b16 %v3353
        %v3376 = vpack.c.b16 %v3375, %v3374
        %v3395 = vunpack.c.l.b16 %v3354
        %v3396 = vunpack.c.h.b16 %v3354
        %v3397 = vunpack.c.l.b16 %v3355
        %v3398 = vunpack.c.h.b16 %v3355
        %v3399 = vunpack.c.l.b16 %v3356
        %v3400 = vunpack.c.h.b16 %v3356
        %v3401 = vunpack.c.l.b16 %v3357
        %v3402 = vunpack.c.h.b16 %v3357
        %v3403 = vunpack.c.l.b16 %v3358
        %v3404 = vunpack.c.h.b16 %v3358
        %v3405 = vunpack.c.l.b16 %v3359
        %v3406 = vunpack.c.h.b16 %v3359
        %v3407 = vunpack.c.l.b16 %v3360
        %v3408 = vunpack.c.h.b16 %v3360
        %v3409 = vunpack.c.l.b16 %v3361
        %v3410 = vunpack.c.h.b16 %v3361
        %v3411 = vunpack.c.l.b16 %v3362
        %v3412 = vunpack.c.h.b16 %v3362
        %v3413 = vunpack.c.l.b16 %v3363
        %v3414 = vunpack.c.h.b16 %v3363
        %v3415 = vunpack.c.l.b16 %v3364
        %v3416 = vunpack.c.h.b16 %v3364
        %v3417 = vunpack.c.l.b16 %v3365
        %v3418 = vunpack.c.h.b16 %v3365
        %v3419 = vunpack.c.l.b16 %v3366
        %v3420 = vunpack.c.h.b16 %v3366
        %v3421 = vunpack.c.l.b16 %v3367
        %v3422 = vunpack.c.h.b16 %v3367
        %v3423 = vunpack.c.l.b16 %v3368
        %v3424 = vunpack.c.h.b16 %v3368
        %v3425 = vunpack.c.l.b16 %v3369
        %v3426 = vunpack.c.h.b16 %v3369
        %v3427 = vunpack.c.l.b16 %v3370
        %v3428 = vunpack.c.h.b16 %v3370
        %v3429 = vunpack.c.l.b16 %v3371
        %v3430 = vunpack.c.h.b16 %v3371
        %v3431 = vpack.c.b16 %v3401, %v3395
        %v3432 = vpack.c.b16 %v3402, %v3396
        %v3433 = vpack.c.b16 %v3403, %v3397
        %v3434 = vpack.c.b16 %v3404, %v3398
        %v3435 = vpack.c.b16 %v3405, %v3399
        %v3436 = vpack.c.b16 %v3406, %v3400
        %v3437 = vpack.c.b16 %v3413, %v3407
        %v3438 = vpack.c.b16 %v3414, %v3408
        %v3439 = vpack.c.b16 %v3415, %v3409
        %v3440 = vpack.c.b16 %v3416, %v3410
        %v3441 = vpack.c.b16 %v3417, %v3411
        %v3442 = vpack.c.b16 %v3418, %v3412
        %v3443 = vpack.c.b16 %v3425, %v3419
        %v3444 = vpack.c.b16 %v3426, %v3420
        %v3445 = vpack.c.b16 %v3427, %v3421
        %v3446 = vpack.c.b16 %v3428, %v3422
        %v3447 = vpack.c.b16 %v3429, %v3423
        %v3448 = vpack.c.b16 %v3430, %v3424
        %v3468 = vsel %vm305, %v3376, 0
        %3470 = vmatprep.subr.bf16.mxu0 %v3432
        %3471 = vmatpush1.bf16.msra.mxu0 %v3431
        %3472 = vmatprep.subr.bf16.mxu0 %v3438
        %3473 = vmatpush1.bf16.msra.mxu0 %v3437
        %3474 = vmatprep.subr.bf16.mxu0 %v3444
        %3475 = vmatpush1.bf16.msra.mxu0 %v3443
        %3476 = vmatprep.subr.bf16.mxu0 0
        %3477 = vmatpush1.bf16.msra.mxu0 0
        %3478 = vmatprep.subr.bf16.mxu0 0
        %3479 = vmatpush1.bf16.msra.mxu0 0
        %3480 = vmatprep.subr.bf16.mxu0 0
        %3481 = vmatpush1.bf16.msra.mxu0 0
        %3482 = vmatprep.subr.bf16.mxu0 0
        %3483 = vmatpush1.bf16.msra.mxu0 0
        %3484 = vmatprep.subr.bf16.mxu0 0
        %3485 = vmatpush1.bf16.msra.mxu0 0
        %3486 = vmatprep.subr.bf16.mxu0 0
        %3487 = vmatpush1.bf16.msra.mxu0 0
        %3488 = vmatprep.subr.bf16.mxu0 0
        %3489 = vmatpush1.bf16.msra.mxu0 0
        %3490 = vmatprep.subr.bf16.mxu0 0
        %3491 = vmatpush1.bf16.msra.mxu0 0
        %3492 = vmatprep.subr.bf16.mxu0 0
        %3493 = vmatpush1.bf16.msra.mxu0 0
        %3494 = vmatprep.subr.bf16.mxu0 0
        %3495 = vmatpush1.bf16.msra.mxu0 0
        %3496 = vmatprep.subr.bf16.mxu0 0
        %3497 = vmatpush1.bf16.msra.mxu0 0
        %3498 = vmatprep.subr.bf16.mxu0 0
        %3499 = vmatpush1.bf16.msra.mxu0 0
        %3500 = vmatprep.subr.bf16.mxu0 0
        %3501 = vmatpush1.bf16.msra.mxu0 0
        %3502 = vmatprep.mubr.bf16.mxu0 0
        %3503 = vmatmul.mubr.bf16.gmra.mrb[0].mxu0 %v3468
        %v3504 = vpop.f32.mrb[0].mxu0
        %v3505 = vadd.f32 0.0, %v3504
        %v3506 = vpop.f32.mrb[0].mxu0
        %v3507 = vadd.f32 0.0, %v3506
        %v3508 = vpop.f32.mrb[0].mxu0
        %v3509 = vadd.f32 0.0, %v3508
        %v3510 = vpop.f32.mrb[0].mxu0
        %v3511 = vadd.f32 0.0, %v3510
        %3512 = vdwg.mxu0
        %3513 = vmatprep.subr.bf16.mxu0 %v3434
        %3514 = vmatpush1.bf16.msra.mxu0 %v3433
        %3515 = vmatprep.subr.bf16.mxu0 %v3440
        %3516 = vmatpush1.bf16.msra.mxu0 %v3439
        %3517 = vmatprep.subr.bf16.mxu0 %v3446
        %3518 = vmatpush1.bf16.msra.mxu0 %v3445
        %3519 = vmatprep.subr.bf16.mxu0 0
        %3520 = vmatpush1.bf16.msra.mxu0 0
        %3521 = vmatprep.subr.bf16.mxu0 0
        %3522 = vmatpush1.bf16.msra.mxu0 0
        %3523 = vmatprep.subr.bf16.mxu0 0
        %3524 = vmatpush1.bf16.msra.mxu0 0
        %3525 = vmatprep.subr.bf16.mxu0 0
        %3526 = vmatpush1.bf16.msra.mxu0 0
        %3527 = vmatprep.subr.bf16.mxu0 0
        %3528 = vmatpush1.bf16.msra.mxu0 0
        %3529 = vmatprep.subr.bf16.mxu0 0
        %3530 = vmatpush1.bf16.msra.mxu0 0
        %3531 = vmatprep.subr.bf16.mxu0 0
        %3532 = vmatpush1.bf16.msra.mxu0 0
        %3533 = vmatprep.subr.bf16.mxu0 0
        %3534 = vmatpush1.bf16.msra.mxu0 0
        %3535 = vmatprep.subr.bf16.mxu0 0
        %3536 = vmatpush1.bf16.msra.mxu0 0
        %3537 = vmatprep.subr.bf16.mxu0 0
        %3538 = vmatpush1.bf16.msra.mxu0 0
        %3539 = vmatprep.subr.bf16.mxu0 0
        %3540 = vmatpush1.bf16.msra.mxu0 0
        %3541 = vmatprep.subr.bf16.mxu0 0
        %3542 = vmatpush1.bf16.msra.mxu0 0
        %3543 = vmatprep.subr.bf16.mxu0 0
        %3544 = vmatpush1.bf16.msra.mxu0 0
        %3545 = vmatprep.mubr.bf16.mxu0 0
        %3546 = vmatmul.mubr.bf16.gmra.mrb[0].mxu0 %v3468
        %v3547 = vpop.f32.mrb[0].mxu0
        %v3548 = vadd.f32 0.0, %v3547
        %v3549 = vpop.f32.mrb[0].mxu0
        %v3550 = vadd.f32 0.0, %v3549
        %v3551 = vpop.f32.mrb[0].mxu0
        %v3552 = vadd.f32 0.0, %v3551
        %v3553 = vpop.f32.mrb[0].mxu0
        %v3554 = vadd.f32 0.0, %v3553
        %3555 = vdwg.mxu0
        %3556 = vmatprep.subr.bf16.mxu0 %v3436
        %3557 = vmatpush1.bf16.msra.mxu0 %v3435
        %3558 = vmatprep.subr.bf16.mxu0 %v3442
        %3559 = vmatpush1.bf16.msra.mxu0 %v3441
        %3560 = vmatprep.subr.bf16.mxu0 %v3448
        %3561 = vmatpush1.bf16.msra.mxu0 %v3447
        %3562 = vmatprep.subr.bf16.mxu0 0
        %3563 = vmatpush1.bf16.msra.mxu0 0
        %3564 = vmatprep.subr.bf16.mxu0 0
        %3565 = vmatpush1.bf16.msra.mxu0 0
        %3566 = vmatprep.subr.bf16.mxu0 0
        %3567 = vmatpush1.bf16.msra.mxu0 0
        %3568 = vmatprep.subr.bf16.mxu0 0
        %3569 = vmatpush1.bf16.msra.mxu0 0
        %3570 = vmatprep.subr.bf16.mxu0 0
        %3571 = vmatpush1.bf16.msra.mxu0 0
        %3572 = vmatprep.subr.bf16.mxu0 0
        %3573 = vmatpush1.bf16.msra.mxu0 0
        %3574 = vmatprep.subr.bf16.mxu0 0
        %3575 = vmatpush1.bf16.msra.mxu0 0
        %3576 = vmatprep.subr.bf16.mxu0 0
        %3577 = vmatpush1.bf16.msra.mxu0 0
        %3578 = vmatprep.subr.bf16.mxu0 0
        %3579 = vmatpush1.bf16.msra.mxu0 0
        %3580 = vmatprep.subr.bf16.mxu0 0
        %3581 = vmatpush1.bf16.msra.mxu0 0
        %3582 = vmatprep.subr.bf16.mxu0 0
        %3583 = vmatpush1.bf16.msra.mxu0 0
        %3584 = vmatprep.subr.bf16.mxu0 0
        %3585 = vmatpush1.bf16.msra.mxu0 0
        %3586 = vmatprep.subr.bf16.mxu0 0
        %3587 = vmatpush1.bf16.msra.mxu0 0
        %3588 = vmatprep.mubr.bf16.mxu0 0
        %3589 = vmatmul.mubr.bf16.gmra.mrb[0].mxu0 %v3468
        %v3590 = vpop.f32.mrb[0].mxu0
        %v3591 = vadd.f32 0.0, %v3590
        %v3592 = vpop.f32.mrb[0].mxu0
        %v3593 = vadd.f32 0.0, %v3592
        %v3594 = vpop.f32.mrb[0].mxu0
        %v3595 = vadd.f32 0.0, %v3594
        %v3596 = vpop.f32.mrb[0].mxu0
        %v3597 = vadd.f32 0.0, %v3596
        %3598 = vdwg.mxu0
        %v3599 = vmax.f32 %v3505, 0.0
        %v3600 = vmax.f32 %v3507, 0.0
        %v3601 = vmax.f32 %v3548, 0.0
        %v3602 = vmax.f32 %v3550, 0.0
        %v3603 = vmax.f32 %v3591, 0.0
        %v3604 = vmax.f32 %v3593, 0.0
        %v3605 = vmax.f32 %v3509, 0.0
        %v3606 = vmax.f32 %v3511, 0.0
        %v3607 = vmax.f32 %v3552, 0.0
        %v3608 = vmax.f32 %v3554, 0.0
        %v3609 = vmax.f32 %v3595, 0.0
        %v3610 = vmax.f32 %v3597, 0.0
        %v3611 = vpack.c.bf16 %v3605, %v3599
        %v3612 = vpack.c.bf16 %v3606, %v3600
        %v3613 = vpack.c.bf16 %v3607, %v3601
        %v3614 = vpack.c.bf16 %v3608, %v3602
        %v3615 = vpack.c.bf16 %v3609, %v3603
        %v3616 = vpack.c.bf16 %v3610, %v3604
        %3617 = vst [vmem:[#allocation2] sm:$0xff] %v3611
        %3618 = vst [vmem:[#allocation2 + $0x8] sm:$0xff] %v3612
        %3619 = vst [vmem:[#allocation2 + $0x10] sm:$0xff] %v3613
        %3620 = vst [vmem:[#allocation2 + $0x18] sm:$0xff] %v3614
        %3621 = vst [vmem:[#allocation2 + $0x20] sm:$0xff] %v3615
        %3622 = vst [vmem:[#allocation2 + $0x28] sm:$0xff] %v3616
        %v3623 = vld [vmem:[%s179] sm:$0xff]
        %v3624 = vld [vmem:[%s179 + $0x8] sm:$0xff]
        %v3625 = vld [vmem:[#allocation2] sm:$0xff]
        %v3626 = vld [vmem:[#allocation2 + $0x8] sm:$0xff]
        %v3627 = vld [vmem:[#allocation2 + $0x10] sm:$0xff]
        %v3628 = vld [vmem:[#allocation2 + $0x18] sm:$0xff]
        %v3629 = vld [vmem:[#allocation2 + $0x20] sm:$0xff]
        %v3630 = vld [vmem:[#allocation2 + $0x28] sm:$0xff]
        %v3631 = vld [vmem:[#allocation3 + $0x600] sm:$0xf]
        %v3632 = vld [vmem:[#allocation3 + $0x604] sm:$0xf]
        %v3633 = vld [vmem:[#allocation3 + $0x608] sm:$0xf]
        %v3634 = vld [vmem:[#allocation3 + $0x60c] sm:$0xf]
        %v3635 = vld [vmem:[#allocation3 + $0x610] sm:$0xf]
        %v3636 = vld [vmem:[#allocation3 + $0x614] sm:$0xf]
        %v3637 = vld [vmem:[#allocation3 + $0x618] sm:$0xf]
        %v3638 = vld [vmem:[#allocation3 + $0x61c] sm:$0xf]
        %v3639 = vld [vmem:[#allocation3 + $0x620] sm:$0xf]
        %v3640 = vld [vmem:[#allocation3 + $0x624] sm:$0xf]
        %v3641 = vld [vmem:[#allocation3 + $0x628] sm:$0xf]
        %v3642 = vld [vmem:[#allocation3 + $0x62c] sm:$0xf]
        %v3643 = vld [vmem:[#allocation3 + $0x630] sm:$0xf]
        %v3644 = vld [vmem:[#allocation3 + $0x634] sm:$0xf]
        %v3645 = vld [vmem:[#allocation3 + $0x638] sm:$0xf]
        %v3646 = vld [vmem:[#allocation3 + $0x63c] sm:$0xf]
        %v3647 = vld [vmem:[#allocation3 + $0x640] sm:$0xf]
        %v3648 = vld [vmem:[#allocation3 + $0x644] sm:$0xf]
        %v3649 = vld [vmem:[#allocation3 + $0x648] sm:$0xf]
        %v3650 = vld [vmem:[#allocation3 + $0x64c] sm:$0xf]
        %v3651 = vld [vmem:[#allocation3 + $0x650] sm:$0xf]
        %v3652 = vld [vmem:[#allocation3 + $0x654] sm:$0xf]
        %v3653 = vld [vmem:[#allocation3 + $0x658] sm:$0xf]
        %v3654 = vld [vmem:[#allocation3 + $0x65c] sm:$0xf]
        %v3655 = vld [vmem:[#allocation3 + $0x660] sm:$0xf]
        %v3656 = vld [vmem:[#allocation3 + $0x664] sm:$0xf]
        %v3657 = vld [vmem:[#allocation3 + $0x668] sm:$0xf]
        %v3658 = vld [vmem:[#allocation3 + $0x66c] sm:$0xf]
        %v3659 = vld [vmem:[#allocation3 + $0x670] sm:$0xf]
        %v3660 = vld [vmem:[#allocation3 + $0x674] sm:$0xf]
        %v3661 = vld [vmem:[#allocation3 + $0x678] sm:$0xf]
        %v3662 = vld [vmem:[#allocation3 + $0x67c] sm:$0xf]
        %v3663 = vld [vmem:[#allocation3 + $0x680] sm:$0xf]
        %v3664 = vld [vmem:[#allocation3 + $0x684] sm:$0xf]
        %v3665 = vld [vmem:[#allocation3 + $0x688] sm:$0xf]
        %v3666 = vld [vmem:[#allocation3 + $0x68c] sm:$0xf]
        %v3667 = vld [vmem:[#allocation3 + $0x690] sm:$0xf]
        %v3668 = vld [vmem:[#allocation3 + $0x694] sm:$0xf]
        %v3669 = vld [vmem:[#allocation3 + $0x698] sm:$0xf]
        %v3670 = vld [vmem:[#allocation3 + $0x69c] sm:$0xf]
        %v3671 = vld [vmem:[#allocation3 + $0x6a0] sm:$0xf]
        %v3672 = vld [vmem:[#allocation3 + $0x6a4] sm:$0xf]
        %v3673 = vld [vmem:[#allocation3 + $0x6a8] sm:$0xf]
        %v3674 = vld [vmem:[#allocation3 + $0x6ac] sm:$0xf]
        %v3675 = vld [vmem:[#allocation3 + $0x6b0] sm:$0xf]
        %v3676 = vld [vmem:[#allocation3 + $0x6b4] sm:$0xf]
        %v3677 = vld [vmem:[#allocation3 + $0x6b8] sm:$0xf]
        %v3678 = vld [vmem:[#allocation3 + $0x6bc] sm:$0xf]
        %v3679 = vld [vmem:[#allocation3 + $0x6c0] sm:$0xf]
        %v3680 = vld [vmem:[#allocation3 + $0x6c4] sm:$0xf]
        %v3681 = vld [vmem:[#allocation3 + $0x6c8] sm:$0xf]
        %v3682 = vld [vmem:[#allocation3 + $0x6cc] sm:$0xf]
        %v3683 = vld [vmem:[#allocation3 + $0x6d0] sm:$0xf]
        %v3684 = vld [vmem:[#allocation3 + $0x6d4] sm:$0xf]
        %v3685 = vld [vmem:[#allocation3 + $0x6d8] sm:$0xf]
        %v3686 = vld [vmem:[#allocation3 + $0x6dc] sm:$0xf]
        %v3687 = vld [vmem:[#allocation3 + $0x6e0] sm:$0xf]
        %v3688 = vld [vmem:[#allocation3 + $0x6e4] sm:$0xf]
        %v3689 = vld [vmem:[#allocation3 + $0x6e8] sm:$0xf]
        %v3690 = vld [vmem:[#allocation3 + $0x6ec] sm:$0xf]
        %v3691 = vld [vmem:[#allocation3 + $0x6f0] sm:$0xf]
        %v3692 = vld [vmem:[#allocation3 + $0x6f4] sm:$0xf]
        %v3693 = vld [vmem:[#allocation3 + $0x6f8] sm:$0xf]
        %v3694 = vld [vmem:[#allocation3 + $0x6fc] sm:$0xf]
        %v3695 = vld [vmem:[#allocation3 + $0x700] sm:$0xf]
        %v3696 = vld [vmem:[#allocation3 + $0x704] sm:$0xf]
        %v3697 = vld [vmem:[#allocation3 + $0x708] sm:$0xf]
        %v3698 = vld [vmem:[#allocation3 + $0x70c] sm:$0xf]
        %v3699 = vld [vmem:[#allocation3 + $0x710] sm:$0xf]
        %v3700 = vld [vmem:[#allocation3 + $0x714] sm:$0xf]
        %v3701 = vld [vmem:[#allocation3 + $0x718] sm:$0xf]
        %v3702 = vld [vmem:[#allocation3 + $0x71c] sm:$0xf]
        %v3703 = vld [vmem:[#allocation3 + $0x720] sm:$0xf]
        %v3704 = vld [vmem:[#allocation3 + $0x724] sm:$0xf]
        %v3705 = vld [vmem:[#allocation3 + $0x728] sm:$0xf]
        %v3706 = vld [vmem:[#allocation3 + $0x72c] sm:$0xf]
        %v3707 = vld [vmem:[#allocation3 + $0x730] sm:$0xf]
        %v3708 = vld [vmem:[#allocation3 + $0x734] sm:$0xf]
        %v3709 = vld [vmem:[#allocation3 + $0x738] sm:$0xf]
        %v3710 = vld [vmem:[#allocation3 + $0x73c] sm:$0xf]
        %v3711 = vld [vmem:[#allocation3 + $0x740] sm:$0xf]
        %v3712 = vld [vmem:[#allocation3 + $0x744] sm:$0xf]
        %v3713 = vld [vmem:[#allocation3 + $0x748] sm:$0xf]
        %v3714 = vld [vmem:[#allocation3 + $0x74c] sm:$0xf]
        %v3715 = vld [vmem:[#allocation3 + $0x750] sm:$0xf]
        %v3716 = vld [vmem:[#allocation3 + $0x754] sm:$0xf]
        %v3717 = vld [vmem:[#allocation3 + $0x758] sm:$0xf]
        %v3718 = vld [vmem:[#allocation3 + $0x75c] sm:$0xf]
        %v3719 = vld [vmem:[#allocation3 + $0x760] sm:$0xf]
        %v3720 = vld [vmem:[#allocation3 + $0x764] sm:$0xf]
        %v3721 = vld [vmem:[#allocation3 + $0x768] sm:$0xf]
        %v3722 = vld [vmem:[#allocation3 + $0x76c] sm:$0xf]
        %v3723 = vld [vmem:[#allocation3 + $0x770] sm:$0xf]
        %v3724 = vld [vmem:[#allocation3 + $0x774] sm:$0xf]
        %v3725 = vld [vmem:[#allocation3 + $0x778] sm:$0xf]
        %v3726 = vld [vmem:[#allocation3 + $0x77c] sm:$0xf]
        %v3823 = vunpack.c.l.b16 %v3631
        %v3824 = vunpack.c.l.b16 %v3632
        %v3825 = vunpack.c.l.b16 %v3633
        %v3826 = vunpack.c.l.b16 %v3634
        %v3827 = vunpack.c.l.b16 %v3635
        %v3828 = vunpack.c.l.b16 %v3636
        %v3829 = vunpack.c.l.b16 %v3637
        %v3830 = vunpack.c.l.b16 %v3638
        %v3831 = vunpack.c.l.b16 %v3639
        %v3832 = vunpack.c.l.b16 %v3640
        %v3833 = vunpack.c.l.b16 %v3641
        %v3834 = vunpack.c.l.b16 %v3642
        %v3835 = vunpack.c.l.b16 %v3643
        %v3836 = vunpack.c.l.b16 %v3644
        %v3837 = vunpack.c.l.b16 %v3645
        %v3838 = vunpack.c.l.b16 %v3646
        %v3839 = vunpack.c.l.b16 %v3647
        %v3840 = vunpack.c.l.b16 %v3648
        %v3841 = vunpack.c.l.b16 %v3649
        %v3842 = vunpack.c.l.b16 %v3650
        %v3843 = vunpack.c.l.b16 %v3651
        %v3844 = vunpack.c.l.b16 %v3652
        %v3845 = vunpack.c.l.b16 %v3653
        %v3846 = vunpack.c.l.b16 %v3654
        %v3847 = vunpack.c.l.b16 %v3655
        %v3848 = vunpack.c.l.b16 %v3656
        %v3849 = vunpack.c.l.b16 %v3657
        %v3850 = vunpack.c.l.b16 %v3658
        %v3851 = vunpack.c.l.b16 %v3659
        %v3852 = vunpack.c.l.b16 %v3660
        %v3853 = vunpack.c.l.b16 %v3661
        %v3854 = vunpack.c.l.b16 %v3662
        %v3855 = vunpack.c.l.b16 %v3663
        %v3856 = vunpack.c.l.b16 %v3664
        %v3857 = vunpack.c.l.b16 %v3665
        %v3858 = vunpack.c.l.b16 %v3666
        %v3859 = vunpack.c.l.b16 %v3667
        %v3860 = vunpack.c.l.b16 %v3668
        %v3861 = vunpack.c.l.b16 %v3669
        %v3862 = vunpack.c.l.b16 %v3670
        %v3863 = vunpack.c.l.b16 %v3671
        %v3864 = vunpack.c.l.b16 %v3672
        %v3865 = vunpack.c.l.b16 %v3673
        %v3866 = vunpack.c.l.b16 %v3674
        %v3867 = vunpack.c.l.b16 %v3675
        %v3868 = vunpack.c.l.b16 %v3676
        %v3869 = vunpack.c.l.b16 %v3677
        %v3870 = vunpack.c.l.b16 %v3678
        %v3871 = vunpack.c.l.b16 %v3679
        %v3872 = vunpack.c.l.b16 %v3680
        %v3873 = vunpack.c.l.b16 %v3681
        %v3874 = vunpack.c.l.b16 %v3682
        %v3875 = vunpack.c.l.b16 %v3683
        %v3876 = vunpack.c.l.b16 %v3684
        %v3877 = vunpack.c.l.b16 %v3685
        %v3878 = vunpack.c.l.b16 %v3686
        %v3879 = vunpack.c.l.b16 %v3687
        %v3880 = vunpack.c.l.b16 %v3688
        %v3881 = vunpack.c.l.b16 %v3689
        %v3882 = vunpack.c.l.b16 %v3690
        %v3883 = vunpack.c.l.b16 %v3691
        %v3884 = vunpack.c.l.b16 %v3692
        %v3885 = vunpack.c.l.b16 %v3693
        %v3886 = vunpack.c.l.b16 %v3694
        %v3887 = vunpack.c.l.b16 %v3695
        %v3888 = vunpack.c.l.b16 %v3696
        %v3889 = vunpack.c.l.b16 %v3697
        %v3890 = vunpack.c.l.b16 %v3698
        %v3891 = vunpack.c.l.b16 %v3699
        %v3892 = vunpack.c.l.b16 %v3700
        %v3893 = vunpack.c.l.b16 %v3701
        %v3894 = vunpack.c.l.b16 %v3702
        %v3895 = vunpack.c.l.b16 %v3703
        %v3896 = vunpack.c.l.b16 %v3704
        %v3897 = vunpack.c.l.b16 %v3705
        %v3898 = vunpack.c.l.b16 %v3706
        %v3899 = vunpack.c.l.b16 %v3707
        %v3900 = vunpack.c.l.b16 %v3708
        %v3901 = vunpack.c.l.b16 %v3709
        %v3902 = vunpack.c.l.b16 %v3710
        %v3903 = vunpack.c.l.b16 %v3711
        %v3904 = vunpack.c.l.b16 %v3712
        %v3905 = vunpack.c.l.b16 %v3713
        %v3906 = vunpack.c.l.b16 %v3714
        %v3907 = vunpack.c.l.b16 %v3715
        %v3908 = vunpack.c.l.b16 %v3716
        %v3909 = vunpack.c.l.b16 %v3717
        %v3910 = vunpack.c.l.b16 %v3718
        %v3911 = vunpack.c.l.b16 %v3719
        %v3912 = vunpack.c.l.b16 %v3720
        %v3913 = vunpack.c.l.b16 %v3721
        %v3914 = vunpack.c.l.b16 %v3722
        %v3915 = vunpack.c.l.b16 %v3723
        %v3916 = vunpack.c.l.b16 %v3724
        %v3917 = vunpack.c.l.b16 %v3725
        %v3918 = vunpack.c.l.b16 %v3726
        %v3919 = vpack.c.b16 %v3824, %v3823
        %v3920 = vpack.c.b16 %v3826, %v3825
        %v3921 = vpack.c.b16 %v3828, %v3827
        %v3922 = vpack.c.b16 %v3830, %v3829
        %v3923 = vpack.c.b16 %v3832, %v3831
        %v3924 = vpack.c.b16 %v3834, %v3833
        %v3925 = vpack.c.b16 %v3836, %v3835
        %v3926 = vpack.c.b16 %v3838, %v3837
        %v3927 = vpack.c.b16 %v3840, %v3839
        %v3928 = vpack.c.b16 %v3842, %v3841
        %v3929 = vpack.c.b16 %v3844, %v3843
        %v3930 = vpack.c.b16 %v3846, %v3845
        %v3931 = vpack.c.b16 %v3848, %v3847
        %v3932 = vpack.c.b16 %v3850, %v3849
        %v3933 = vpack.c.b16 %v3852, %v3851
        %v3934 = vpack.c.b16 %v3854, %v3853
        %v3935 = vpack.c.b16 %v3856, %v3855
        %v3936 = vpack.c.b16 %v3858, %v3857
        %v3937 = vpack.c.b16 %v3860, %v3859
        %v3938 = vpack.c.b16 %v3862, %v3861
        %v3939 = vpack.c.b16 %v3864, %v3863
        %v3940 = vpack.c.b16 %v3866, %v3865
        %v3941 = vpack.c.b16 %v3868, %v3867
        %v3942 = vpack.c.b16 %v3870, %v3869
        %v3943 = vpack.c.b16 %v3872, %v3871
        %v3944 = vpack.c.b16 %v3874, %v3873
        %v3945 = vpack.c.b16 %v3876, %v3875
        %v3946 = vpack.c.b16 %v3878, %v3877
        %v3947 = vpack.c.b16 %v3880, %v3879
        %v3948 = vpack.c.b16 %v3882, %v3881
        %v3949 = vpack.c.b16 %v3884, %v3883
        %v3950 = vpack.c.b16 %v3886, %v3885
        %v3951 = vpack.c.b16 %v3888, %v3887
        %v3952 = vpack.c.b16 %v3890, %v3889
        %v3953 = vpack.c.b16 %v3892, %v3891
        %v3954 = vpack.c.b16 %v3894, %v3893
        %v3955 = vpack.c.b16 %v3896, %v3895
        %v3956 = vpack.c.b16 %v3898, %v3897
        %v3957 = vpack.c.b16 %v3900, %v3899
        %v3958 = vpack.c.b16 %v3902, %v3901
        %v3959 = vpack.c.b16 %v3904, %v3903
        %v3960 = vpack.c.b16 %v3906, %v3905
        %v3961 = vpack.c.b16 %v3908, %v3907
        %v3962 = vpack.c.b16 %v3910, %v3909
        %v3963 = vpack.c.b16 %v3912, %v3911
        %v3964 = vpack.c.b16 %v3914, %v3913
        %v3965 = vpack.c.b16 %v3916, %v3915
        %v3966 = vpack.c.b16 %v3918, %v3917
        %4015 = vmatprep.subr.bf16.mxu0 0
        %4016 = vmatpush1.bf16.msra.mxu0 %v3919
        %4017 = vmatprep.subr.bf16.mxu0 0
        %4018 = vmatpush1.bf16.msra.mxu0 %v3920
        %4019 = vmatprep.subr.bf16.mxu0 0
        %4020 = vmatpush1.bf16.msra.mxu0 %v3921
        %4021 = vmatprep.subr.bf16.mxu0 0
        %4022 = vmatpush1.bf16.msra.mxu0 %v3922
        %4023 = vmatprep.subr.bf16.mxu0 0
        %4024 = vmatpush1.bf16.msra.mxu0 %v3923
        %4025 = vmatprep.subr.bf16.mxu0 0
        %4026 = vmatpush1.bf16.msra.mxu0 %v3924
        %4027 = vmatprep.subr.bf16.mxu0 0
        %4028 = vmatpush1.bf16.msra.mxu0 %v3925
        %4029 = vmatprep.subr.bf16.mxu0 0
        %4030 = vmatpush1.bf16.msra.mxu0 %v3926
        %4031 = vmatprep.subr.bf16.mxu0 0
        %4032 = vmatpush1.bf16.msra.mxu0 %v3927
        %4033 = vmatprep.subr.bf16.mxu0 0
        %4034 = vmatpush1.bf16.msra.mxu0 %v3928
        %4035 = vmatprep.subr.bf16.mxu0 0
        %4036 = vmatpush1.bf16.msra.mxu0 %v3929
        %4037 = vmatprep.subr.bf16.mxu0 0
        %4038 = vmatpush1.bf16.msra.mxu0 %v3930
        %4039 = vmatprep.subr.bf16.mxu0 0
        %4040 = vmatpush1.bf16.msra.mxu0 %v3931
        %4041 = vmatprep.subr.bf16.mxu0 0
        %4042 = vmatpush1.bf16.msra.mxu0 %v3932
        %4043 = vmatprep.subr.bf16.mxu0 0
        %4044 = vmatpush1.bf16.msra.mxu0 %v3933
        %4045 = vmatprep.subr.bf16.mxu0 0
        %4046 = vmatpush1.bf16.msra.mxu0 %v3934
        %4047 = vmatprep.mubr.bf16.mxu0 %v3626
        %4048 = vmatmul.mubr.bf16.gmra.mrb[0].mxu0 %v3625
        %v4049 = vpop.f32.mrb[0].mxu0
        %v4050 = vadd.f32 0.0, %v4049
        %v4051 = vpop.f32.mrb[0].mxu0
        %v4052 = vpop.f32.mrb[0].mxu0
        %v4053 = vadd.f32 0.0, %v4052
        %v4054 = vpop.f32.mrb[0].mxu0
        %4055 = vdwg.mxu0
        %4056 = vmatprep.subr.bf16.mxu0 0
        %4057 = vmatpush1.bf16.msra.mxu0 %v3935
        %4058 = vmatprep.subr.bf16.mxu0 0
        %4059 = vmatpush1.bf16.msra.mxu0 %v3936
        %4060 = vmatprep.subr.bf16.mxu0 0
        %4061 = vmatpush1.bf16.msra.mxu0 %v3937
        %4062 = vmatprep.subr.bf16.mxu0 0
        %4063 = vmatpush1.bf16.msra.mxu0 %v3938
        %4064 = vmatprep.subr.bf16.mxu0 0
        %4065 = vmatpush1.bf16.msra.mxu0 %v3939
        %4066 = vmatprep.subr.bf16.mxu0 0
        %4067 = vmatpush1.bf16.msra.mxu0 %v3940
        %4068 = vmatprep.subr.bf16.mxu0 0
        %4069 = vmatpush1.bf16.msra.mxu0 %v3941
        %4070 = vmatprep.subr.bf16.mxu0 0
        %4071 = vmatpush1.bf16.msra.mxu0 %v3942
        %4072 = vmatprep.subr.bf16.mxu0 0
        %4073 = vmatpush1.bf16.msra.mxu0 %v3943
        %4074 = vmatprep.subr.bf16.mxu0 0
        %4075 = vmatpush1.bf16.msra.mxu0 %v3944
        %4076 = vmatprep.subr.bf16.mxu0 0
        %4077 = vmatpush1.bf16.msra.mxu0 %v3945
        %4078 = vmatprep.subr.bf16.mxu0 0
        %4079 = vmatpush1.bf16.msra.mxu0 %v3946
        %4080 = vmatprep.subr.bf16.mxu0 0
        %4081 = vmatpush1.bf16.msra.mxu0 %v3947
        %4082 = vmatprep.subr.bf16.mxu0 0
        %4083 = vmatpush1.bf16.msra.mxu0 %v3948
        %4084 = vmatprep.subr.bf16.mxu0 0
        %4085 = vmatpush1.bf16.msra.mxu0 %v3949
        %4086 = vmatprep.subr.bf16.mxu0 0
        %4087 = vmatpush1.bf16.msra.mxu0 %v3950
        %4088 = vmatprep.mubr.bf16.mxu0 %v3628
        %4089 = vmatmul.mubr.bf16.gmra.mrb[0].mxu0 %v3627
        %v4090 = vpop.f32.mrb[0].mxu0
        %v4091 = vadd.f32 %v4050, %v4090
        %v4092 = vpop.f32.mrb[0].mxu0
        %v4093 = vpop.f32.mrb[0].mxu0
        %v4094 = vadd.f32 %v4053, %v4093
        %v4095 = vpop.f32.mrb[0].mxu0
        %4096 = vdwg.mxu0
        %4097 = vmatprep.subr.bf16.mxu0 0
        %4098 = vmatpush1.bf16.msra.mxu0 %v3951
        %4099 = vmatprep.subr.bf16.mxu0 0
        %4100 = vmatpush1.bf16.msra.mxu0 %v3952
        %4101 = vmatprep.subr.bf16.mxu0 0
        %4102 = vmatpush1.bf16.msra.mxu0 %v3953
        %4103 = vmatprep.subr.bf16.mxu0 0
        %4104 = vmatpush1.bf16.msra.mxu0 %v3954
        %4105 = vmatprep.subr.bf16.mxu0 0
        %4106 = vmatpush1.bf16.msra.mxu0 %v3955
        %4107 = vmatprep.subr.bf16.mxu0 0
        %4108 = vmatpush1.bf16.msra.mxu0 %v3956
        %4109 = vmatprep.subr.bf16.mxu0 0
        %4110 = vmatpush1.bf16.msra.mxu0 %v3957
        %4111 = vmatprep.subr.bf16.mxu0 0
        %4112 = vmatpush1.bf16.msra.mxu0 %v3958
        %4113 = vmatprep.subr.bf16.mxu0 0
        %4114 = vmatpush1.bf16.msra.mxu0 %v3959
        %4115 = vmatprep.subr.bf16.mxu0 0
        %4116 = vmatpush1.bf16.msra.mxu0 %v3960
        %4117 = vmatprep.subr.bf16.mxu0 0
        %4118 = vmatpush1.bf16.msra.mxu0 %v3961
        %4119 = vmatprep.subr.bf16.mxu0 0
        %4120 = vmatpush1.bf16.msra.mxu0 %v3962
        %4121 = vmatprep.subr.bf16.mxu0 0
        %4122 = vmatpush1.bf16.msra.mxu0 %v3963
        %4123 = vmatprep.subr.bf16.mxu0 0
        %4124 = vmatpush1.bf16.msra.mxu0 %v3964
        %4125 = vmatprep.subr.bf16.mxu0 0
        %4126 = vmatpush1.bf16.msra.mxu0 %v3965
        %4127 = vmatprep.subr.bf16.mxu0 0
        %4128 = vmatpush1.bf16.msra.mxu0 %v3966
        %4129 = vmatprep.mubr.bf16.mxu0 %v3630
        %4130 = vmatmul.mubr.bf16.gmra.mrb[0].mxu0 %v3629
        %v4131 = vpop.f32.mrb[0].mxu0
        %v4132 = vadd.f32 %v4091, %v4131
        %v4133 = vpop.f32.mrb[0].mxu0
        %v4134 = vpop.f32.mrb[0].mxu0
        %v4135 = vadd.f32 %v4094, %v4134
        %v4136 = vpop.f32.mrb[0].mxu0
        %4137 = vdwg.mxu0
        %v4138 = vadd.f32 %v3623, %v4132
        %v4139 = vadd.f32 %v3624, %v4135
        %4140 = vst [vmem:[%s179] sm:$0xff] %v4138
        %4141 = vst [vmem:[%s179 + $0x8] sm:$0xff] %v4139
        %s4142 = sand.u32 %s94, 1
        %s4143 = scalar_lea.sflag [#allocation5], %s4142
        %s4144 = sand.u32 %s94, 1
        %s4145 = smul.addr %s4144, 16
        %s4146 = scalar_lea.vmem [#allocation6], %s4145
        // Predicated region
        $region37: #{resnet50_instance_forward.1} parent=31 // pred_check
          %p4147 = pneg %p104
        $region38: #{resnet50_instance_forward.1} parent=31 // pred_check_branch
          %4149 = sbr.rel (%p4147) target = $region40
        $region39: #{resnet50_instance_forward.1} parent=31 // pred_region
          %s4150 = smul.u32 2, %s18
          %s4152 = ssub.s32 256, 256
          %4153 = vsyncadd %s4143, %s4152
          %s4154 = smul.addr %s4150, 128
          %s4155 = scalar_lea.hbm %s3, %s4154
          %s4156 = sshll.u32 %s4146, 4
          %s4157 = int_to_ptr.vmem [resolvable:$true] %s4156
          %4162 = dma.vmem_to_hbm [thread:$0]  %s4157, 256, %s4155, %s4143, 128, 128, 8
        $region40: #{resnet50_instance_forward.1} parent=31 // pred_fallthru
          _
      $region32: #{resnet50_instance_forward.1} parent=5 // pred_fallthru
        _
      %p4163 = scmp.le.s32.totalorder 2, %s13
      // Predicated region
      $region41: #{resnet50_instance_forward.1} parent=5 // pred_check
        %p4164 = pneg %p4163
      $region42: #{resnet50_instance_forward.1} parent=5 // pred_check_branch
        %4166 = sbr.rel (%p4164) target = $region44
      $region43: #{resnet50_instance_forward.1} parent=5 // pred_region
        %s4167 = ssub.s32 %s13, 2
        // Predicated region
        $region45: #{resnet50_instance_forward.1} parent=43 // pred_check
          %p4168 = pneg %p110
        $region46: #{resnet50_instance_forward.1} parent=43 // pred_check_branch
          %4170 = sbr.rel (%p4168) target = $region48
        $region47: #{resnet50_instance_forward.1} parent=43 // pred_region
          %s4171 = sand.u32 %s95, 1
          %s4172 = scalar_lea.sflag [#allocation5], %s4171
          %s4173 = sand.u32 %s95, 1
          %s4174 = smul.addr %s4173, 16
          %s4175 = scalar_lea.vmem [#allocation6], %s4174
          %4176 = dma.done %s4172, 256
        $region48: #{resnet50_instance_forward.1} parent=43 // pred_fallthru
          _
      $region44: #{resnet50_instance_forward.1} parent=5 // pred_fallthru
        _
    $region6: #{resnet50_instance_forward.1} parent=1 // loop_footer
      %s17 = sadd.s32 1, %s13
    $region7: #{resnet50_instance_forward.1} parent=1 // loop_footer_branch
      %12 = sbr.rel target = $region3
    $region8: #{resnet50_instance_forward.1} parent=1 // loop_exit
      _
    %4177 = vsyncpa [#allocation4], 1
    %s4178 = scalar_lea.sflag [#allocation4], 1
    %4179 = vsyncpa %s4178, 1
    %4180 = vsyncpa [#allocation5], 1
    %s4181 = scalar_lea.sflag [#allocation5], 1
    %4182 = vsyncpa %s4181, 1

</llo_original>
